<compile_context>
chip_gen: v5e
topology: v5e:2x2
jax: 0.10.0
libtpu: 0.0.40
codegen_flags: <defaults>
</compile_context>

<pallas_src>
import functools

import jax
import jax.numpy as jnp
from jax import lax
from jax.experimental import pallas as pl
from jax.experimental.pallas import tpu as pltpu


def _round_up(x, m):
    return ((x + m - 1) // m) * m


def _vae_encoder_kernel(
    x_ref,       # [Tc, Bt, Ep]   mxu dtype  embedded inputs (time-major chunk)
    wih_ref,     # [Ep, 3*Hp]     mxu dtype  W_ih^T, gate order r|z|n, per-gate padded
    whh_ref,     # [Hp, 3*Hp]     mxu dtype  W_hh^T
    bgi_ref,     # [1, 3*Hp]      f32        b_ih (all gates) + b_hh (r,z folded in)
    bhn_ref,     # [1, Hp]        f32        b_hh n-gate (must stay inside r*(...))
    wm_ref,      # [Hp, Lp]       mxu dtype  hidden2mean^T
    bm_ref,      # [1, Lp]        f32
    ws_ref,      # [Hp, Lp]       mxu dtype  hidden2std^T
    bs_ref,      # [1, Lp]        f32
    eps_ref,     # [Bt, Lp]       f32        standard-normal noise
    out_ref,     # [Tc, Bt, Hp]   bf16       GRU outputs (time-major chunk)
    lat_ref,     # [Bt, Lp]       f32        latent = eps*std + mean
    mean_ref,    # [Bt, Lp]       f32
    std_ref,     # [Bt, Lp]       f32
    h_scratch,   # VMEM [Bt, Hp]  f32        hidden state carried across chunks
    gi_scratch,  # VMEM [Tc, Bt, 3*Hp] f32   precomputed input projections
    *,
    seq_len,     # static: true sequence length S
    padded_len,  # static: S padded to a multiple of the chunk
    unroll,      # static: partial-unroll factor for the recurrence
):
    c = pl.program_id(1)
    Tc, Bt, Hp = out_ref.shape

    @pl.when(c == 0)
    def _init():
        h_scratch[...] = jnp.zeros_like(h_scratch)

    # ---- hoisted input projection: one big MXU matmul per chunk -------------
    # b_ih (all gates) and b_hh (r,z gates) are folded into bgi once per chunk.
    x_flat = x_ref[...].reshape(Tc * Bt, x_ref.shape[-1])          # [Tc*Bt, Ep]
    gi_flat = (
        jnp.dot(x_flat, wih_ref[...], preferred_element_type=jnp.float32)
        + bgi_ref[...]
    )
    gi_scratch[...] = gi_flat.reshape(Tc, Bt, 3 * Hp)

    # Hoisted broadcast of the n-gate recurrent bias (once per chunk).
    bhn_full = jnp.broadcast_to(bhn_ref[...], (Bt, Hp))

    def step(t, h):
        gi = gi_scratch[t]                                         # [Bt, 3Hp] f32
        # TODO(synk): make W_hh MXU-weight-stationary (pltpu.matmul_push_rhs once
        # per chunk + matmul_acc_lhs/matmul_pop per step) if the bundle dump shows
        # the [Hp,3Hp] RHS being re-pushed every timestep.
        gh = jnp.dot(h.astype(whh_ref.dtype), whh_ref[...],
                     preferred_element_type=jnp.float32)
        # Hp is a multiple of 128 -> gate slices are lane-aligned, zero-cost.
        r = jax.nn.sigmoid(gi[:, 0:Hp] + gh[:, 0:Hp])
        z = jax.nn.sigmoid(gi[:, Hp:2 * Hp] + gh[:, Hp:2 * Hp])
        n = jnp.tanh(gi[:, 2 * Hp:] + r * (gh[:, 2 * Hp:] + bhn_full))
        h_new = (1.0 - z) * n + z * h                              # PyTorch GRU update
        if padded_len != seq_len:        # static; compiles away when Tc divides S
            tg = c * Tc + t
            h_new = jnp.where(tg < seq_len, h_new, h)              # freeze h on pad steps
        out_ref[t] = h_new.astype(out_ref.dtype)                   # bf16 full-vreg store
        return h_new

    # Partial unroll: keeps LLO scheduling visibility without Tc-times code blowup.
    h_final = lax.fori_loop(0, Tc, step, h_scratch[...], unroll=unroll)
    h_scratch[...] = h_final

    @pl.when(c == pl.num_programs(1) - 1)
    def _finalize():
        hm = h_final.astype(wm_ref.dtype)
        mean = jnp.dot(hm, wm_ref[...], preferred_element_type=jnp.float32) + bm_ref[...]
        std = jnp.dot(hm, ws_ref[...], preferred_element_type=jnp.float32) + bs_ref[...]
        mean_ref[...] = mean
        std_ref[...] = std
        # NOTE: the reference module uses hidden2std's output directly as std
        # (no exp/softplus), so latent = eps*std + mean matches it exactly.
        lat_ref[...] = eps_ref[...] * std + mean


# ---------------------------------------------------------------------------
# Parameter padding / layout helpers (PyTorch layouts -> padded MXU layouts)
# ---------------------------------------------------------------------------
def _pad_to(a, shape):
    pads = [(0, t - s) for s, t in zip(a.shape, shape)]
    return jnp.pad(a, pads)


def _prep_gru_weight(w, H, Hp, in_dim, in_pad, dtype):
    # w: [3H, in_dim] (PyTorch weight_ih_l0 / weight_hh_l0, gate order r|z|n)
    w3 = w.reshape(3, H, in_dim)
    wp = jnp.zeros((3, Hp, in_pad), w.dtype).at[:, :H, :in_dim].set(w3)
    # -> [in_pad, 3*Hp] with each gate occupying its own lane-aligned Hp block.
    return jnp.transpose(wp, (2, 0, 1)).reshape(in_pad, 3 * Hp).astype(dtype)


def _prep_gru_bias3(b, H, Hp):
    b3 = b.reshape(3, H).astype(jnp.float32)
    return jnp.zeros((3, Hp), jnp.float32).at[:, :H].set(b3)   # [3, Hp]


def _prep_linear(w, b, H, Hp, L, Lp, dtype):
    # w: [L, H], b: [L]  (PyTorch nn.Linear)
    wp = jnp.zeros((Hp, Lp), w.dtype).at[:H, :L].set(w.T).astype(dtype)
    bp = jnp.zeros((1, Lp), jnp.float32).at[0, :L].set(b.astype(jnp.float32))
    return wp, bp


def _choose_seq_chunk(S, Bt, Ep, Hp, Lp, in_itemsize, budget_bytes):
    """Largest chunk fitting the VMEM budget; prefer one that divides S."""
    per_t = Bt * (2 * Ep * in_itemsize        # x chunk, double-buffered
                  + 2 * Hp * 2                # bf16 out chunk, double-buffered
                  + 3 * Hp * 4)               # f32 gi_scratch
    resident = 2 * ((Ep + Hp) * 3 * Hp * in_itemsize      # W_ih, W_hh (dbl-buffered)
                    + 2 * Hp * Lp * in_itemsize)          # W_mean, W_std
    resident += Bt * Hp * 4 + 8 * Bt * Lp * 4 + 4 * 3 * Hp * 4   # h_scratch, eps/outs, biases
    avail = max(budget_bytes - resident, per_t)
    tc_max = int(max(1, min(S, 256, avail // per_t)))
    best_div = 1
    for tc in range(tc_max, 0, -1):
        if S % tc == 0:
            best_div = tc
            break
    if best_div >= max(1, tc_max // 4):
        return best_div          # no pad steps -> pad select compiles away
    return tc_max                # ragged tail: freeze h on pad steps in-kernel


# ---------------------------------------------------------------------------
# Forward wrapper
# ---------------------------------------------------------------------------
def variational_encoder_forward(token_ids, params, eps, *, seq_chunk=None,
                                mxu_dtype=jnp.bfloat16):
    """token_ids: int32 [B, S]; eps: f32 [B, L] (torch.randn equivalent).

    Returns (outputs [B, S, H], latent [B, L], mean [B, L], std [B, L]).
    num_layers=1 (inter-layer dropout is a no-op), unidirectional.
    """
    emb = params["embedding"]                        # [V, E]
    w_ih, w_hh = params["w_ih"], params["w_hh"]      # [3H, E], [3H, H]
    b_ih, b_hh = params["b_ih"], params["b_hh"]      # [3H], [3H]
    w_mean, b_mean = params["w_mean"], params["b_mean"]  # [L, H], [L]
    w_std, b_std = params["w_std"], params["b_std"]      # [L, H], [L]

    B, S = token_ids.shape
    E = emb.shape[1]
    H = w_hh.shape[1]
    L = w_mean.shape[0]

    # Pad to vreg tiles: batch on sublanes (16 covers f32 and bf16 packing),
    # feature dims on 128 lanes.
    Ep = _round_up(E, 128)
    Hp = _round_up(H, 128)
    Lp = _round_up(L, 128)
    Bp0 = _round_up(max(B, 16), 16)
    Bt = min(Bp0, 128)              # batch tile per grid step (MXU rows)
    Bp = _round_up(Bp0, Bt)
    num_btiles = Bp // Bt
    # NOTE: throughput scales ~linearly with real batch until the MXU rows fill;
    # batching more independent sequences per call is the biggest lever.

    in_itemsize = jnp.dtype(mxu_dtype).itemsize

    # VMEM budget, generation-aware (v5e/v6e 128 MiB phys, v7x 64 MiB).
    try:
        vmem_cap = int(getattr(pltpu.get_tpu_info(), "vmem_capacity_bytes",
                               64 * 1024 * 1024))
    except Exception:
        vmem_cap = 64 * 1024 * 1024
    vmem_limit = max(min((vmem_cap * 3) // 4, 96 * 1024 * 1024), 32 * 1024 * 1024)

    if seq_chunk is None:
        Tc = _choose_seq_chunk(S, Bt, Ep, Hp, Lp, in_itemsize, vmem_limit // 2)
    else:
        Tc = max(1, min(seq_chunk, S))
    Sp = _round_up(S, Tc)
    num_chunks = Sp // Tc
    unroll = max(1, min(8, Tc))

    # Embedding lookup (gather) as JAX glue; time-major + pad for the kernel.
    x = jnp.take(emb, token_ids, axis=0)             # [B, S, E]
    x = jnp.transpose(x, (1, 0, 2))                  # [S, B, E]
    # TODO(synk): keep the model time-major end-to-end to drop the two wrapper
    # HBM transpose passes if downstream allows.
    x = _pad_to(x, (Sp, Bp, Ep)).astype(mxu_dtype)

    wih_p = _prep_gru_weight(w_ih, H, Hp, E, Ep, mxu_dtype)   # [Ep, 3Hp]
    whh_p = _prep_gru_weight(w_hh, H, Hp, H, Hp, mxu_dtype)   # [Hp, 3Hp]
    bih3 = _prep_gru_bias3(b_ih, H, Hp)                       # [3, Hp]
    bhh3 = _prep_gru_bias3(b_hh, H, Hp)                       # [3, Hp]
    # Fold r/z components of b_hh into the hoisted input-projection bias; only
    # the n-gate recurrent bias stays on the serial path (inside r*(...)).
    bgi_p = (bih3.at[0].add(bhh3[0]).at[1].add(bhh3[1])).reshape(1, 3 * Hp)
    bhn_p = bhh3[2].reshape(1, Hp)
    wm_p, bm_p = _prep_linear(w_mean, b_mean, H, Hp, L, Lp, mxu_dtype)
    ws_p, bs_p = _prep_linear(w_std, b_std, H, Hp, L, Lp, mxu_dtype)
    eps_p = _pad_to(eps.astype(jnp.float32), (Bp, Lp))

    kernel = functools.partial(_vae_encoder_kernel, seq_len=S, padded_len=Sp,
                               unroll=unroll)

    chunk_map = lambda b, c: (c, b, 0)   # streamed over sequence chunks / batch tiles
    batch_map = lambda b, c: (b, 0)      # per-batch-tile, resident across chunks
    const2 = lambda b, c: (0, 0)         # VMEM-resident weights/biases
    # TODO(synk): single-buffer the constant-index weight specs
    # (pipeline_mode=pl.Buffered(1)) to reclaim VMEM at large E/H/L on v7x.

    grid_spec = pltpu.PrefetchScalarGridSpec(
        num_scalar_prefetch=0,
        grid=(num_btiles, num_chunks),
        in_specs=[
            pl.BlockSpec((Tc, Bt, Ep), chunk_map),    # x chunk (double-buffered DMA)
            pl.BlockSpec((Ep, 3 * Hp), const2),       # W_ih^T   (resident)
            pl.BlockSpec((Hp, 3 * Hp), const2),       # W_hh^T   (resident)
            pl.BlockSpec((1, 3 * Hp), const2),        # b_gi = b_ih + b_hh[r,z]
            pl.BlockSpec((1, Hp), const2),            # b_hh[n]
            pl.BlockSpec((Hp, Lp), const2),           # W_mean^T
            pl.BlockSpec((1, Lp), const2),            # b_mean
            pl.BlockSpec((Hp, Lp), const2),           # W_std^T
            pl.BlockSpec((1, Lp), const2),            # b_std
            pl.BlockSpec((Bt, Lp), batch_map),        # eps
        ],
        out_specs=(
            pl.BlockSpec((Tc, Bt, Hp), chunk_map),    # GRU outputs chunk (bf16)
            pl.BlockSpec((Bt, Lp), batch_map),        # latent
            pl.BlockSpec((Bt, Lp), batch_map),        # mean
            pl.BlockSpec((Bt, Lp), batch_map),        # std
        ),
        scratch_shapes=[
            pltpu.VMEM((Bt, Hp), jnp.float32),            # carried hidden state
            pltpu.VMEM((Tc, Bt, 3 * Hp), jnp.float32),    # precomputed gi for the chunk
        ],
    )

    out_shapes = (
        jax.ShapeDtypeStruct((Sp, Bp, Hp), jnp.bfloat16),  # bf16 halves HBM writeback
        jax.ShapeDtypeStruct((Bp, Lp), jnp.float32),
        jax.ShapeDtypeStruct((Bp, Lp), jnp.float32),
        jax.ShapeDtypeStruct((Bp, Lp), jnp.float32),
    )

    out_p, lat_p, mean_p, std_p = pl.pallas_call(
        kernel,
        out_shape=out_shapes,
        grid_spec=grid_spec,
        compiler_params=pltpu.CompilerParams(
            # Batch tiles are independent (sharded across v7x's 2 TCs); the
            # chunk axis carries the recurrent hidden state -> "arbitrary".
            dimension_semantics=("parallel", "arbitrary"),
            vmem_limit_bytes=int(vmem_limit),
        ),
    )(x, wih_p, whh_p, bgi_p, bhn_p, wm_p, bm_p, ws_p, bs_p, eps_p)

    # Slice off padding, return batch-first f32 to match the PyTorch module.
    outputs = jnp.transpose(out_p[:S, :B, :H], (1, 0, 2)).astype(jnp.float32)
    latent = lat_p[:B, :L]
    mean = mean_p[:B, :L]
    std = std_p[:B, :L]
    return outputs, latent, mean, std


# ---------------------------------------------------------------------------
# Pure-JAX reference (PyTorch-GRU semantics) for a correctness spot check.
# ---------------------------------------------------------------------------
def _ref_forward(token_ids, params, eps):
    x = jnp.take(params["embedding"], token_ids, axis=0)   # [B, S, E]
    B = x.shape[0]
    H = params["w_hh"].shape[1]
    w_ih, w_hh = params["w_ih"], params["w_hh"]
    b_ih, b_hh = params["b_ih"], params["b_hh"]

    def cell(h, xt):
        gi = xt @ w_ih.T + b_ih
        gh = h @ w_hh.T + b_hh
        i_r, i_z, i_n = jnp.split(gi, 3, axis=-1)
        h_r, h_z, h_n = jnp.split(gh, 3, axis=-1)
        r = jax.nn.sigmoid(i_r + h_r)
        z = jax.nn.sigmoid(i_z + h_z)
        n = jnp.tanh(i_n + r * h_n)
        h_new = (1.0 - z) * n + z * h
        return h_new, h_new

    h0 = jnp.zeros((B, H), jnp.float32)
    h_last, outs = lax.scan(cell, h0, jnp.transpose(x, (1, 0, 2)))
    outs = jnp.transpose(outs, (1, 0, 2))
    mean = h_last @ params["w_mean"].T + params["b_mean"]
    std = h_last @ params["w_std"].T + params["b_std"]
    lat = eps * std + mean
    return outs, lat, mean, std


if __name__ == "__main__":
    # Small shapes consistent with the module's forward:
    # token ids [B, S] -> embedding [B, S, E] -> GRU hidden H -> latent L.
    B, S, V, E, H, L = 2, 8, 50, 16, 32, 8

    key = jax.random.PRNGKey(0)
    ks = jax.random.split(key, 11)
    scale = 0.1
    params = {
        "embedding": scale * jax.random.normal(ks[0], (V, E), jnp.float32),
        # PyTorch GRU parameter layouts, gate order r|z|n.
        "w_ih": scale * jax.random.normal(ks[1], (3 * H, E), jnp.float32),
        "w_hh": scale * jax.random.normal(ks[2], (3 * H, H), jnp.float32),
        "b_ih": scale * jax.random.normal(ks[3], (3 * H,), jnp.float32),
        "b_hh": scale * jax.random.normal(ks[4], (3 * H,), jnp.float32),
        # hidden2mean / hidden2std (nn.Linear layouts).
        "w_mean": scale * jax.random.normal(ks[5], (L, H), jnp.float32),
        "b_mean": scale * jax.random.normal(ks[6], (L,), jnp.float32),
        "w_std": scale * jax.random.normal(ks[7], (L, H), jnp.float32),
        "b_std": scale * jax.random.normal(ks[8], (L,), jnp.float32),
    }
    token_ids = jax.random.randint(ks[9], (B, S), 0, V, dtype=jnp.int32)
    # torch.randn([batch, latent_dim]) equivalent, generated deterministically here.
    eps = jax.random.normal(ks[10], (B, L), jnp.float32)

    # TODO(synk): bidirectional / multi-layer Encoder variants not implemented.
    fwd = jax.jit(variational_encoder_forward)
    outputs, latent, mean, std = fwd(token_ids, params, eps)
    jax.block_until_ready((outputs, latent, mean, std))

    assert outputs.shape == (B, S, H)
    assert latent.shape == (B, L) and mean.shape == (B, L) and std.shape == (B, L)
    assert bool(jnp.all(jnp.isfinite(outputs))) and bool(jnp.all(jnp.isfinite(latent)))

    ref_out, ref_lat, ref_mean, ref_std = _ref_forward(token_ids, params, eps)
    assert bool(jnp.allclose(outputs, ref_out, atol=5e-2, rtol=5e-2))
    assert bool(jnp.allclose(mean, ref_mean, atol=5e-2, rtol=5e-2))
    assert bool(jnp.allclose(std, ref_std, atol=5e-2, rtol=5e-2))
    assert bool(jnp.allclose(latent, ref_lat, atol=5e-2, rtol=5e-2))

    print("KERNEL_OK")
</pallas_src>

<mosaic_0001>
module attributes {stable_mosaic.version = 11 : i64} {
  func.func @_vae_encoder_kernel(%arg0: i32, %arg1: i32, %arg2: memref<8x16x128xbf16, #tpu.memory_space<vmem>>, %arg3: memref<128x384xbf16, #tpu.memory_space<vmem>>, %arg4: memref<128x384xbf16, #tpu.memory_space<vmem>>, %arg5: memref<1x384xf32, #tpu.memory_space<vmem>>, %arg6: memref<1x128xf32, #tpu.memory_space<vmem>>, %arg7: memref<128x128xbf16, #tpu.memory_space<vmem>>, %arg8: memref<1x128xf32, #tpu.memory_space<vmem>>, %arg9: memref<128x128xbf16, #tpu.memory_space<vmem>>, %arg10: memref<1x128xf32, #tpu.memory_space<vmem>>, %arg11: memref<16x128xf32, #tpu.memory_space<vmem>>, %arg12: memref<8x16x128xbf16, #tpu.memory_space<vmem>>, %arg13: memref<16x128xf32, #tpu.memory_space<vmem>>, %arg14: memref<16x128xf32, #tpu.memory_space<vmem>>, %arg15: memref<16x128xf32, #tpu.memory_space<vmem>>, %arg16: memref<16x128xf32, #tpu.memory_space<vmem>>, %arg17: memref<8x16x384xf32, #tpu.memory_space<vmem>>) attributes {dimension_semantics = [#tpu.dimension_semantics<parallel>, #tpu.dimension_semantics<arbitrary>], iteration_bounds = array<i64: 1, 1>, scalar_prefetch = 0 : i64, scratch_operands = 2 : i64, tpu.core_type = #tpu.core_type<tc>, window_params = [{transform_indices = @transform_0, window_bounds = array<i64: 8, 16, 128>}, {pipeline_mode = #tpu.pipeline_mode<synchronous>, transform_indices = @transform_1, window_bounds = array<i64: 128, 384>}, {pipeline_mode = #tpu.pipeline_mode<synchronous>, transform_indices = @transform_2, window_bounds = array<i64: 128, 384>}, {pipeline_mode = #tpu.pipeline_mode<synchronous>, transform_indices = @transform_3, window_bounds = array<i64: 1, 384>}, {pipeline_mode = #tpu.pipeline_mode<synchronous>, transform_indices = @transform_4, window_bounds = array<i64: 1, 128>}, {pipeline_mode = #tpu.pipeline_mode<synchronous>, transform_indices = @transform_5, window_bounds = array<i64: 128, 128>}, {pipeline_mode = #tpu.pipeline_mode<synchronous>, transform_indices = @transform_6, window_bounds = array<i64: 1, 128>}, {pipeline_mode = #tpu.pipeline_mode<synchronous>, transform_indices = @transform_7, window_bounds = array<i64: 128, 128>}, {pipeline_mode = #tpu.pipeline_mode<synchronous>, transform_indices = @transform_8, window_bounds = array<i64: 1, 128>}, {transform_indices = @transform_9, window_bounds = array<i64: 16, 128>}, {transform_indices = @transform_10, window_bounds = array<i64: 8, 16, 128>}, {transform_indices = @transform_11, window_bounds = array<i64: 16, 128>}, {transform_indices = @transform_12, window_bounds = array<i64: 16, 128>}, {transform_indices = @transform_13, window_bounds = array<i64: 16, 128>}]} {
    %c0_i32 = arith.constant 0 : i32
    %0 = arith.cmpi eq, %arg1, %c0_i32 : i32
    %1 = arith.extui %0 : i1 to i32
    %c0_i32_0 = arith.constant 0 : i32
    %2 = arith.cmpi ne, %1, %c0_i32_0 : i32
    scf.if %2 {
      %cst_99 = arith.constant 0.000000e+00 : f32
      %324 = vector.broadcast %cst_99 : f32 to vector<16x128xf32>
      %c0_100 = arith.constant 0 : index
      %c0_101 = arith.constant 0 : index
      %325 = vector.load %arg16[%c0_100, %c0_101] : memref<16x128xf32, #tpu.memory_space<vmem>>, vector<16x128xf32>
      tpu.vector_store %arg16[%c0_100, %c0_101], %324 {strides = array<i32>} : memref<16x128xf32, #tpu.memory_space<vmem>>, vector<16x128xf32>,
    } else {
    }
    %c0 = arith.constant 0 : index
    %c0_1 = arith.constant 0 : index
    %c0_2 = arith.constant 0 : index
    %3 = vector.load %arg2[%c0, %c0_1, %c0_2] : memref<8x16x128xbf16, #tpu.memory_space<vmem>>, vector<8x16x128xbf16>
    %4 = vector.shape_cast %3 : vector<8x16x128xbf16> to vector<128x128xbf16>
    %c0_3 = arith.constant 0 : index
    %c0_4 = arith.constant 0 : index
    %5 = vector.load %arg3[%c0_3, %c0_4] : memref<128x384xbf16, #tpu.memory_space<vmem>>, vector<128x384xbf16>
    %cst = arith.constant dense<0.000000e+00> : vector<128x384xf32>
    %6 = tpu.matmul %4, %5, %cst {dimension_numbers = #tpu.dot_dimension_numbers<[1], [0], [0], [1], [0, 0, 1, 1], [], []>} : vector<128x128xbf16>, vector<128x384xbf16>, vector<128x384xf32> -> vector<128x384xf32>
    %c0_5 = arith.constant 0 : index
    %c0_6 = arith.constant 0 : index
    %7 = vector.load %arg5[%c0_5, %c0_6] : memref<1x384xf32, #tpu.memory_space<vmem>>, vector<1x384xf32>
    %8 = vector.broadcast %7 : vector<1x384xf32> to vector<128x384xf32>
    %9 = arith.addf %6, %8 : vector<128x384xf32>
    %10 = vector.shape_cast %9 : vector<128x384xf32> to vector<8x16x384xf32>
    %c0_7 = arith.constant 0 : index
    %c0_8 = arith.constant 0 : index
    %c0_9 = arith.constant 0 : index
    %11 = vector.load %arg17[%c0_7, %c0_8, %c0_9] : memref<8x16x384xf32, #tpu.memory_space<vmem>>, vector<8x16x384xf32>
    tpu.vector_store %arg17[%c0_7, %c0_8, %c0_9], %10 {strides = array<i32>} : memref<8x16x384xf32, #tpu.memory_space<vmem>>, vector<8x16x384xf32>,
    %c0_10 = arith.constant 0 : index
    %c0_11 = arith.constant 0 : index
    %12 = vector.load %arg6[%c0_10, %c0_11] : memref<1x128xf32, #tpu.memory_space<vmem>>, vector<1x128xf32>
    %13 = vector.shape_cast %12 : vector<1x128xf32> to vector<1x128xf32>
    %14 = vector.broadcast %13 : vector<1x128xf32> to vector<16x128xf32>
    %c0_12 = arith.constant 0 : index
    %c0_13 = arith.constant 0 : index
    %15 = vector.load %arg16[%c0_12, %c0_13] : memref<16x128xf32, #tpu.memory_space<vmem>>, vector<16x128xf32>
    %c0_i32_14 = arith.constant 0 : i32
    %16 = arith.index_cast %c0_i32_14 : i32 to index
    %c0_15 = arith.constant 0 : index
    %c0_16 = arith.constant 0 : index
    %17 = vector.load %arg17[%16, %c0_15, %c0_16] : memref<8x16x384xf32, #tpu.memory_space<vmem>>, vector<1x16x384xf32>
    %18 = vector.shape_cast %17 : vector<1x16x384xf32> to vector<16x384xf32>
    %19 = arith.truncf %15 : vector<16x128xf32> to vector<16x128xbf16>
    %c0_17 = arith.constant 0 : index
    %c0_18 = arith.constant 0 : index
    %20 = vector.load %arg4[%c0_17, %c0_18] : memref<128x384xbf16, #tpu.memory_space<vmem>>, vector<128x384xbf16>
    %cst_19 = arith.constant dense<0.000000e+00> : vector<16x384xf32>
    %21 = tpu.matmul %19, %20, %cst_19 {dimension_numbers = #tpu.dot_dimension_numbers<[1], [0], [0], [1], [0, 0, 1, 1], [], []>} : vector<16x128xbf16>, vector<128x384xbf16>, vector<16x384xf32> -> vector<16x384xf32>
    %22 = vector.extract_strided_slice %18 {offsets = [0, 0], sizes = [16, 128], strides = [1, 1]} : vector<16x384xf32> to vector<16x128xf32>
    %23 = vector.extract_strided_slice %21 {offsets = [0, 0], sizes = [16, 128], strides = [1, 1]} : vector<16x384xf32> to vector<16x128xf32>
    %24 = arith.addf %22, %23 : vector<16x128xf32>
    %25 = arith.negf %24 : vector<16x128xf32>
    %26 = math.exp %25 : vector<16x128xf32>
    %cst_20 = arith.constant 1.000000e+00 : f32
    %27 = vector.broadcast %cst_20 : f32 to vector<16x128xf32>
    %28 = arith.addf %27, %26 : vector<16x128xf32>
    %29 = arith.divf %27, %28 : vector<16x128xf32>
    %30 = vector.extract_strided_slice %18 {offsets = [0, 128], sizes = [16, 128], strides = [1, 1]} : vector<16x384xf32> to vector<16x128xf32>
    %31 = vector.extract_strided_slice %21 {offsets = [0, 128], sizes = [16, 128], strides = [1, 1]} : vector<16x384xf32> to vector<16x128xf32>
    %32 = arith.addf %30, %31 : vector<16x128xf32>
    %33 = arith.negf %32 : vector<16x128xf32>
    %34 = math.exp %33 : vector<16x128xf32>
    %cst_21 = arith.constant 1.000000e+00 : f32
    %35 = vector.broadcast %cst_21 : f32 to vector<16x128xf32>
    %36 = arith.addf %35, %34 : vector<16x128xf32>
    %37 = arith.divf %35, %36 : vector<16x128xf32>
    %38 = vector.extract_strided_slice %18 {offsets = [0, 256], sizes = [16, 128], strides = [1, 1]} : vector<16x384xf32> to vector<16x128xf32>
    %39 = vector.extract_strided_slice %21 {offsets = [0, 256], sizes = [16, 128], strides = [1, 1]} : vector<16x384xf32> to vector<16x128xf32>
    %40 = arith.addf %39, %14 : vector<16x128xf32>
    %41 = arith.mulf %29, %40 : vector<16x128xf32>
    %42 = arith.addf %38, %41 : vector<16x128xf32>
    %43 = math.tanh %42 : vector<16x128xf32>
    %cst_22 = arith.constant 1.000000e+00 : f32
    %44 = vector.broadcast %cst_22 : f32 to vector<16x128xf32>
    %45 = arith.subf %44, %37 : vector<16x128xf32>
    %46 = arith.mulf %45, %43 : vector<16x128xf32>
    %47 = arith.mulf %37, %15 : vector<16x128xf32>
    %48 = arith.addf %46, %47 : vector<16x128xf32>
    %49 = arith.truncf %48 : vector<16x128xf32> to vector<16x128xbf16>
    %50 = arith.index_cast %c0_i32_14 : i32 to index
    %c0_23 = arith.constant 0 : index
    %c0_24 = arith.constant 0 : index
    %51 = vector.load %arg12[%50, %c0_23, %c0_24] : memref<8x16x128xbf16, #tpu.memory_space<vmem>>, vector<1x16x128xbf16>
    %52 = vector.shape_cast %51 : vector<1x16x128xbf16> to vector<16x128xbf16>
    %53 = vector.shape_cast %49 : vector<16x128xbf16> to vector<1x16x128xbf16>
    tpu.vector_store %arg12[%50, %c0_23, %c0_24], %53 {strides = array<i32>} : memref<8x16x128xbf16, #tpu.memory_space<vmem>>, vector<1x16x128xbf16>,
    %c1_i32 = arith.constant 1 : i32
    %54 = arith.index_cast %c1_i32 : i32 to index
    %c0_25 = arith.constant 0 : index
    %c0_26 = arith.constant 0 : index
    %55 = vector.load %arg17[%54, %c0_25, %c0_26] : memref<8x16x384xf32, #tpu.memory_space<vmem>>, vector<1x16x384xf32>
    %56 = vector.shape_cast %55 : vector<1x16x384xf32> to vector<16x384xf32>
    %57 = arith.truncf %48 : vector<16x128xf32> to vector<16x128xbf16>
    %c0_27 = arith.constant 0 : index
    %c0_28 = arith.constant 0 : index
    %58 = vector.load %arg4[%c0_27, %c0_28] : memref<128x384xbf16, #tpu.memory_space<vmem>>, vector<128x384xbf16>
    %cst_29 = arith.constant dense<0.000000e+00> : vector<16x384xf32>
    %59 = tpu.matmul %57, %58, %cst_29 {dimension_numbers = #tpu.dot_dimension_numbers<[1], [0], [0], [1], [0, 0, 1, 1], [], []>} : vector<16x128xbf16>, vector<128x384xbf16>, vector<16x384xf32> -> vector<16x384xf32>
    %60 = vector.extract_strided_slice %56 {offsets = [0, 0], sizes = [16, 128], strides = [1, 1]} : vector<16x384xf32> to vector<16x128xf32>
    %61 = vector.extract_strided_slice %59 {offsets = [0, 0], sizes = [16, 128], strides = [1, 1]} : vector<16x384xf32> to vector<16x128xf32>
    %62 = arith.addf %60, %61 : vector<16x128xf32>
    %63 = arith.negf %62 : vector<16x128xf32>
    %64 = math.exp %63 : vector<16x128xf32>
    %cst_30 = arith.constant 1.000000e+00 : f32
    %65 = vector.broadcast %cst_30 : f32 to vector<16x128xf32>
    %66 = arith.addf %65, %64 : vector<16x128xf32>
    %67 = arith.divf %65, %66 : vector<16x128xf32>
    %68 = vector.extract_strided_slice %56 {offsets = [0, 128], sizes = [16, 128], strides = [1, 1]} : vector<16x384xf32> to vector<16x128xf32>
    %69 = vector.extract_strided_slice %59 {offsets = [0, 128], sizes = [16, 128], strides = [1, 1]} : vector<16x384xf32> to vector<16x128xf32>
    %70 = arith.addf %68, %69 : vector<16x128xf32>
    %71 = arith.negf %70 : vector<16x128xf32>
    %72 = math.exp %71 : vector<16x128xf32>
    %cst_31 = arith.constant 1.000000e+00 : f32
    %73 = vector.broadcast %cst_31 : f32 to vector<16x128xf32>
    %74 = arith.addf %73, %72 : vector<16x128xf32>
    %75 = arith.divf %73, %74 : vector<16x128xf32>
    %76 = vector.extract_strided_slice %56 {offsets = [0, 256], sizes = [16, 128], strides = [1, 1]} : vector<16x384xf32> to vector<16x128xf32>
    %77 = vector.extract_strided_slice %59 {offsets = [0, 256], sizes = [16, 128], strides = [1, 1]} : vector<16x384xf32> to vector<16x128xf32>
    %78 = arith.addf %77, %14 : vector<16x128xf32>
    %79 = arith.mulf %67, %78 : vector<16x128xf32>
    %80 = arith.addf %76, %79 : vector<16x128xf32>
    %81 = math.tanh %80 : vector<16x128xf32>
    %cst_32 = arith.constant 1.000000e+00 : f32
    %82 = vector.broadcast %cst_32 : f32 to vector<16x128xf32>
    %83 = arith.subf %82, %75 : vector<16x128xf32>
    %84 = arith.mulf %83, %81 : vector<16x128xf32>
    %85 = arith.mulf %75, %48 : vector<16x128xf32>
    %86 = arith.addf %84, %85 : vector<16x128xf32>
    %87 = arith.truncf %86 : vector<16x128xf32> to vector<16x128xbf16>
    %88 = arith.index_cast %c1_i32 : i32 to index
    %c0_33 = arith.constant 0 : index
    %c0_34 = arith.constant 0 : index
    %89 = vector.load %arg12[%88, %c0_33, %c0_34] : memref<8x16x128xbf16, #tpu.memory_space<vmem>>, vector<1x16x128xbf16>
    %90 = vector.shape_cast %89 : vector<1x16x128xbf16> to vector<16x128xbf16>
    %91 = vector.shape_cast %87 : vector<16x128xbf16> to vector<1x16x128xbf16>
    tpu.vector_store %arg12[%88, %c0_33, %c0_34], %91 {strides = array<i32>} : memref<8x16x128xbf16, #tpu.memory_space<vmem>>, vector<1x16x128xbf16>,
    %c2_i32 = arith.constant 2 : i32
    %92 = arith.index_cast %c2_i32 : i32 to index
    %c0_35 = arith.constant 0 : index
    %c0_36 = arith.constant 0 : index
    %93 = vector.load %arg17[%92, %c0_35, %c0_36] : memref<8x16x384xf32, #tpu.memory_space<vmem>>, vector<1x16x384xf32>
    %94 = vector.shape_cast %93 : vector<1x16x384xf32> to vector<16x384xf32>
    %95 = arith.truncf %86 : vector<16x128xf32> to vector<16x128xbf16>
    %c0_37 = arith.constant 0 : index
    %c0_38 = arith.constant 0 : index
    %96 = vector.load %arg4[%c0_37, %c0_38] : memref<128x384xbf16, #tpu.memory_space<vmem>>, vector<128x384xbf16>
    %cst_39 = arith.constant dense<0.000000e+00> : vector<16x384xf32>
    %97 = tpu.matmul %95, %96, %cst_39 {dimension_numbers = #tpu.dot_dimension_numbers<[1], [0], [0], [1], [0, 0, 1, 1], [], []>} : vector<16x128xbf16>, vector<128x384xbf16>, vector<16x384xf32> -> vector<16x384xf32>
    %98 = vector.extract_strided_slice %94 {offsets = [0, 0], sizes = [16, 128], strides = [1, 1]} : vector<16x384xf32> to vector<16x128xf32>
    %99 = vector.extract_strided_slice %97 {offsets = [0, 0], sizes = [16, 128], strides = [1, 1]} : vector<16x384xf32> to vector<16x128xf32>
    %100 = arith.addf %98, %99 : vector<16x128xf32>
    %101 = arith.negf %100 : vector<16x128xf32>
    %102 = math.exp %101 : vector<16x128xf32>
    %cst_40 = arith.constant 1.000000e+00 : f32
    %103 = vector.broadcast %cst_40 : f32 to vector<16x128xf32>
    %104 = arith.addf %103, %102 : vector<16x128xf32>
    %105 = arith.divf %103, %104 : vector<16x128xf32>
    %106 = vector.extract_strided_slice %94 {offsets = [0, 128], sizes = [16, 128], strides = [1, 1]} : vector<16x384xf32> to vector<16x128xf32>
    %107 = vector.extract_strided_slice %97 {offsets = [0, 128], sizes = [16, 128], strides = [1, 1]} : vector<16x384xf32> to vector<16x128xf32>
    %108 = arith.addf %106, %107 : vector<16x128xf32>
    %109 = arith.negf %108 : vector<16x128xf32>
    %110 = math.exp %109 : vector<16x128xf32>
    %cst_41 = arith.constant 1.000000e+00 : f32
    %111 = vector.broadcast %cst_41 : f32 to vector<16x128xf32>
    %112 = arith.addf %111, %110 : vector<16x128xf32>
    %113 = arith.divf %111, %112 : vector<16x128xf32>
    %114 = vector.extract_strided_slice %94 {offsets = [0, 256], sizes = [16, 128], strides = [1, 1]} : vector<16x384xf32> to vector<16x128xf32>
    %115 = vector.extract_strided_slice %97 {offsets = [0, 256], sizes = [16, 128], strides = [1, 1]} : vector<16x384xf32> to vector<16x128xf32>
    %116 = arith.addf %115, %14 : vector<16x128xf32>
    %117 = arith.mulf %105, %116 : vector<16x128xf32>
    %118 = arith.addf %114, %117 : vector<16x128xf32>
    %119 = math.tanh %118 : vector<16x128xf32>
    %cst_42 = arith.constant 1.000000e+00 : f32
    %120 = vector.broadcast %cst_42 : f32 to vector<16x128xf32>
    %121 = arith.subf %120, %113 : vector<16x128xf32>
    %122 = arith.mulf %121, %119 : vector<16x128xf32>
    %123 = arith.mulf %113, %86 : vector<16x128xf32>
    %124 = arith.addf %122, %123 : vector<16x128xf32>
    %125 = arith.truncf %124 : vector<16x128xf32> to vector<16x128xbf16>
    %126 = arith.index_cast %c2_i32 : i32 to index
    %c0_43 = arith.constant 0 : index
    %c0_44 = arith.constant 0 : index
    %127 = vector.load %arg12[%126, %c0_43, %c0_44] : memref<8x16x128xbf16, #tpu.memory_space<vmem>>, vector<1x16x128xbf16>
    %128 = vector.shape_cast %127 : vector<1x16x128xbf16> to vector<16x128xbf16>
    %129 = vector.shape_cast %125 : vector<16x128xbf16> to vector<1x16x128xbf16>
    tpu.vector_store %arg12[%126, %c0_43, %c0_44], %129 {strides = array<i32>} : memref<8x16x128xbf16, #tpu.memory_space<vmem>>, vector<1x16x128xbf16>,
    %c3_i32 = arith.constant 3 : i32
    %130 = arith.index_cast %c3_i32 : i32 to index
    %c0_45 = arith.constant 0 : index
    %c0_46 = arith.constant 0 : index
    %131 = vector.load %arg17[%130, %c0_45, %c0_46] : memref<8x16x384xf32, #tpu.memory_space<vmem>>, vector<1x16x384xf32>
    %132 = vector.shape_cast %131 : vector<1x16x384xf32> to vector<16x384xf32>
    %133 = arith.truncf %124 : vector<16x128xf32> to vector<16x128xbf16>
    %c0_47 = arith.constant 0 : index
    %c0_48 = arith.constant 0 : index
    %134 = vector.load %arg4[%c0_47, %c0_48] : memref<128x384xbf16, #tpu.memory_space<vmem>>, vector<128x384xbf16>
    %cst_49 = arith.constant dense<0.000000e+00> : vector<16x384xf32>
    %135 = tpu.matmul %133, %134, %cst_49 {dimension_numbers = #tpu.dot_dimension_numbers<[1], [0], [0], [1], [0, 0, 1, 1], [], []>} : vector<16x128xbf16>, vector<128x384xbf16>, vector<16x384xf32> -> vector<16x384xf32>
    %136 = vector.extract_strided_slice %132 {offsets = [0, 0], sizes = [16, 128], strides = [1, 1]} : vector<16x384xf32> to vector<16x128xf32>
    %137 = vector.extract_strided_slice %135 {offsets = [0, 0], sizes = [16, 128], strides = [1, 1]} : vector<16x384xf32> to vector<16x128xf32>
    %138 = arith.addf %136, %137 : vector<16x128xf32>
    %139 = arith.negf %138 : vector<16x128xf32>
    %140 = math.exp %139 : vector<16x128xf32>
    %cst_50 = arith.constant 1.000000e+00 : f32
    %141 = vector.broadcast %cst_50 : f32 to vector<16x128xf32>
    %142 = arith.addf %141, %140 : vector<16x128xf32>
    %143 = arith.divf %141, %142 : vector<16x128xf32>
    %144 = vector.extract_strided_slice %132 {offsets = [0, 128], sizes = [16, 128], strides = [1, 1]} : vector<16x384xf32> to vector<16x128xf32>
    %145 = vector.extract_strided_slice %135 {offsets = [0, 128], sizes = [16, 128], strides = [1, 1]} : vector<16x384xf32> to vector<16x128xf32>
    %146 = arith.addf %144, %145 : vector<16x128xf32>
    %147 = arith.negf %146 : vector<16x128xf32>
    %148 = math.exp %147 : vector<16x128xf32>
    %cst_51 = arith.constant 1.000000e+00 : f32
    %149 = vector.broadcast %cst_51 : f32 to vector<16x128xf32>
    %150 = arith.addf %149, %148 : vector<16x128xf32>
    %151 = arith.divf %149, %150 : vector<16x128xf32>
    %152 = vector.extract_strided_slice %132 {offsets = [0, 256], sizes = [16, 128], strides = [1, 1]} : vector<16x384xf32> to vector<16x128xf32>
    %153 = vector.extract_strided_slice %135 {offsets = [0, 256], sizes = [16, 128], strides = [1, 1]} : vector<16x384xf32> to vector<16x128xf32>
    %154 = arith.addf %153, %14 : vector<16x128xf32>
    %155 = arith.mulf %143, %154 : vector<16x128xf32>
    %156 = arith.addf %152, %155 : vector<16x128xf32>
    %157 = math.tanh %156 : vector<16x128xf32>
    %cst_52 = arith.constant 1.000000e+00 : f32
    %158 = vector.broadcast %cst_52 : f32 to vector<16x128xf32>
    %159 = arith.subf %158, %151 : vector<16x128xf32>
    %160 = arith.mulf %159, %157 : vector<16x128xf32>
    %161 = arith.mulf %151, %124 : vector<16x128xf32>
    %162 = arith.addf %160, %161 : vector<16x128xf32>
    %163 = arith.truncf %162 : vector<16x128xf32> to vector<16x128xbf16>
    %164 = arith.index_cast %c3_i32 : i32 to index
    %c0_53 = arith.constant 0 : index
    %c0_54 = arith.constant 0 : index
    %165 = vector.load %arg12[%164, %c0_53, %c0_54] : memref<8x16x128xbf16, #tpu.memory_space<vmem>>, vector<1x16x128xbf16>
    %166 = vector.shape_cast %165 : vector<1x16x128xbf16> to vector<16x128xbf16>
    %167 = vector.shape_cast %163 : vector<16x128xbf16> to vector<1x16x128xbf16>
    tpu.vector_store %arg12[%164, %c0_53, %c0_54], %167 {strides = array<i32>} : memref<8x16x128xbf16, #tpu.memory_space<vmem>>, vector<1x16x128xbf16>,
    %c4_i32 = arith.constant 4 : i32
    %168 = arith.index_cast %c4_i32 : i32 to index
    %c0_55 = arith.constant 0 : index
    %c0_56 = arith.constant 0 : index
    %169 = vector.load %arg17[%168, %c0_55, %c0_56] : memref<8x16x384xf32, #tpu.memory_space<vmem>>, vector<1x16x384xf32>
    %170 = vector.shape_cast %169 : vector<1x16x384xf32> to vector<16x384xf32>
    %171 = arith.truncf %162 : vector<16x128xf32> to vector<16x128xbf16>
    %c0_57 = arith.constant 0 : index
    %c0_58 = arith.constant 0 : index
    %172 = vector.load %arg4[%c0_57, %c0_58] : memref<128x384xbf16, #tpu.memory_space<vmem>>, vector<128x384xbf16>
    %cst_59 = arith.constant dense<0.000000e+00> : vector<16x384xf32>
    %173 = tpu.matmul %171, %172, %cst_59 {dimension_numbers = #tpu.dot_dimension_numbers<[1], [0], [0], [1], [0, 0, 1, 1], [], []>} : vector<16x128xbf16>, vector<128x384xbf16>, vector<16x384xf32> -> vector<16x384xf32>
    %174 = vector.extract_strided_slice %170 {offsets = [0, 0], sizes = [16, 128], strides = [1, 1]} : vector<16x384xf32> to vector<16x128xf32>
    %175 = vector.extract_strided_slice %173 {offsets = [0, 0], sizes = [16, 128], strides = [1, 1]} : vector<16x384xf32> to vector<16x128xf32>
    %176 = arith.addf %174, %175 : vector<16x128xf32>
    %177 = arith.negf %176 : vector<16x128xf32>
    %178 = math.exp %177 : vector<16x128xf32>
    %cst_60 = arith.constant 1.000000e+00 : f32
    %179 = vector.broadcast %cst_60 : f32 to vector<16x128xf32>
    %180 = arith.addf %179, %178 : vector<16x128xf32>
    %181 = arith.divf %179, %180 : vector<16x128xf32>
    %182 = vector.extract_strided_slice %170 {offsets = [0, 128], sizes = [16, 128], strides = [1, 1]} : vector<16x384xf32> to vector<16x128xf32>
    %183 = vector.extract_strided_slice %173 {offsets = [0, 128], sizes = [16, 128], strides = [1, 1]} : vector<16x384xf32> to vector<16x128xf32>
    %184 = arith.addf %182, %183 : vector<16x128xf32>
    %185 = arith.negf %184 : vector<16x128xf32>
    %186 = math.exp %185 : vector<16x128xf32>
    %cst_61 = arith.constant 1.000000e+00 : f32
    %187 = vector.broadcast %cst_61 : f32 to vector<16x128xf32>
    %188 = arith.addf %187, %186 : vector<16x128xf32>
    %189 = arith.divf %187, %188 : vector<16x128xf32>
    %190 = vector.extract_strided_slice %170 {offsets = [0, 256], sizes = [16, 128], strides = [1, 1]} : vector<16x384xf32> to vector<16x128xf32>
    %191 = vector.extract_strided_slice %173 {offsets = [0, 256], sizes = [16, 128], strides = [1, 1]} : vector<16x384xf32> to vector<16x128xf32>
    %192 = arith.addf %191, %14 : vector<16x128xf32>
    %193 = arith.mulf %181, %192 : vector<16x128xf32>
    %194 = arith.addf %190, %193 : vector<16x128xf32>
    %195 = math.tanh %194 : vector<16x128xf32>
    %cst_62 = arith.constant 1.000000e+00 : f32
    %196 = vector.broadcast %cst_62 : f32 to vector<16x128xf32>
    %197 = arith.subf %196, %189 : vector<16x128xf32>
    %198 = arith.mulf %197, %195 : vector<16x128xf32>
    %199 = arith.mulf %189, %162 : vector<16x128xf32>
    %200 = arith.addf %198, %199 : vector<16x128xf32>
    %201 = arith.truncf %200 : vector<16x128xf32> to vector<16x128xbf16>
    %202 = arith.index_cast %c4_i32 : i32 to index
    %c0_63 = arith.constant 0 : index
    %c0_64 = arith.constant 0 : index
    %203 = vector.load %arg12[%202, %c0_63, %c0_64] : memref<8x16x128xbf16, #tpu.memory_space<vmem>>, vector<1x16x128xbf16>
    %204 = vector.shape_cast %203 : vector<1x16x128xbf16> to vector<16x128xbf16>
    %205 = vector.shape_cast %201 : vector<16x128xbf16> to vector<1x16x128xbf16>
    tpu.vector_store %arg12[%202, %c0_63, %c0_64], %205 {strides = array<i32>} : memref<8x16x128xbf16, #tpu.memory_space<vmem>>, vector<1x16x128xbf16>,
    %c5_i32 = arith.constant 5 : i32
    %206 = arith.index_cast %c5_i32 : i32 to index
    %c0_65 = arith.constant 0 : index
    %c0_66 = arith.constant 0 : index
    %207 = vector.load %arg17[%206, %c0_65, %c0_66] : memref<8x16x384xf32, #tpu.memory_space<vmem>>, vector<1x16x384xf32>
    %208 = vector.shape_cast %207 : vector<1x16x384xf32> to vector<16x384xf32>
    %209 = arith.truncf %200 : vector<16x128xf32> to vector<16x128xbf16>
    %c0_67 = arith.constant 0 : index
    %c0_68 = arith.constant 0 : index
    %210 = vector.load %arg4[%c0_67, %c0_68] : memref<128x384xbf16, #tpu.memory_space<vmem>>, vector<128x384xbf16>
    %cst_69 = arith.constant dense<0.000000e+00> : vector<16x384xf32>
    %211 = tpu.matmul %209, %210, %cst_69 {dimension_numbers = #tpu.dot_dimension_numbers<[1], [0], [0], [1], [0, 0, 1, 1], [], []>} : vector<16x128xbf16>, vector<128x384xbf16>, vector<16x384xf32> -> vector<16x384xf32>
    %212 = vector.extract_strided_slice %208 {offsets = [0, 0], sizes = [16, 128], strides = [1, 1]} : vector<16x384xf32> to vector<16x128xf32>
    %213 = vector.extract_strided_slice %211 {offsets = [0, 0], sizes = [16, 128], strides = [1, 1]} : vector<16x384xf32> to vector<16x128xf32>
    %214 = arith.addf %212, %213 : vector<16x128xf32>
    %215 = arith.negf %214 : vector<16x128xf32>
    %216 = math.exp %215 : vector<16x128xf32>
    %cst_70 = arith.constant 1.000000e+00 : f32
    %217 = vector.broadcast %cst_70 : f32 to vector<16x128xf32>
    %218 = arith.addf %217, %216 : vector<16x128xf32>
    %219 = arith.divf %217, %218 : vector<16x128xf32>
    %220 = vector.extract_strided_slice %208 {offsets = [0, 128], sizes = [16, 128], strides = [1, 1]} : vector<16x384xf32> to vector<16x128xf32>
    %221 = vector.extract_strided_slice %211 {offsets = [0, 128], sizes = [16, 128], strides = [1, 1]} : vector<16x384xf32> to vector<16x128xf32>
    %222 = arith.addf %220, %221 : vector<16x128xf32>
    %223 = arith.negf %222 : vector<16x128xf32>
    %224 = math.exp %223 : vector<16x128xf32>
    %cst_71 = arith.constant 1.000000e+00 : f32
    %225 = vector.broadcast %cst_71 : f32 to vector<16x128xf32>
    %226 = arith.addf %225, %224 : vector<16x128xf32>
    %227 = arith.divf %225, %226 : vector<16x128xf32>
    %228 = vector.extract_strided_slice %208 {offsets = [0, 256], sizes = [16, 128], strides = [1, 1]} : vector<16x384xf32> to vector<16x128xf32>
    %229 = vector.extract_strided_slice %211 {offsets = [0, 256], sizes = [16, 128], strides = [1, 1]} : vector<16x384xf32> to vector<16x128xf32>
    %230 = arith.addf %229, %14 : vector<16x128xf32>
    %231 = arith.mulf %219, %230 : vector<16x128xf32>
    %232 = arith.addf %228, %231 : vector<16x128xf32>
    %233 = math.tanh %232 : vector<16x128xf32>
    %cst_72 = arith.constant 1.000000e+00 : f32
    %234 = vector.broadcast %cst_72 : f32 to vector<16x128xf32>
    %235 = arith.subf %234, %227 : vector<16x128xf32>
    %236 = arith.mulf %235, %233 : vector<16x128xf32>
    %237 = arith.mulf %227, %200 : vector<16x128xf32>
    %238 = arith.addf %236, %237 : vector<16x128xf32>
    %239 = arith.truncf %238 : vector<16x128xf32> to vector<16x128xbf16>
    %240 = arith.index_cast %c5_i32 : i32 to index
    %c0_73 = arith.constant 0 : index
    %c0_74 = arith.constant 0 : index
    %241 = vector.load %arg12[%240, %c0_73, %c0_74] : memref<8x16x128xbf16, #tpu.memory_space<vmem>>, vector<1x16x128xbf16>
    %242 = vector.shape_cast %241 : vector<1x16x128xbf16> to vector<16x128xbf16>
    %243 = vector.shape_cast %239 : vector<16x128xbf16> to vector<1x16x128xbf16>
    tpu.vector_store %arg12[%240, %c0_73, %c0_74], %243 {strides = array<i32>} : memref<8x16x128xbf16, #tpu.memory_space<vmem>>, vector<1x16x128xbf16>,
    %c6_i32 = arith.constant 6 : i32
    %244 = arith.index_cast %c6_i32 : i32 to index
    %c0_75 = arith.constant 0 : index
    %c0_76 = arith.constant 0 : index
    %245 = vector.load %arg17[%244, %c0_75, %c0_76] : memref<8x16x384xf32, #tpu.memory_space<vmem>>, vector<1x16x384xf32>
    %246 = vector.shape_cast %245 : vector<1x16x384xf32> to vector<16x384xf32>
    %247 = arith.truncf %238 : vector<16x128xf32> to vector<16x128xbf16>
    %c0_77 = arith.constant 0 : index
    %c0_78 = arith.constant 0 : index
    %248 = vector.load %arg4[%c0_77, %c0_78] : memref<128x384xbf16, #tpu.memory_space<vmem>>, vector<128x384xbf16>
    %cst_79 = arith.constant dense<0.000000e+00> : vector<16x384xf32>
    %249 = tpu.matmul %247, %248, %cst_79 {dimension_numbers = #tpu.dot_dimension_numbers<[1], [0], [0], [1], [0, 0, 1, 1], [], []>} : vector<16x128xbf16>, vector<128x384xbf16>, vector<16x384xf32> -> vector<16x384xf32>
    %250 = vector.extract_strided_slice %246 {offsets = [0, 0], sizes = [16, 128], strides = [1, 1]} : vector<16x384xf32> to vector<16x128xf32>
    %251 = vector.extract_strided_slice %249 {offsets = [0, 0], sizes = [16, 128], strides = [1, 1]} : vector<16x384xf32> to vector<16x128xf32>
    %252 = arith.addf %250, %251 : vector<16x128xf32>
    %253 = arith.negf %252 : vector<16x128xf32>
    %254 = math.exp %253 : vector<16x128xf32>
    %cst_80 = arith.constant 1.000000e+00 : f32
    %255 = vector.broadcast %cst_80 : f32 to vector<16x128xf32>
    %256 = arith.addf %255, %254 : vector<16x128xf32>
    %257 = arith.divf %255, %256 : vector<16x128xf32>
    %258 = vector.extract_strided_slice %246 {offsets = [0, 128], sizes = [16, 128], strides = [1, 1]} : vector<16x384xf32> to vector<16x128xf32>
    %259 = vector.extract_strided_slice %249 {offsets = [0, 128], sizes = [16, 128], strides = [1, 1]} : vector<16x384xf32> to vector<16x128xf32>
    %260 = arith.addf %258, %259 : vector<16x128xf32>
    %261 = arith.negf %260 : vector<16x128xf32>
    %262 = math.exp %261 : vector<16x128xf32>
    %cst_81 = arith.constant 1.000000e+00 : f32
    %263 = vector.broadcast %cst_81 : f32 to vector<16x128xf32>
    %264 = arith.addf %263, %262 : vector<16x128xf32>
    %265 = arith.divf %263, %264 : vector<16x128xf32>
    %266 = vector.extract_strided_slice %246 {offsets = [0, 256], sizes = [16, 128], strides = [1, 1]} : vector<16x384xf32> to vector<16x128xf32>
    %267 = vector.extract_strided_slice %249 {offsets = [0, 256], sizes = [16, 128], strides = [1, 1]} : vector<16x384xf32> to vector<16x128xf32>
    %268 = arith.addf %267, %14 : vector<16x128xf32>
    %269 = arith.mulf %257, %268 : vector<16x128xf32>
    %270 = arith.addf %266, %269 : vector<16x128xf32>
    %271 = math.tanh %270 : vector<16x128xf32>
    %cst_82 = arith.constant 1.000000e+00 : f32
    %272 = vector.broadcast %cst_82 : f32 to vector<16x128xf32>
    %273 = arith.subf %272, %265 : vector<16x128xf32>
    %274 = arith.mulf %273, %271 : vector<16x128xf32>
    %275 = arith.mulf %265, %238 : vector<16x128xf32>
    %276 = arith.addf %274, %275 : vector<16x128xf32>
    %277 = arith.truncf %276 : vector<16x128xf32> to vector<16x128xbf16>
    %278 = arith.index_cast %c6_i32 : i32 to index
    %c0_83 = arith.constant 0 : index
    %c0_84 = arith.constant 0 : index
    %279 = vector.load %arg12[%278, %c0_83, %c0_84] : memref<8x16x128xbf16, #tpu.memory_space<vmem>>, vector<1x16x128xbf16>
    %280 = vector.shape_cast %279 : vector<1x16x128xbf16> to vector<16x128xbf16>
    %281 = vector.shape_cast %277 : vector<16x128xbf16> to vector<1x16x128xbf16>
    tpu.vector_store %arg12[%278, %c0_83, %c0_84], %281 {strides = array<i32>} : memref<8x16x128xbf16, #tpu.memory_space<vmem>>, vector<1x16x128xbf16>,
    %c7_i32 = arith.constant 7 : i32
    %282 = arith.index_cast %c7_i32 : i32 to index
    %c0_85 = arith.constant 0 : index
    %c0_86 = arith.constant 0 : index
    %283 = vector.load %arg17[%282, %c0_85, %c0_86] : memref<8x16x384xf32, #tpu.memory_space<vmem>>, vector<1x16x384xf32>
    %284 = vector.shape_cast %283 : vector<1x16x384xf32> to vector<16x384xf32>
    %285 = arith.truncf %276 : vector<16x128xf32> to vector<16x128xbf16>
    %c0_87 = arith.constant 0 : index
    %c0_88 = arith.constant 0 : index
    %286 = vector.load %arg4[%c0_87, %c0_88] : memref<128x384xbf16, #tpu.memory_space<vmem>>, vector<128x384xbf16>
    %cst_89 = arith.constant dense<0.000000e+00> : vector<16x384xf32>
    %287 = tpu.matmul %285, %286, %cst_89 {dimension_numbers = #tpu.dot_dimension_numbers<[1], [0], [0], [1], [0, 0, 1, 1], [], []>} : vector<16x128xbf16>, vector<128x384xbf16>, vector<16x384xf32> -> vector<16x384xf32>
    %288 = vector.extract_strided_slice %284 {offsets = [0, 0], sizes = [16, 128], strides = [1, 1]} : vector<16x384xf32> to vector<16x128xf32>
    %289 = vector.extract_strided_slice %287 {offsets = [0, 0], sizes = [16, 128], strides = [1, 1]} : vector<16x384xf32> to vector<16x128xf32>
    %290 = arith.addf %288, %289 : vector<16x128xf32>
    %291 = arith.negf %290 : vector<16x128xf32>
    %292 = math.exp %291 : vector<16x128xf32>
    %cst_90 = arith.constant 1.000000e+00 : f32
    %293 = vector.broadcast %cst_90 : f32 to vector<16x128xf32>
    %294 = arith.addf %293, %292 : vector<16x128xf32>
    %295 = arith.divf %293, %294 : vector<16x128xf32>
    %296 = vector.extract_strided_slice %284 {offsets = [0, 128], sizes = [16, 128], strides = [1, 1]} : vector<16x384xf32> to vector<16x128xf32>
    %297 = vector.extract_strided_slice %287 {offsets = [0, 128], sizes = [16, 128], strides = [1, 1]} : vector<16x384xf32> to vector<16x128xf32>
    %298 = arith.addf %296, %297 : vector<16x128xf32>
    %299 = arith.negf %298 : vector<16x128xf32>
    %300 = math.exp %299 : vector<16x128xf32>
    %cst_91 = arith.constant 1.000000e+00 : f32
    %301 = vector.broadcast %cst_91 : f32 to vector<16x128xf32>
    %302 = arith.addf %301, %300 : vector<16x128xf32>
    %303 = arith.divf %301, %302 : vector<16x128xf32>
    %304 = vector.extract_strided_slice %284 {offsets = [0, 256], sizes = [16, 128], strides = [1, 1]} : vector<16x384xf32> to vector<16x128xf32>
    %305 = vector.extract_strided_slice %287 {offsets = [0, 256], sizes = [16, 128], strides = [1, 1]} : vector<16x384xf32> to vector<16x128xf32>
    %306 = arith.addf %305, %14 : vector<16x128xf32>
    %307 = arith.mulf %295, %306 : vector<16x128xf32>
    %308 = arith.addf %304, %307 : vector<16x128xf32>
    %309 = math.tanh %308 : vector<16x128xf32>
    %cst_92 = arith.constant 1.000000e+00 : f32
    %310 = vector.broadcast %cst_92 : f32 to vector<16x128xf32>
    %311 = arith.subf %310, %303 : vector<16x128xf32>
    %312 = arith.mulf %311, %309 : vector<16x128xf32>
    %313 = arith.mulf %303, %276 : vector<16x128xf32>
    %314 = arith.addf %312, %313 : vector<16x128xf32>
    %315 = arith.truncf %314 : vector<16x128xf32> to vector<16x128xbf16>
    %316 = arith.index_cast %c7_i32 : i32 to index
    %c0_93 = arith.constant 0 : index
    %c0_94 = arith.constant 0 : index
    %317 = vector.load %arg12[%316, %c0_93, %c0_94] : memref<8x16x128xbf16, #tpu.memory_space<vmem>>, vector<1x16x128xbf16>
    %318 = vector.shape_cast %317 : vector<1x16x128xbf16> to vector<16x128xbf16>
    %319 = vector.shape_cast %315 : vector<16x128xbf16> to vector<1x16x128xbf16>
    tpu.vector_store %arg12[%316, %c0_93, %c0_94], %319 {strides = array<i32>} : memref<8x16x128xbf16, #tpu.memory_space<vmem>>, vector<1x16x128xbf16>,
    %c8_i32 = arith.constant 8 : i32
    %c0_95 = arith.constant 0 : index
    %c0_96 = arith.constant 0 : index
    %320 = vector.load %arg16[%c0_95, %c0_96] : memref<16x128xf32, #tpu.memory_space<vmem>>, vector<16x128xf32>
    tpu.vector_store %arg16[%c0_95, %c0_96], %314 {strides = array<i32>} : memref<16x128xf32, #tpu.memory_space<vmem>>, vector<16x128xf32>,
    %c0_i32_97 = arith.constant 0 : i32
    %321 = arith.cmpi eq, %arg1, %c0_i32_97 : i32
    %322 = arith.extui %321 : i1 to i32
    %c0_i32_98 = arith.constant 0 : i32
    %323 = arith.cmpi ne, %322, %c0_i32_98 : i32
    scf.if %323 {
      %324 = arith.truncf %314 : vector<16x128xf32> to vector<16x128xbf16>
      %c0_99 = arith.constant 0 : index
      %c0_100 = arith.constant 0 : index
      %325 = vector.load %arg7[%c0_99, %c0_100] : memref<128x128xbf16, #tpu.memory_space<vmem>>, vector<128x128xbf16>
      %cst_101 = arith.constant dense<0.000000e+00> : vector<16x128xf32>
      %326 = tpu.matmul %324, %325, %cst_101 {dimension_numbers = #tpu.dot_dimension_numbers<[1], [0], [0], [1], [0, 0, 1, 1], [], []>} : vector<16x128xbf16>, vector<128x128xbf16>, vector<16x128xf32> -> vector<16x128xf32>
      %c0_102 = arith.constant 0 : index
      %c0_103 = arith.constant 0 : index
      %327 = vector.load %arg8[%c0_102, %c0_103] : memref<1x128xf32, #tpu.memory_space<vmem>>, vector<1x128xf32>
      %328 = vector.broadcast %327 : vector<1x128xf32> to vector<16x128xf32>
      %329 = arith.addf %326, %328 : vector<16x128xf32>
      %c0_104 = arith.constant 0 : index
      %c0_105 = arith.constant 0 : index
      %330 = vector.load %arg9[%c0_104, %c0_105] : memref<128x128xbf16, #tpu.memory_space<vmem>>, vector<128x128xbf16>
      %cst_106 = arith.constant dense<0.000000e+00> : vector<16x128xf32>
      %331 = tpu.matmul %324, %330, %cst_106 {dimension_numbers = #tpu.dot_dimension_numbers<[1], [0], [0], [1], [0, 0, 1, 1], [], []>} : vector<16x128xbf16>, vector<128x128xbf16>, vector<16x128xf32> -> vector<16x128xf32>
      %c0_107 = arith.constant 0 : index
      %c0_108 = arith.constant 0 : index
      %332 = vector.load %arg10[%c0_107, %c0_108] : memref<1x128xf32, #tpu.memory_space<vmem>>, vector<1x128xf32>
      %333 = vector.broadcast %332 : vector<1x128xf32> to vector<16x128xf32>
      %334 = arith.addf %331, %333 : vector<16x128xf32>
      %c0_109 = arith.constant 0 : index
      %c0_110 = arith.constant 0 : index
      %335 = vector.load %arg14[%c0_109, %c0_110] : memref<16x128xf32, #tpu.memory_space<vmem>>, vector<16x128xf32>
      tpu.vector_store %arg14[%c0_109, %c0_110], %329 {strides = array<i32>} : memref<16x128xf32, #tpu.memory_space<vmem>>, vector<16x128xf32>,
      %c0_111 = arith.constant 0 : index
      %c0_112 = arith.constant 0 : index
      %336 = vector.load %arg15[%c0_111, %c0_112] : memref<16x128xf32, #tpu.memory_space<vmem>>, vector<16x128xf32>
      tpu.vector_store %arg15[%c0_111, %c0_112], %334 {strides = array<i32>} : memref<16x128xf32, #tpu.memory_space<vmem>>, vector<16x128xf32>,
      %c0_113 = arith.constant 0 : index
      %c0_114 = arith.constant 0 : index
      %337 = vector.load %arg11[%c0_113, %c0_114] : memref<16x128xf32, #tpu.memory_space<vmem>>, vector<16x128xf32>
      %338 = arith.mulf %337, %334 : vector<16x128xf32>
      %339 = arith.addf %338, %329 : vector<16x128xf32>
      %c0_115 = arith.constant 0 : index
      %c0_116 = arith.constant 0 : index
      %340 = vector.load %arg13[%c0_115, %c0_116] : memref<16x128xf32, #tpu.memory_space<vmem>>, vector<16x128xf32>
      tpu.vector_store %arg13[%c0_115, %c0_116], %339 {strides = array<i32>} : memref<16x128xf32, #tpu.memory_space<vmem>>, vector<16x128xf32>,
    } else {
    }
    return
  }
  func.func @transform_0(%arg0: i32, %arg1: i32) -> (i32, i32, i32) {
    %c0_i32 = arith.constant 0 : i32
    %c0_i32_0 = arith.constant 0 : i32
    return %arg1, %arg0, %c0_i32 : i32, i32, i32
  }
  func.func @transform_1(%arg0: i32, %arg1: i32) -> (i32, i32) {
    %c0_i32 = arith.constant 0 : i32
    %c0_i32_0 = arith.constant 0 : i32
    %c0_i32_1 = arith.constant 0 : i32
    return %c0_i32, %c0_i32_0 : i32, i32
  }
  func.func @transform_2(%arg0: i32, %arg1: i32) -> (i32, i32) {
    %c0_i32 = arith.constant 0 : i32
    %c0_i32_0 = arith.constant 0 : i32
    %c0_i32_1 = arith.constant 0 : i32
    return %c0_i32, %c0_i32_0 : i32, i32
  }
  func.func @transform_3(%arg0: i32, %arg1: i32) -> (i32, i32) {
    %c0_i32 = arith.constant 0 : i32
    %c0_i32_0 = arith.constant 0 : i32
    %c0_i32_1 = arith.constant 0 : i32
    return %c0_i32, %c0_i32_0 : i32, i32
  }
  func.func @transform_4(%arg0: i32, %arg1: i32) -> (i32, i32) {
    %c0_i32 = arith.constant 0 : i32
    %c0_i32_0 = arith.constant 0 : i32
    %c0_i32_1 = arith.constant 0 : i32
    return %c0_i32, %c0_i32_0 : i32, i32
  }
  func.func @transform_5(%arg0: i32, %arg1: i32) -> (i32, i32) {
    %c0_i32 = arith.constant 0 : i32
    %c0_i32_0 = arith.constant 0 : i32
    %c0_i32_1 = arith.constant 0 : i32
    return %c0_i32, %c0_i32_0 : i32, i32
  }
  func.func @transform_6(%arg0: i32, %arg1: i32) -> (i32, i32) {
    %c0_i32 = arith.constant 0 : i32
    %c0_i32_0 = arith.constant 0 : i32
    %c0_i32_1 = arith.constant 0 : i32
    return %c0_i32, %c0_i32_0 : i32, i32
  }
  func.func @transform_7(%arg0: i32, %arg1: i32) -> (i32, i32) {
    %c0_i32 = arith.constant 0 : i32
    %c0_i32_0 = arith.constant 0 : i32
    %c0_i32_1 = arith.constant 0 : i32
    return %c0_i32, %c0_i32_0 : i32, i32
  }
  func.func @transform_8(%arg0: i32, %arg1: i32) -> (i32, i32) {
    %c0_i32 = arith.constant 0 : i32
    %c0_i32_0 = arith.constant 0 : i32
    %c0_i32_1 = arith.constant 0 : i32
    return %c0_i32, %c0_i32_0 : i32, i32
  }
  func.func @transform_9(%arg0: i32, %arg1: i32) -> (i32, i32) {
    %c0_i32 = arith.constant 0 : i32
    %c0_i32_0 = arith.constant 0 : i32
    return %arg0, %c0_i32 : i32, i32
  }
  func.func @transform_10(%arg0: i32, %arg1: i32) -> (i32, i32, i32) {
    %c0_i32 = arith.constant 0 : i32
    %c0_i32_0 = arith.constant 0 : i32
    return %arg1, %arg0, %c0_i32 : i32, i32, i32
  }
  func.func @transform_11(%arg0: i32, %arg1: i32) -> (i32, i32) {
    %c0_i32 = arith.constant 0 : i32
    %c0_i32_0 = arith.constant 0 : i32
    return %arg0, %c0_i32 : i32, i32
  }
  func.func @transform_12(%arg0: i32, %arg1: i32) -> (i32, i32) {
    %c0_i32 = arith.constant 0 : i32
    %c0_i32_0 = arith.constant 0 : i32
    return %arg0, %c0_i32 : i32, i32
  }
  func.func @transform_13(%arg0: i32, %arg1: i32) -> (i32, i32) {
    %c0_i32 = arith.constant 0 : i32
    %c0_i32_0 = arith.constant 0 : i32
    return %arg0, %c0_i32 : i32, i32
  }
}

</mosaic_0001>

<llo_original>
// kernel: variational_encoder_forward.1
$region0: #{variational_encoder_forward.1}
  #allocation0 [shape = 'u32[]', space=smem, size = 0x4, offset = 0x4, fixed_abs, tag = 'smem constant byte address 0x4 - core index']
  #allocation1 [shape = 'u32[72,128]{1,0:T(1,128)}', space=vmem, size = 0x9000, scoped, tag = 'internal scratch']
  #allocation2 [shape = 'f32[16,128]{1,0:T(8,128)}', space=vmem, size = 0x2000, scoped, tag = 'scratch operand']
  #allocation3 [shape = 'f32[8,16,384]{2,1,0:T(8,128)}', space=vmem, size = 0x30000, scoped, tag = 'scratch operand']
  %s0 = inlined_call_operand.vmem [shape: bf16[8,16,128], index: 0, kind: input, shape index: {}]
  %s1 = inlined_call_operand.vmem [shape: bf16[128,384], index: 1, kind: input, shape index: {}]
  %s2 = inlined_call_operand.vmem [shape: bf16[128,384], index: 2, kind: input, shape index: {}]
  %s3 = inlined_call_operand.vmem [shape: f32[1,384], index: 3, kind: input, shape index: {}]
  %s4 = inlined_call_operand.vmem [shape: f32[1,128], index: 4, kind: input, shape index: {}]
  %s5 = inlined_call_operand.vmem [shape: bf16[128,128], index: 5, kind: input, shape index: {}]
  %s6 = inlined_call_operand.vmem [shape: f32[1,128], index: 6, kind: input, shape index: {}]
  %s7 = inlined_call_operand.vmem [shape: bf16[128,128], index: 7, kind: input, shape index: {}]
  %s8 = inlined_call_operand.vmem [shape: f32[1,128], index: 8, kind: input, shape index: {}]
  %s9 = inlined_call_operand.vmem [shape: f32[16,128], index: 9, kind: input, shape index: {}]
  %s10 = inlined_call_operand.vmem [shape: bf16[8,16,128], index: 10, kind: output, shape index: {0}]
  %s11 = inlined_call_operand.vmem [shape: f32[16,128], index: 11, kind: output, shape index: {1}]
  %s12 = inlined_call_operand.vmem [shape: f32[16,128], index: 12, kind: output, shape index: {2}]
  %s13 = inlined_call_operand.vmem [shape: f32[16,128], index: 13, kind: output, shape index: {3}]
  %14 = xla_tuple %s10, %s11, %s12, %s13
  %s15 = sld [smem:[#allocation0]]
  $region82: #{variational_encoder_forward.1} parent=0
    _
  %s17 = ssub.s32 1, %s15
  %s18 = scalar_select 0, %s17, %s15
  // Predicated region
  $region2: #{variational_encoder_forward.1} parent=0 // pred_check
    _
  $region3: #{variational_encoder_forward.1} parent=0 // pred_check_branch
    %20 = sbr.rel (0) target = $region5
  $region4: #{variational_encoder_forward.1} parent=0 // pred_region
    _
  $region5: #{variational_encoder_forward.1} parent=0 // pred_fallthru
    _
  // Predicated region
  $region6: #{variational_encoder_forward.1} parent=0 // pred_check
    _
  $region7: #{variational_encoder_forward.1} parent=0 // pred_check_branch
    %22 = sbr.rel (0) target = $region9
  $region8: #{variational_encoder_forward.1} parent=0 // pred_region
    _
  $region9: #{variational_encoder_forward.1} parent=0 // pred_fallthru
    _
  // Predicated region
  $region10: #{variational_encoder_forward.1} parent=0 // pred_check
    _
  $region11: #{variational_encoder_forward.1} parent=0 // pred_check_branch
    %24 = sbr.rel (0) target = $region13
  $region12: #{variational_encoder_forward.1} parent=0 // pred_region
    _
  $region13: #{variational_encoder_forward.1} parent=0 // pred_fallthru
    _
  // Predicated region
  $region14: #{variational_encoder_forward.1} parent=0 // pred_check
    _
  $region15: #{variational_encoder_forward.1} parent=0 // pred_check_branch
    %26 = sbr.rel (0) target = $region17
  $region16: #{variational_encoder_forward.1} parent=0 // pred_region
    _
  $region17: #{variational_encoder_forward.1} parent=0 // pred_fallthru
    _
  // Predicated region
  $region18: #{variational_encoder_forward.1} parent=0 // pred_check
    _
  $region19: #{variational_encoder_forward.1} parent=0 // pred_check_branch
    %28 = sbr.rel (0) target = $region21
  $region20: #{variational_encoder_forward.1} parent=0 // pred_region
    _
  $region21: #{variational_encoder_forward.1} parent=0 // pred_fallthru
    _
  // Predicated region
  $region22: #{variational_encoder_forward.1} parent=0 // pred_check
    _
  $region23: #{variational_encoder_forward.1} parent=0 // pred_check_branch
    %30 = sbr.rel (0) target = $region25
  $region24: #{variational_encoder_forward.1} parent=0 // pred_region
    _
  $region25: #{variational_encoder_forward.1} parent=0 // pred_fallthru
    _
  // Predicated region
  $region26: #{variational_encoder_forward.1} parent=0 // pred_check
    _
  $region27: #{variational_encoder_forward.1} parent=0 // pred_check_branch
    %32 = sbr.rel (0) target = $region29
  $region28: #{variational_encoder_forward.1} parent=0 // pred_region
    _
  $region29: #{variational_encoder_forward.1} parent=0 // pred_fallthru
    _
  // Predicated region
  $region30: #{variational_encoder_forward.1} parent=0 // pred_check
    _
  $region31: #{variational_encoder_forward.1} parent=0 // pred_check_branch
    %34 = sbr.rel (0) target = $region33
  $region32: #{variational_encoder_forward.1} parent=0 // pred_region
    _
  $region33: #{variational_encoder_forward.1} parent=0 // pred_fallthru
    _
  // Predicated region
  $region34: #{variational_encoder_forward.1} parent=0 // pred_check
    _
  $region35: #{variational_encoder_forward.1} parent=0 // pred_check_branch
    %36 = sbr.rel (0) target = $region37
  $region36: #{variational_encoder_forward.1} parent=0 // pred_region
    _
  $region37: #{variational_encoder_forward.1} parent=0 // pred_fallthru
    _
  // Predicated region
  $region38: #{variational_encoder_forward.1} parent=0 // pred_check
    _
  $region39: #{variational_encoder_forward.1} parent=0 // pred_check_branch
    %38 = sbr.rel (0) target = $region41
  $region40: #{variational_encoder_forward.1} parent=0 // pred_region
    _
  $region41: #{variational_encoder_forward.1} parent=0 // pred_fallthru
    _
  %p39 = scmp.eq.s32.totalorder 0, 0
  // Predicated region
  $region42: #{variational_encoder_forward.1} parent=0 // pred_check
    %p40 = pneg %p39
  $region43: #{variational_encoder_forward.1} parent=0 // pred_check_branch
    %42 = sbr.rel (%p40) target = $region45
  $region44: #{variational_encoder_forward.1} parent=0 // pred_region
    %43 = vst [vmem:[#allocation2] sm:$0xff] 0.0
    %44 = vst [vmem:[#allocation2 + $0x8] sm:$0xff] 0.0
  $region45: #{variational_encoder_forward.1} parent=0 // pred_fallthru
    _
  %v45 = vld [vmem:[%s0] sm:$0xf]
  %v46 = vld [vmem:[%s0 + $0x4] sm:$0xf]
  %v47 = vld [vmem:[%s0 + $0x8] sm:$0xf]
  %v48 = vld [vmem:[%s0 + $0xc] sm:$0xf]
  %v49 = vld [vmem:[%s0 + $0x10] sm:$0xf]
  %v50 = vld [vmem:[%s0 + $0x14] sm:$0xf]
  %v51 = vld [vmem:[%s0 + $0x18] sm:$0xf]
  %v52 = vld [vmem:[%s0 + $0x1c] sm:$0xf]
  %v53 = vld [vmem:[%s0 + $0x20] sm:$0xf]
  %v54 = vld [vmem:[%s0 + $0x24] sm:$0xf]
  %v55 = vld [vmem:[%s0 + $0x28] sm:$0xf]
  %v56 = vld [vmem:[%s0 + $0x2c] sm:$0xf]
  %v57 = vld [vmem:[%s0 + $0x30] sm:$0xf]
  %v58 = vld [vmem:[%s0 + $0x34] sm:$0xf]
  %v59 = vld [vmem:[%s0 + $0x38] sm:$0xf]
  %v60 = vld [vmem:[%s0 + $0x3c] sm:$0xf]
  %v61 = vld [vmem:[%s1] sm:$0xff]
  %v62 = vld [vmem:[%s1 + $0x8] sm:$0xf]
  %v63 = vld [vmem:[%s1 + $0xc] sm:$0xff]
  %v64 = vld [vmem:[%s1 + $0x14] sm:$0xf]
  %v65 = vld [vmem:[%s1 + $0x18] sm:$0xff]
  %v66 = vld [vmem:[%s1 + $0x20] sm:$0xf]
  %v67 = vld [vmem:[%s1 + $0x24] sm:$0xff]
  %v68 = vld [vmem:[%s1 + $0x2c] sm:$0xf]
  %v69 = vld [vmem:[%s1 + $0x30] sm:$0xff]
  %v70 = vld [vmem:[%s1 + $0x38] sm:$0xf]
  %v71 = vld [vmem:[%s1 + $0x3c] sm:$0xff]
  %v72 = vld [vmem:[%s1 + $0x44] sm:$0xf]
  %v73 = vld [vmem:[%s1 + $0x48] sm:$0xff]
  %v74 = vld [vmem:[%s1 + $0x50] sm:$0xf]
  %v75 = vld [vmem:[%s1 + $0x54] sm:$0xff]
  %v76 = vld [vmem:[%s1 + $0x5c] sm:$0xf]
  %v77 = vld [vmem:[%s1 + $0x60] sm:$0xff]
  %v78 = vld [vmem:[%s1 + $0x68] sm:$0xf]
  %v79 = vld [vmem:[%s1 + $0x6c] sm:$0xff]
  %v80 = vld [vmem:[%s1 + $0x74] sm:$0xf]
  %v81 = vld [vmem:[%s1 + $0x78] sm:$0xff]
  %v82 = vld [vmem:[%s1 + $0x80] sm:$0xf]
  %v83 = vld [vmem:[%s1 + $0x84] sm:$0xff]
  %v84 = vld [vmem:[%s1 + $0x8c] sm:$0xf]
  %v85 = vld [vmem:[%s1 + $0x90] sm:$0xff]
  %v86 = vld [vmem:[%s1 + $0x98] sm:$0xf]
  %v87 = vld [vmem:[%s1 + $0x9c] sm:$0xff]
  %v88 = vld [vmem:[%s1 + $0xa4] sm:$0xf]
  %v89 = vld [vmem:[%s1 + $0xa8] sm:$0xff]
  %v90 = vld [vmem:[%s1 + $0xb0] sm:$0xf]
  %v91 = vld [vmem:[%s1 + $0xb4] sm:$0xff]
  %v92 = vld [vmem:[%s1 + $0xbc] sm:$0xf]
  %v93 = vld [vmem:[%s3] sm:$0x7]
  %v95 = vperm.slane %v93, 0
  %v96 = vperm.slane %v93, 1
  %v97 = vperm.slane %v93, 2
  %v117 = vunpack.c.l.b16 %v45
  %v118 = vunpack.c.l.b16 %v46
  %v119 = vunpack.c.l.b16 %v47
  %v120 = vunpack.c.l.b16 %v48
  %v121 = vunpack.c.l.b16 %v49
  %v122 = vunpack.c.l.b16 %v50
  %v123 = vunpack.c.l.b16 %v51
  %v124 = vunpack.c.l.b16 %v52
  %v125 = vunpack.c.l.b16 %v53
  %v126 = vunpack.c.l.b16 %v54
  %v127 = vunpack.c.l.b16 %v55
  %v128 = vunpack.c.l.b16 %v56
  %v129 = vunpack.c.l.b16 %v57
  %v130 = vunpack.c.l.b16 %v58
  %v131 = vunpack.c.l.b16 %v59
  %v132 = vunpack.c.l.b16 %v60
  %v133 = vpack.c.b16 %v118, %v117
  %v134 = vpack.c.b16 %v120, %v119
  %v135 = vpack.c.b16 %v122, %v121
  %v136 = vpack.c.b16 %v124, %v123
  %v137 = vpack.c.b16 %v126, %v125
  %v138 = vpack.c.b16 %v128, %v127
  %v139 = vpack.c.b16 %v130, %v129
  %v140 = vpack.c.b16 %v132, %v131
  %v181 = vunpack.c.l.b16 %v61
  %v182 = vunpack.c.h.b16 %v61
  %v183 = vunpack.c.l.b16 %v62
  %v184 = vunpack.c.l.b16 %v63
  %v185 = vunpack.c.h.b16 %v63
  %v186 = vunpack.c.l.b16 %v64
  %v187 = vunpack.c.l.b16 %v65
  %v188 = vunpack.c.h.b16 %v65
  %v189 = vunpack.c.l.b16 %v66
  %v190 = vunpack.c.l.b16 %v67
  %v191 = vunpack.c.h.b16 %v67
  %v192 = vunpack.c.l.b16 %v68
  %v193 = vunpack.c.l.b16 %v69
  %v194 = vunpack.c.h.b16 %v69
  %v195 = vunpack.c.l.b16 %v70
  %v196 = vunpack.c.l.b16 %v71
  %v197 = vunpack.c.h.b16 %v71
  %v198 = vunpack.c.l.b16 %v72
  %v199 = vunpack.c.l.b16 %v73
  %v200 = vunpack.c.h.b16 %v73
  %v201 = vunpack.c.l.b16 %v74
  %v202 = vunpack.c.l.b16 %v75
  %v203 = vunpack.c.h.b16 %v75
  %v204 = vunpack.c.l.b16 %v76
  %v205 = vunpack.c.l.b16 %v77
  %v206 = vunpack.c.h.b16 %v77
  %v207 = vunpack.c.l.b16 %v78
  %v208 = vunpack.c.l.b16 %v79
  %v209 = vunpack.c.h.b16 %v79
  %v210 = vunpack.c.l.b16 %v80
  %v211 = vunpack.c.l.b16 %v81
  %v212 = vunpack.c.h.b16 %v81
  %v213 = vunpack.c.l.b16 %v82
  %v214 = vunpack.c.l.b16 %v83
  %v215 = vunpack.c.h.b16 %v83
  %v216 = vunpack.c.l.b16 %v84
  %v217 = vunpack.c.l.b16 %v85
  %v218 = vunpack.c.h.b16 %v85
  %v219 = vunpack.c.l.b16 %v86
  %v220 = vunpack.c.l.b16 %v87
  %v221 = vunpack.c.h.b16 %v87
  %v222 = vunpack.c.l.b16 %v88
  %v223 = vunpack.c.l.b16 %v89
  %v224 = vunpack.c.h.b16 %v89
  %v225 = vunpack.c.l.b16 %v90
  %v226 = vunpack.c.l.b16 %v91
  %v227 = vunpack.c.h.b16 %v91
  %v228 = vunpack.c.l.b16 %v92
  %v229 = vpack.c.b16 %v184, %v181
  %v230 = vpack.c.b16 %v185, %v182
  %v231 = vpack.c.b16 %v186, %v183
  %v232 = vpack.c.b16 %v190, %v187
  %v233 = vpack.c.b16 %v191, %v188
  %v234 = vpack.c.b16 %v192, %v189
  %v235 = vpack.c.b16 %v196, %v193
  %v236 = vpack.c.b16 %v197, %v194
  %v237 = vpack.c.b16 %v198, %v195
  %v238 = vpack.c.b16 %v202, %v199
  %v239 = vpack.c.b16 %v203, %v200
  %v240 = vpack.c.b16 %v204, %v201
  %v241 = vpack.c.b16 %v208, %v205
  %v242 = vpack.c.b16 %v209, %v206
  %v243 = vpack.c.b16 %v210, %v207
  %v244 = vpack.c.b16 %v214, %v211
  %v245 = vpack.c.b16 %v215, %v212
  %v246 = vpack.c.b16 %v216, %v213
  %v247 = vpack.c.b16 %v220, %v217
  %v248 = vpack.c.b16 %v221, %v218
  %v249 = vpack.c.b16 %v222, %v219
  %v250 = vpack.c.b16 %v226, %v223
  %v251 = vpack.c.b16 %v227, %v224
  %v252 = vpack.c.b16 %v228, %v225
  %277 = vmatpush.bf16.msra.mxu0 %v250
  %278 = vmatpush.bf16.msra.mxu0 %v247
  %279 = vmatpush.bf16.msra.mxu0 %v244
  %280 = vmatpush.bf16.msra.mxu0 %v241
  %281 = vmatpush.bf16.msra.mxu0 %v238
  %282 = vmatpush.bf16.msra.mxu0 %v235
  %283 = vmatpush.bf16.msra.mxu0 %v232
  %284 = vmatpush.bf16.msra.mxu0 %v229
  %285 = vmatmul.bf16.gmra.mxu0 %v133
  %v286 = vpop.f32.mrf.mxu0
  %v287 = vadd.f32 %v95, %v286
  %v288 = vpop.f32.mrf.mxu0
  %v289 = vadd.f32 %v95, %v288
  %290 = vmatmul.bf16.gmra.mxu0 %v134
  %v291 = vpop.f32.mrf.mxu0
  %v292 = vadd.f32 %v95, %v291
  %v293 = vpop.f32.mrf.mxu0
  %v294 = vadd.f32 %v95, %v293
  %295 = vmatmul.bf16.gmra.mxu0 %v135
  %v296 = vpop.f32.mrf.mxu0
  %v297 = vadd.f32 %v95, %v296
  %v298 = vpop.f32.mrf.mxu0
  %v299 = vadd.f32 %v95, %v298
  %300 = vmatmul.bf16.gmra.mxu0 %v136
  %v301 = vpop.f32.mrf.mxu0
  %v302 = vadd.f32 %v95, %v301
  %v303 = vpop.f32.mrf.mxu0
  %v304 = vadd.f32 %v95, %v303
  %305 = vmatmul.bf16.gmra.mxu0 %v137
  %v306 = vpop.f32.mrf.mxu0
  %v307 = vadd.f32 %v95, %v306
  %v308 = vpop.f32.mrf.mxu0
  %v309 = vadd.f32 %v95, %v308
  %310 = vmatmul.bf16.gmra.mxu0 %v138
  %v311 = vpop.f32.mrf.mxu0
  %v312 = vadd.f32 %v95, %v311
  %v313 = vpop.f32.mrf.mxu0
  %v314 = vadd.f32 %v95, %v313
  %315 = vmatmul.bf16.gmra.mxu0 %v139
  %v316 = vpop.f32.mrf.mxu0
  %v317 = vadd.f32 %v95, %v316
  %v318 = vpop.f32.mrf.mxu0
  %v319 = vadd.f32 %v95, %v318
  %320 = vmatmul.bf16.gmra.mxu0 %v140
  %v321 = vpop.f32.mrf.mxu0
  %v322 = vadd.f32 %v95, %v321
  %v323 = vpop.f32.mrf.mxu0
  %v324 = vadd.f32 %v95, %v323
  %325 = vdwg.mxu0
  %326 = vmatpush.bf16.msra.mxu0 %v251
  %327 = vmatpush.bf16.msra.mxu0 %v248
  %328 = vmatpush.bf16.msra.mxu0 %v245
  %329 = vmatpush.bf16.msra.mxu0 %v242
  %330 = vmatpush.bf16.msra.mxu0 %v239
  %331 = vmatpush.bf16.msra.mxu0 %v236
  %332 = vmatpush.bf16.msra.mxu0 %v233
  %333 = vmatpush.bf16.msra.mxu0 %v230
  %334 = vmatmul.bf16.gmra.mxu0 %v133
  %v335 = vpop.f32.mrf.mxu0
  %v336 = vadd.f32 %v96, %v335
  %v337 = vpop.f32.mrf.mxu0
  %v338 = vadd.f32 %v96, %v337
  %339 = vmatmul.bf16.gmra.mxu0 %v134
  %v340 = vpop.f32.mrf.mxu0
  %v341 = vadd.f32 %v96, %v340
  %v342 = vpop.f32.mrf.mxu0
  %v343 = vadd.f32 %v96, %v342
  %344 = vmatmul.bf16.gmra.mxu0 %v135
  %v345 = vpop.f32.mrf.mxu0
  %v346 = vadd.f32 %v96, %v345
  %v347 = vpop.f32.mrf.mxu0
  %v348 = vadd.f32 %v96, %v347
  %349 = vmatmul.bf16.gmra.mxu0 %v136
  %v350 = vpop.f32.mrf.mxu0
  %v351 = vadd.f32 %v96, %v350
  %v352 = vpop.f32.mrf.mxu0
  %v353 = vadd.f32 %v96, %v352
  %354 = vmatmul.bf16.gmra.mxu0 %v137
  %v355 = vpop.f32.mrf.mxu0
  %v356 = vadd.f32 %v96, %v355
  %v357 = vpop.f32.mrf.mxu0
  %v358 = vadd.f32 %v96, %v357
  %359 = vmatmul.bf16.gmra.mxu0 %v138
  %v360 = vpop.f32.mrf.mxu0
  %v361 = vadd.f32 %v96, %v360
  %v362 = vpop.f32.mrf.mxu0
  %v363 = vadd.f32 %v96, %v362
  %364 = vmatmul.bf16.gmra.mxu0 %v139
  %v365 = vpop.f32.mrf.mxu0
  %v366 = vadd.f32 %v96, %v365
  %v367 = vpop.f32.mrf.mxu0
  %v368 = vadd.f32 %v96, %v367
  %369 = vmatmul.bf16.gmra.mxu0 %v140
  %v370 = vpop.f32.mrf.mxu0
  %v371 = vadd.f32 %v96, %v370
  %v372 = vpop.f32.mrf.mxu0
  %v373 = vadd.f32 %v96, %v372
  %374 = vdwg.mxu0
  %375 = vmatpush.bf16.msra.mxu0 %v252
  %376 = vmatpush.bf16.msra.mxu0 %v249
  %377 = vmatpush.bf16.msra.mxu0 %v246
  %378 = vmatpush.bf16.msra.mxu0 %v243
  %379 = vmatpush.bf16.msra.mxu0 %v240
  %380 = vmatpush.bf16.msra.mxu0 %v237
  %381 = vmatpush.bf16.msra.mxu0 %v234
  %382 = vmatpush.bf16.msra.mxu0 %v231
  %383 = vmatmul.bf16.gmra.mxu0 %v133
  %v384 = vpop.f32.mrf.mxu0
  %v385 = vadd.f32 %v97, %v384
  %v386 = vpop.f32.mrf.mxu0
  %v387 = vadd.f32 %v97, %v386
  %388 = vmatmul.bf16.gmra.mxu0 %v134
  %v389 = vpop.f32.mrf.mxu0
  %v390 = vadd.f32 %v97, %v389
  %v391 = vpop.f32.mrf.mxu0
  %v392 = vadd.f32 %v97, %v391
  %393 = vmatmul.bf16.gmra.mxu0 %v135
  %v394 = vpop.f32.mrf.mxu0
  %v395 = vadd.f32 %v97, %v394
  %v396 = vpop.f32.mrf.mxu0
  %v397 = vadd.f32 %v97, %v396
  %398 = vmatmul.bf16.gmra.mxu0 %v136
  %v399 = vpop.f32.mrf.mxu0
  %v400 = vadd.f32 %v97, %v399
  %v401 = vpop.f32.mrf.mxu0
  %v402 = vadd.f32 %v97, %v401
  %403 = vmatmul.bf16.gmra.mxu0 %v137
  %v404 = vpop.f32.mrf.mxu0
  %v405 = vadd.f32 %v97, %v404
  %v406 = vpop.f32.mrf.mxu0
  %v407 = vadd.f32 %v97, %v406
  %408 = vmatmul.bf16.gmra.mxu0 %v138
  %v409 = vpop.f32.mrf.mxu0
  %v410 = vadd.f32 %v97, %v409
  %v411 = vpop.f32.mrf.mxu0
  %v412 = vadd.f32 %v97, %v411
  %413 = vmatmul.bf16.gmra.mxu0 %v139
  %v414 = vpop.f32.mrf.mxu0
  %v415 = vadd.f32 %v97, %v414
  %v416 = vpop.f32.mrf.mxu0
  %v417 = vadd.f32 %v97, %v416
  %418 = vmatmul.bf16.gmra.mxu0 %v140
  %v419 = vpop.f32.mrf.mxu0
  %v420 = vadd.f32 %v97, %v419
  %v421 = vpop.f32.mrf.mxu0
  %v422 = vadd.f32 %v97, %v421
  %423 = vdwg.mxu0
  %424 = vst [vmem:[#allocation3] sm:$0xff] %v287
  %425 = vst [vmem:[#allocation3 + $0x8] sm:$0xff] %v336
  %426 = vst [vmem:[#allocation3 + $0x10] sm:$0xff] %v385
  %427 = vst [vmem:[#allocation3 + $0x18] sm:$0xff] %v289
  %428 = vst [vmem:[#allocation3 + $0x20] sm:$0xff] %v338
  %429 = vst [vmem:[#allocation3 + $0x28] sm:$0xff] %v387
  %430 = vst [vmem:[#allocation3 + $0x30] sm:$0xff] %v292
  %431 = vst [vmem:[#allocation3 + $0x38] sm:$0xff] %v341
  %432 = vst [vmem:[#allocation3 + $0x40] sm:$0xff] %v390
  %433 = vst [vmem:[#allocation3 + $0x48] sm:$0xff] %v294
  %434 = vst [vmem:[#allocation3 + $0x50] sm:$0xff] %v343
  %435 = vst [vmem:[#allocation3 + $0x58] sm:$0xff] %v392
  %436 = vst [vmem:[#allocation3 + $0x60] sm:$0xff] %v297
  %437 = vst [vmem:[#allocation3 + $0x68] sm:$0xff] %v346
  %438 = vst [vmem:[#allocation3 + $0x70] sm:$0xff] %v395
  %439 = vst [vmem:[#allocation3 + $0x78] sm:$0xff] %v299
  %440 = vst [vmem:[#allocation3 + $0x80] sm:$0xff] %v348
  %441 = vst [vmem:[#allocation3 + $0x88] sm:$0xff] %v397
  %442 = vst [vmem:[#allocation3 + $0x90] sm:$0xff] %v302
  %443 = vst [vmem:[#allocation3 + $0x98] sm:$0xff] %v351
  %444 = vst [vmem:[#allocation3 + $0xa0] sm:$0xff] %v400
  %445 = vst [vmem:[#allocation3 + $0xa8] sm:$0xff] %v304
  %446 = vst [vmem:[#allocation3 + $0xb0] sm:$0xff] %v353
  %447 = vst [vmem:[#allocation3 + $0xb8] sm:$0xff] %v402
  %448 = vst [vmem:[#allocation3 + $0xc0] sm:$0xff] %v307
  %449 = vst [vmem:[#allocation3 + $0xc8] sm:$0xff] %v356
  %450 = vst [vmem:[#allocation3 + $0xd0] sm:$0xff] %v405
  %451 = vst [vmem:[#allocation3 + $0xd8] sm:$0xff] %v309
  %452 = vst [vmem:[#allocation3 + $0xe0] sm:$0xff] %v358
  %453 = vst [vmem:[#allocation3 + $0xe8] sm:$0xff] %v407
  %454 = vst [vmem:[#allocation3 + $0xf0] sm:$0xff] %v312
  %455 = vst [vmem:[#allocation3 + $0xf8] sm:$0xff] %v361
  %456 = vst [vmem:[#allocation3 + $0x100] sm:$0xff] %v410
  %457 = vst [vmem:[#allocation3 + $0x108] sm:$0xff] %v314
  %458 = vst [vmem:[#allocation3 + $0x110] sm:$0xff] %v363
  %459 = vst [vmem:[#allocation3 + $0x118] sm:$0xff] %v412
  %460 = vst [vmem:[#allocation3 + $0x120] sm:$0xff] %v317
  %461 = vst [vmem:[#allocation3 + $0x128] sm:$0xff] %v366
  %462 = vst [vmem:[#allocation3 + $0x130] sm:$0xff] %v415
  %463 = vst [vmem:[#allocation3 + $0x138] sm:$0xff] %v319
  %464 = vst [vmem:[#allocation3 + $0x140] sm:$0xff] %v368
  %465 = vst [vmem:[#allocation3 + $0x148] sm:$0xff] %v417
  %466 = vst [vmem:[#allocation3 + $0x150] sm:$0xff] %v322
  %467 = vst [vmem:[#allocation3 + $0x158] sm:$0xff] %v371
  %468 = vst [vmem:[#allocation3 + $0x160] sm:$0xff] %v420
  %469 = vst [vmem:[#allocation3 + $0x168] sm:$0xff] %v324
  %470 = vst [vmem:[#allocation3 + $0x170] sm:$0xff] %v373
  %471 = vst [vmem:[#allocation3 + $0x178] sm:$0xff] %v422
  %v472 = vld [vmem:[%s4] sm:$0x1]
  %v474 = vperm.slane %v472, 0
  %v476 = vld [vmem:[#allocation2] sm:$0xff]
  %v477 = vld [vmem:[#allocation2 + $0x8] sm:$0xff]
  %v478 = vld [vmem:[#allocation3] sm:$0xff]
  %v479 = vld [vmem:[#allocation3 + $0x8] sm:$0xff]
  %v480 = vld [vmem:[#allocation3 + $0x10] sm:$0xff]
  %v481 = vld [vmem:[#allocation3 + $0x18] sm:$0xff]
  %v482 = vld [vmem:[#allocation3 + $0x20] sm:$0xff]
  %v483 = vld [vmem:[#allocation3 + $0x28] sm:$0xff]
  %v484 = vpack.c.bf16 %v477, %v476
  %v485 = vld [vmem:[%s2] sm:$0xff]
  %v486 = vld [vmem:[%s2 + $0x8] sm:$0xf]
  %v487 = vld [vmem:[%s2 + $0xc] sm:$0xff]
  %v488 = vld [vmem:[%s2 + $0x14] sm:$0xf]
  %v489 = vld [vmem:[%s2 + $0x18] sm:$0xff]
  %v490 = vld [vmem:[%s2 + $0x20] sm:$0xf]
  %v491 = vld [vmem:[%s2 + $0x24] sm:$0xff]
  %v492 = vld [vmem:[%s2 + $0x2c] sm:$0xf]
  %v493 = vld [vmem:[%s2 + $0x30] sm:$0xff]
  %v494 = vld [vmem:[%s2 + $0x38] sm:$0xf]
  %v495 = vld [vmem:[%s2 + $0x3c] sm:$0xff]
  %v496 = vld [vmem:[%s2 + $0x44] sm:$0xf]
  %v497 = vld [vmem:[%s2 + $0x48] sm:$0xff]
  %v498 = vld [vmem:[%s2 + $0x50] sm:$0xf]
  %v499 = vld [vmem:[%s2 + $0x54] sm:$0xff]
  %v500 = vld [vmem:[%s2 + $0x5c] sm:$0xf]
  %v501 = vld [vmem:[%s2 + $0x60] sm:$0xff]
  %v502 = vld [vmem:[%s2 + $0x68] sm:$0xf]
  %v503 = vld [vmem:[%s2 + $0x6c] sm:$0xff]
  %v504 = vld [vmem:[%s2 + $0x74] sm:$0xf]
  %v505 = vld [vmem:[%s2 + $0x78] sm:$0xff]
  %v506 = vld [vmem:[%s2 + $0x80] sm:$0xf]
  %v507 = vld [vmem:[%s2 + $0x84] sm:$0xff]
  %v508 = vld [vmem:[%s2 + $0x8c] sm:$0xf]
  %v509 = vld [vmem:[%s2 + $0x90] sm:$0xff]
  %v510 = vld [vmem:[%s2 + $0x98] sm:$0xf]
  %v511 = vld [vmem:[%s2 + $0x9c] sm:$0xff]
  %v512 = vld [vmem:[%s2 + $0xa4] sm:$0xf]
  %v513 = vld [vmem:[%s2 + $0xa8] sm:$0xff]
  %v514 = vld [vmem:[%s2 + $0xb0] sm:$0xf]
  %v515 = vld [vmem:[%s2 + $0xb4] sm:$0xff]
  %v516 = vld [vmem:[%s2 + $0xbc] sm:$0xf]
  %v549 = vunpack.c.l.b16 %v485
  %v550 = vunpack.c.h.b16 %v485
  %v551 = vunpack.c.l.b16 %v486
  %v552 = vunpack.c.l.b16 %v487
  %v553 = vunpack.c.h.b16 %v487
  %v554 = vunpack.c.l.b16 %v488
  %v555 = vunpack.c.l.b16 %v489
  %v556 = vunpack.c.h.b16 %v489
  %v557 = vunpack.c.l.b16 %v490
  %v558 = vunpack.c.l.b16 %v491
  %v559 = vunpack.c.h.b16 %v491
  %v560 = vunpack.c.l.b16 %v492
  %v561 = vunpack.c.l.b16 %v493
  %v562 = vunpack.c.h.b16 %v493
  %v563 = vunpack.c.l.b16 %v494
  %v564 = vunpack.c.l.b16 %v495
  %v565 = vunpack.c.h.b16 %v495
  %v566 = vunpack.c.l.b16 %v496
  %v567 = vunpack.c.l.b16 %v497
  %v568 = vunpack.c.h.b16 %v497
  %v569 = vunpack.c.l.b16 %v498
  %v570 = vunpack.c.l.b16 %v499
  %v571 = vunpack.c.h.b16 %v499
  %v572 = vunpack.c.l.b16 %v500
  %v573 = vunpack.c.l.b16 %v501
  %v574 = vunpack.c.h.b16 %v501
  %v575 = vunpack.c.l.b16 %v502
  %v576 = vunpack.c.l.b16 %v503
  %v577 = vunpack.c.h.b16 %v503
  %v578 = vunpack.c.l.b16 %v504
  %v579 = vunpack.c.l.b16 %v505
  %v580 = vunpack.c.h.b16 %v505
  %v581 = vunpack.c.l.b16 %v506
  %v582 = vunpack.c.l.b16 %v507
  %v583 = vunpack.c.h.b16 %v507
  %v584 = vunpack.c.l.b16 %v508
  %v585 = vunpack.c.l.b16 %v509
  %v586 = vunpack.c.h.b16 %v509
  %v587 = vunpack.c.l.b16 %v510
  %v588 = vunpack.c.l.b16 %v511
  %v589 = vunpack.c.h.b16 %v511
  %v590 = vunpack.c.l.b16 %v512
  %v591 = vunpack.c.l.b16 %v513
  %v592 = vunpack.c.h.b16 %v513
  %v593 = vunpack.c.l.b16 %v514
  %v594 = vunpack.c.l.b16 %v515
  %v595 = vunpack.c.h.b16 %v515
  %v596 = vunpack.c.l.b16 %v516
  %v597 = vpack.c.b16 %v552, %v549
  %v598 = vpack.c.b16 %v553, %v550
  %v599 = vpack.c.b16 %v554, %v551
  %v600 = vpack.c.b16 %v558, %v555
  %v601 = vpack.c.b16 %v559, %v556
  %v602 = vpack.c.b16 %v560, %v557
  %v603 = vpack.c.b16 %v564, %v561
  %v604 = vpack.c.b16 %v565, %v562
  %v605 = vpack.c.b16 %v566, %v563
  %v606 = vpack.c.b16 %v570, %v567
  %v607 = vpack.c.b16 %v571, %v568
  %v608 = vpack.c.b16 %v572, %v569
  %v609 = vpack.c.b16 %v576, %v573
  %v610 = vpack.c.b16 %v577, %v574
  %v611 = vpack.c.b16 %v578, %v575
  %v612 = vpack.c.b16 %v582, %v579
  %v613 = vpack.c.b16 %v583, %v580
  %v614 = vpack.c.b16 %v584, %v581
  %v615 = vpack.c.b16 %v588, %v585
  %v616 = vpack.c.b16 %v589, %v586
  %v617 = vpack.c.b16 %v590, %v587
  %v618 = vpack.c.b16 %v594, %v591
  %v619 = vpack.c.b16 %v595, %v592
  %v620 = vpack.c.b16 %v596, %v593
  %645 = vmatpush.bf16.msra.mxu0 %v618
  %646 = vmatpush.bf16.msra.mxu0 %v615
  %647 = vmatpush.bf16.msra.mxu0 %v612
  %648 = vmatpush.bf16.msra.mxu0 %v609
  %649 = vmatpush.bf16.msra.mxu0 %v606
  %650 = vmatpush.bf16.msra.mxu0 %v603
  %651 = vmatpush.bf16.msra.mxu0 %v600
  %652 = vmatpush.bf16.msra.mxu0 %v597
  %653 = vmatmul.bf16.gmra.mxu0 %v484
  %v654 = vpop.f32.mrf.mxu0
  %v655 = vadd.f32 0.0, %v654
  %v656 = vpop.f32.mrf.mxu0
  %v657 = vadd.f32 0.0, %v656
  %658 = vdwg.mxu0
  %659 = vmatpush.bf16.msra.mxu0 %v619
  %660 = vmatpush.bf16.msra.mxu0 %v616
  %661 = vmatpush.bf16.msra.mxu0 %v613
  %662 = vmatpush.bf16.msra.mxu0 %v610
  %663 = vmatpush.bf16.msra.mxu0 %v607
  %664 = vmatpush.bf16.msra.mxu0 %v604
  %665 = vmatpush.bf16.msra.mxu0 %v601
  %666 = vmatpush.bf16.msra.mxu0 %v598
  %667 = vmatmul.bf16.gmra.mxu0 %v484
  %v668 = vpop.f32.mrf.mxu0
  %v669 = vadd.f32 0.0, %v668
  %v670 = vpop.f32.mrf.mxu0
  %v671 = vadd.f32 0.0, %v670
  %672 = vdwg.mxu0
  %673 = vmatpush.bf16.msra.mxu0 %v620
  %674 = vmatpush.bf16.msra.mxu0 %v617
  %675 = vmatpush.bf16.msra.mxu0 %v614
  %676 = vmatpush.bf16.msra.mxu0 %v611
  %677 = vmatpush.bf16.msra.mxu0 %v608
  %678 = vmatpush.bf16.msra.mxu0 %v605
  %679 = vmatpush.bf16.msra.mxu0 %v602
  %680 = vmatpush.bf16.msra.mxu0 %v599
  %681 = vmatmul.bf16.gmra.mxu0 %v484
  %v682 = vpop.f32.mrf.mxu0
  %v683 = vadd.f32 0.0, %v682
  %v684 = vpop.f32.mrf.mxu0
  %v685 = vadd.f32 0.0, %v684
  %686 = vdwg.mxu0
  %v687 = vadd.f32 %v478, %v655
  %v688 = vadd.f32 %v481, %v657
  %v689 = vxor.u32 %v687, 2147483648
  %v690 = vxor.u32 %v688, 2147483648
  %v691 = vmul.f32 %v689, 1.442695
  %v692 = vpow.pop %v691
  %v693 = vmul.f32 %v690, 1.442695
  %v694 = vpow.pop %v693
  %v695 = vadd.f32 %v692, 1.0
  %v696 = vadd.f32 %v694, 1.0
  %v697 = vrcp.pop %v695
  %v698 = vmul.f32 %v695, %v697
  %v699 = vsub.f32 1.0, %v698
  %v700 = vmul.f32 %v697, %v699
  %v701 = vadd.f32 %v697, %v700
  %vm702 = vweird.f32 %v695
  %vm703 = vweird.f32 %v697
  %vm704 = vmor %vm702, %vm703
  %v705 = vsel %vm704, %v697, %v701
  %v706 = vand.u32 2147483647, %v695
  %vm707 = vcmp.eq.f32.partialorder %v706, 8.507059e+37
  %v708 = vand.u32 %v695, 2147483648
  %v709 = vor.u32 1.1754944e-38, %v708
  %v710 = vsel %vm707, %v709, %v705
  %v711 = vmul.f32 1.0, %v710
  %v712 = vrcp.pop %v696
  %v713 = vmul.f32 %v696, %v712
  %v714 = vsub.f32 1.0, %v713
  %v715 = vmul.f32 %v712, %v714
  %v716 = vadd.f32 %v712, %v715
  %vm717 = vweird.f32 %v696
  %vm718 = vweird.f32 %v712
  %vm719 = vmor %vm717, %vm718
  %v720 = vsel %vm719, %v712, %v716
  %v721 = vand.u32 2147483647, %v696
  %vm722 = vcmp.eq.f32.partialorder %v721, 8.507059e+37
  %v723 = vand.u32 %v696, 2147483648
  %v724 = vor.u32 1.1754944e-38, %v723
  %v725 = vsel %vm722, %v724, %v720
  %v726 = vmul.f32 1.0, %v725
  %v727 = vadd.f32 %v479, %v669
  %v728 = vadd.f32 %v482, %v671
  %v729 = vxor.u32 %v727, 2147483648
  %v730 = vxor.u32 %v728, 2147483648
  %v731 = vmul.f32 %v729, 1.442695
  %v732 = vpow.pop %v731
  %v733 = vmul.f32 %v730, 1.442695
  %v734 = vpow.pop %v733
  %v735 = vadd.f32 %v732, 1.0
  %v736 = vadd.f32 %v734, 1.0
  %v737 = vrcp.pop %v735
  %v738 = vmul.f32 %v735, %v737
  %v739 = vsub.f32 1.0, %v738
  %v740 = vmul.f32 %v737, %v739
  %v741 = vadd.f32 %v737, %v740
  %vm742 = vweird.f32 %v735
  %vm743 = vweird.f32 %v737
  %vm744 = vmor %vm742, %vm743
  %v745 = vsel %vm744, %v737, %v741
  %v746 = vand.u32 2147483647, %v735
  %vm747 = vcmp.eq.f32.partialorder %v746, 8.507059e+37
  %v748 = vand.u32 %v735, 2147483648
  %v749 = vor.u32 1.1754944e-38, %v748
  %v750 = vsel %vm747, %v749, %v745
  %v751 = vmul.f32 1.0, %v750
  %v752 = vrcp.pop %v736
  %v753 = vmul.f32 %v736, %v752
  %v754 = vsub.f32 1.0, %v753
  %v755 = vmul.f32 %v752, %v754
  %v756 = vadd.f32 %v752, %v755
  %vm757 = vweird.f32 %v736
  %vm758 = vweird.f32 %v752
  %vm759 = vmor %vm757, %vm758
  %v760 = vsel %vm759, %v752, %v756
  %v761 = vand.u32 2147483647, %v736
  %vm762 = vcmp.eq.f32.partialorder %v761, 8.507059e+37
  %v763 = vand.u32 %v736, 2147483648
  %v764 = vor.u32 1.1754944e-38, %v763
  %v765 = vsel %vm762, %v764, %v760
  %v766 = vmul.f32 1.0, %v765
  %v767 = vadd.f32 %v683, %v474
  %v768 = vadd.f32 %v685, %v474
  %v769 = vmul.f32 %v711, %v767
  %v770 = vmul.f32 %v726, %v768
  %v771 = vadd.f32 %v480, %v769
  %v772 = vadd.f32 %v483, %v770
  %v773 = vtanh.pop %v771
  %v774 = vtanh.pop %v772
  %v775 = vsub.f32 1.0, %v751
  %v776 = vsub.f32 1.0, %v766
  %v777 = vmul.f32 %v775, %v773
  %v778 = vmul.f32 %v776, %v774
  %v779 = vmul.f32 %v751, %v476
  %v780 = vmul.f32 %v766, %v477
  %v781 = vadd.f32 %v777, %v779
  %v782 = vadd.f32 %v778, %v780
  %v783 = vpack.c.bf16 %v781, %v781
  %v784 = vpack.c.bf16 %v782, %v782
  %785 = vst [vmem:[%s10] sm:$0xf] %v783
  %786 = vst [vmem:[%s10 + $0x4] sm:$0xf] %v784
  %s787 = scalar_lea.vmem [#allocation3], 48
  %v788 = vld [vmem:[%s787] sm:$0xff]
  %v789 = vld [vmem:[%s787 + $0x8] sm:$0xff]
  %v790 = vld [vmem:[%s787 + $0x10] sm:$0xff]
  %v791 = vld [vmem:[%s787 + $0x18] sm:$0xff]
  %v792 = vld [vmem:[%s787 + $0x20] sm:$0xff]
  %v793 = vld [vmem:[%s787 + $0x28] sm:$0xff]
  %v794 = vld [vmem:[%s2] sm:$0xff]
  %v795 = vld [vmem:[%s2 + $0x8] sm:$0xf]
  %v796 = vld [vmem:[%s2 + $0xc] sm:$0xff]
  %v797 = vld [vmem:[%s2 + $0x14] sm:$0xf]
  %v798 = vld [vmem:[%s2 + $0x18] sm:$0xff]
  %v799 = vld [vmem:[%s2 + $0x20] sm:$0xf]
  %v800 = vld [vmem:[%s2 + $0x24] sm:$0xff]
  %v801 = vld [vmem:[%s2 + $0x2c] sm:$0xf]
  %v802 = vld [vmem:[%s2 + $0x30] sm:$0xff]
  %v803 = vld [vmem:[%s2 + $0x38] sm:$0xf]
  %v804 = vld [vmem:[%s2 + $0x3c] sm:$0xff]
  %v805 = vld [vmem:[%s2 + $0x44] sm:$0xf]
  %v806 = vld [vmem:[%s2 + $0x48] sm:$0xff]
  %v807 = vld [vmem:[%s2 + $0x50] sm:$0xf]
  %v808 = vld [vmem:[%s2 + $0x54] sm:$0xff]
  %v809 = vld [vmem:[%s2 + $0x5c] sm:$0xf]
  %v810 = vld [vmem:[%s2 + $0x60] sm:$0xff]
  %v811 = vld [vmem:[%s2 + $0x68] sm:$0xf]
  %v812 = vld [vmem:[%s2 + $0x6c] sm:$0xff]
  %v813 = vld [vmem:[%s2 + $0x74] sm:$0xf]
  %v814 = vld [vmem:[%s2 + $0x78] sm:$0xff]
  %v815 = vld [vmem:[%s2 + $0x80] sm:$0xf]
  %v816 = vld [vmem:[%s2 + $0x84] sm:$0xff]
  %v817 = vld [vmem:[%s2 + $0x8c] sm:$0xf]
  %v818 = vld [vmem:[%s2 + $0x90] sm:$0xff]
  %v819 = vld [vmem:[%s2 + $0x98] sm:$0xf]
  %v820 = vld [vmem:[%s2 + $0x9c] sm:$0xff]
  %v821 = vld [vmem:[%s2 + $0xa4] sm:$0xf]
  %v822 = vld [vmem:[%s2 + $0xa8] sm:$0xff]
  %v823 = vld [vmem:[%s2 + $0xb0] sm:$0xf]
  %v824 = vld [vmem:[%s2 + $0xb4] sm:$0xff]
  %v825 = vld [vmem:[%s2 + $0xbc] sm:$0xf]
  %v828 = vunpack.c.l.b16 %v783
  %v829 = vunpack.c.l.b16 %v784
  %v830 = vpack.c.b16 %v829, %v828
  %v864 = vunpack.c.l.b16 %v794
  %v865 = vunpack.c.h.b16 %v794
  %v866 = vunpack.c.l.b16 %v795
  %v867 = vunpack.c.l.b16 %v796
  %v868 = vunpack.c.h.b16 %v796
  %v869 = vunpack.c.l.b16 %v797
  %v870 = vunpack.c.l.b16 %v798
  %v871 = vunpack.c.h.b16 %v798
  %v872 = vunpack.c.l.b16 %v799
  %v873 = vunpack.c.l.b16 %v800
  %v874 = vunpack.c.h.b16 %v800
  %v875 = vunpack.c.l.b16 %v801
  %v876 = vunpack.c.l.b16 %v802
  %v877 = vunpack.c.h.b16 %v802
  %v878 = vunpack.c.l.b16 %v803
  %v879 = vunpack.c.l.b16 %v804
  %v880 = vunpack.c.h.b16 %v804
  %v881 = vunpack.c.l.b16 %v805
  %v882 = vunpack.c.l.b16 %v806
  %v883 = vunpack.c.h.b16 %v806
  %v884 = vunpack.c.l.b16 %v807
  %v885 = vunpack.c.l.b16 %v808
  %v886 = vunpack.c.h.b16 %v808
  %v887 = vunpack.c.l.b16 %v809
  %v888 = vunpack.c.l.b16 %v810
  %v889 = vunpack.c.h.b16 %v810
  %v890 = vunpack.c.l.b16 %v811
  %v891 = vunpack.c.l.b16 %v812
  %v892 = vunpack.c.h.b16 %v812
  %v893 = vunpack.c.l.b16 %v813
  %v894 = vunpack.c.l.b16 %v814
  %v895 = vunpack.c.h.b16 %v814
  %v896 = vunpack.c.l.b16 %v815
  %v897 = vunpack.c.l.b16 %v816
  %v898 = vunpack.c.h.b16 %v816
  %v899 = vunpack.c.l.b16 %v817
  %v900 = vunpack.c.l.b16 %v818
  %v901 = vunpack.c.h.b16 %v818
  %v902 = vunpack.c.l.b16 %v819
  %v903 = vunpack.c.l.b16 %v820
  %v904 = vunpack.c.h.b16 %v820
  %v905 = vunpack.c.l.b16 %v821
  %v906 = vunpack.c.l.b16 %v822
  %v907 = vunpack.c.h.b16 %v822
  %v908 = vunpack.c.l.b16 %v823
  %v909 = vunpack.c.l.b16 %v824
  %v910 = vunpack.c.h.b16 %v824
  %v911 = vunpack.c.l.b16 %v825
  %v912 = vpack.c.b16 %v867, %v864
  %v913 = vpack.c.b16 %v868, %v865
  %v914 = vpack.c.b16 %v869, %v866
  %v915 = vpack.c.b16 %v873, %v870
  %v916 = vpack.c.b16 %v874, %v871
  %v917 = vpack.c.b16 %v875, %v872
  %v918 = vpack.c.b16 %v879, %v876
  %v919 = vpack.c.b16 %v880, %v877
  %v920 = vpack.c.b16 %v881, %v878
  %v921 = vpack.c.b16 %v885, %v882
  %v922 = vpack.c.b16 %v886, %v883
  %v923 = vpack.c.b16 %v887, %v884
  %v924 = vpack.c.b16 %v891, %v888
  %v925 = vpack.c.b16 %v892, %v889
  %v926 = vpack.c.b16 %v893, %v890
  %v927 = vpack.c.b16 %v897, %v894
  %v928 = vpack.c.b16 %v898, %v895
  %v929 = vpack.c.b16 %v899, %v896
  %v930 = vpack.c.b16 %v903, %v900
  %v931 = vpack.c.b16 %v904, %v901
  %v932 = vpack.c.b16 %v905, %v902
  %v933 = vpack.c.b16 %v909, %v906
  %v934 = vpack.c.b16 %v910, %v907
  %v935 = vpack.c.b16 %v911, %v908
  %960 = vmatpush.bf16.msra.mxu0 %v933
  %961 = vmatpush.bf16.msra.mxu0 %v930
  %962 = vmatpush.bf16.msra.mxu0 %v927
  %963 = vmatpush.bf16.msra.mxu0 %v924
  %964 = vmatpush.bf16.msra.mxu0 %v921
  %965 = vmatpush.bf16.msra.mxu0 %v918
  %966 = vmatpush.bf16.msra.mxu0 %v915
  %967 = vmatpush.bf16.msra.mxu0 %v912
  %968 = vmatmul.bf16.gmra.mxu0 %v830
  %v969 = vpop.f32.mrf.mxu0
  %v970 = vadd.f32 0.0, %v969
  %v971 = vpop.f32.mrf.mxu0
  %v972 = vadd.f32 0.0, %v971
  %973 = vdwg.mxu0
  %974 = vmatpush.bf16.msra.mxu0 %v934
  %975 = vmatpush.bf16.msra.mxu0 %v931
  %976 = vmatpush.bf16.msra.mxu0 %v928
  %977 = vmatpush.bf16.msra.mxu0 %v925
  %978 = vmatpush.bf16.msra.mxu0 %v922
  %979 = vmatpush.bf16.msra.mxu0 %v919
  %980 = vmatpush.bf16.msra.mxu0 %v916
  %981 = vmatpush.bf16.msra.mxu0 %v913
  %982 = vmatmul.bf16.gmra.mxu0 %v830
  %v983 = vpop.f32.mrf.mxu0
  %v984 = vadd.f32 0.0, %v983
  %v985 = vpop.f32.mrf.mxu0
  %v986 = vadd.f32 0.0, %v985
  %987 = vdwg.mxu0
  %988 = vmatpush.bf16.msra.mxu0 %v935
  %989 = vmatpush.bf16.msra.mxu0 %v932
  %990 = vmatpush.bf16.msra.mxu0 %v929
  %991 = vmatpush.bf16.msra.mxu0 %v926
  %992 = vmatpush.bf16.msra.mxu0 %v923
  %993 = vmatpush.bf16.msra.mxu0 %v920
  %994 = vmatpush.bf16.msra.mxu0 %v917
  %995 = vmatpush.bf16.msra.mxu0 %v914
  %996 = vmatmul.bf16.gmra.mxu0 %v830
  %v997 = vpop.f32.mrf.mxu0
  %v998 = vadd.f32 0.0, %v997
  %v999 = vpop.f32.mrf.mxu0
  %v1000 = vadd.f32 0.0, %v999
  %1001 = vdwg.mxu0
  %v1002 = vadd.f32 %v788, %v970
  %v1003 = vadd.f32 %v791, %v972
  %v1004 = vxor.u32 %v1002, 2147483648
  %v1005 = vxor.u32 %v1003, 2147483648
  %v1006 = vmul.f32 %v1004, 1.442695
  %v1007 = vpow.pop %v1006
  %v1008 = vmul.f32 %v1005, 1.442695
  %v1009 = vpow.pop %v1008
  %v1010 = vadd.f32 %v1007, 1.0
  %v1011 = vadd.f32 %v1009, 1.0
  %v1012 = vrcp.pop %v1010
  %v1013 = vmul.f32 %v1010, %v1012
  %v1014 = vsub.f32 1.0, %v1013
  %v1015 = vmul.f32 %v1012, %v1014
  %v1016 = vadd.f32 %v1012, %v1015
  %vm1017 = vweird.f32 %v1010
  %vm1018 = vweird.f32 %v1012
  %vm1019 = vmor %vm1017, %vm1018
  %v1020 = vsel %vm1019, %v1012, %v1016
  %v1021 = vand.u32 2147483647, %v1010
  %vm1022 = vcmp.eq.f32.partialorder %v1021, 8.507059e+37
  %v1023 = vand.u32 %v1010, 2147483648
  %v1024 = vor.u32 1.1754944e-38, %v1023
  %v1025 = vsel %vm1022, %v1024, %v1020
  %v1026 = vmul.f32 1.0, %v1025
  %v1027 = vrcp.pop %v1011
  %v1028 = vmul.f32 %v1011, %v1027
  %v1029 = vsub.f32 1.0, %v1028
  %v1030 = vmul.f32 %v1027, %v1029
  %v1031 = vadd.f32 %v1027, %v1030
  %vm1032 = vweird.f32 %v1011
  %vm1033 = vweird.f32 %v1027
  %vm1034 = vmor %vm1032, %vm1033
  %v1035 = vsel %vm1034, %v1027, %v1031
  %v1036 = vand.u32 2147483647, %v1011
  %vm1037 = vcmp.eq.f32.partialorder %v1036, 8.507059e+37
  %v1038 = vand.u32 %v1011, 2147483648
  %v1039 = vor.u32 1.1754944e-38, %v1038
  %v1040 = vsel %vm1037, %v1039, %v1035
  %v1041 = vmul.f32 1.0, %v1040
  %v1042 = vadd.f32 %v789, %v984
  %v1043 = vadd.f32 %v792, %v986
  %v1044 = vxor.u32 %v1042, 2147483648
  %v1045 = vxor.u32 %v1043, 2147483648
  %v1046 = vmul.f32 %v1044, 1.442695
  %v1047 = vpow.pop %v1046
  %v1048 = vmul.f32 %v1045, 1.442695
  %v1049 = vpow.pop %v1048
  %v1050 = vadd.f32 %v1047, 1.0
  %v1051 = vadd.f32 %v1049, 1.0
  %v1052 = vrcp.pop %v1050
  %v1053 = vmul.f32 %v1050, %v1052
  %v1054 = vsub.f32 1.0, %v1053
  %v1055 = vmul.f32 %v1052, %v1054
  %v1056 = vadd.f32 %v1052, %v1055
  %vm1057 = vweird.f32 %v1050
  %vm1058 = vweird.f32 %v1052
  %vm1059 = vmor %vm1057, %vm1058
  %v1060 = vsel %vm1059, %v1052, %v1056
  %v1061 = vand.u32 2147483647, %v1050
  %vm1062 = vcmp.eq.f32.partialorder %v1061, 8.507059e+37
  %v1063 = vand.u32 %v1050, 2147483648
  %v1064 = vor.u32 1.1754944e-38, %v1063
  %v1065 = vsel %vm1062, %v1064, %v1060
  %v1066 = vmul.f32 1.0, %v1065
  %v1067 = vrcp.pop %v1051
  %v1068 = vmul.f32 %v1051, %v1067
  %v1069 = vsub.f32 1.0, %v1068
  %v1070 = vmul.f32 %v1067, %v1069
  %v1071 = vadd.f32 %v1067, %v1070
  %vm1072 = vweird.f32 %v1051
  %vm1073 = vweird.f32 %v1067
  %vm1074 = vmor %vm1072, %vm1073
  %v1075 = vsel %vm1074, %v1067, %v1071
  %v1076 = vand.u32 2147483647, %v1051
  %vm1077 = vcmp.eq.f32.partialorder %v1076, 8.507059e+37
  %v1078 = vand.u32 %v1051, 2147483648
  %v1079 = vor.u32 1.1754944e-38, %v1078
  %v1080 = vsel %vm1077, %v1079, %v1075
  %v1081 = vmul.f32 1.0, %v1080
  %v1082 = vadd.f32 %v998, %v474
  %v1083 = vadd.f32 %v1000, %v474
  %v1084 = vmul.f32 %v1026, %v1082
  %v1085 = vmul.f32 %v1041, %v1083
  %v1086 = vadd.f32 %v790, %v1084
  %v1087 = vadd.f32 %v793, %v1085
  %v1088 = vtanh.pop %v1086
  %v1089 = vtanh.pop %v1087
  %v1090 = vsub.f32 1.0, %v1066
  %v1091 = vsub.f32 1.0, %v1081
  %v1092 = vmul.f32 %v1090, %v1088
  %v1093 = vmul.f32 %v1091, %v1089
  %v1094 = vmul.f32 %v1066, %v781
  %v1095 = vmul.f32 %v1081, %v782
  %v1096 = vadd.f32 %v1092, %v1094
  %v1097 = vadd.f32 %v1093, %v1095
  %v1098 = vpack.c.bf16 %v1096, %v1096
  %v1099 = vpack.c.bf16 %v1097, %v1097
  %s1100 = scalar_lea.vmem %s10, 8
  %1101 = vst [vmem:[%s1100] sm:$0xf] %v1098
  %1102 = vst [vmem:[%s1100 + $0x4] sm:$0xf] %v1099
  %s1103 = scalar_lea.vmem [#allocation3], 96
  %v1104 = vld [vmem:[%s1103] sm:$0xff]
  %v1105 = vld [vmem:[%s1103 + $0x8] sm:$0xff]
  %v1106 = vld [vmem:[%s1103 + $0x10] sm:$0xff]
  %v1107 = vld [vmem:[%s1103 + $0x18] sm:$0xff]
  %v1108 = vld [vmem:[%s1103 + $0x20] sm:$0xff]
  %v1109 = vld [vmem:[%s1103 + $0x28] sm:$0xff]
  %v1110 = vld [vmem:[%s2] sm:$0xff]
  %v1111 = vld [vmem:[%s2 + $0x8] sm:$0xf]
  %v1112 = vld [vmem:[%s2 + $0xc] sm:$0xff]
  %v1113 = vld [vmem:[%s2 + $0x14] sm:$0xf]
  %v1114 = vld [vmem:[%s2 + $0x18] sm:$0xff]
  %v1115 = vld [vmem:[%s2 + $0x20] sm:$0xf]
  %v1116 = vld [vmem:[%s2 + $0x24] sm:$0xff]
  %v1117 = vld [vmem:[%s2 + $0x2c] sm:$0xf]
  %v1118 = vld [vmem:[%s2 + $0x30] sm:$0xff]
  %v1119 = vld [vmem:[%s2 + $0x38] sm:$0xf]
  %v1120 = vld [vmem:[%s2 + $0x3c] sm:$0xff]
  %v1121 = vld [vmem:[%s2 + $0x44] sm:$0xf]
  %v1122 = vld [vmem:[%s2 + $0x48] sm:$0xff]
  %v1123 = vld [vmem:[%s2 + $0x50] sm:$0xf]
  %v1124 = vld [vmem:[%s2 + $0x54] sm:$0xff]
  %v1125 = vld [vmem:[%s2 + $0x5c] sm:$0xf]
  %v1126 = vld [vmem:[%s2 + $0x60] sm:$0xff]
  %v1127 = vld [vmem:[%s2 + $0x68] sm:$0xf]
  %v1128 = vld [vmem:[%s2 + $0x6c] sm:$0xff]
  %v1129 = vld [vmem:[%s2 + $0x74] sm:$0xf]
  %v1130 = vld [vmem:[%s2 + $0x78] sm:$0xff]
  %v1131 = vld [vmem:[%s2 + $0x80] sm:$0xf]
  %v1132 = vld [vmem:[%s2 + $0x84] sm:$0xff]
  %v1133 = vld [vmem:[%s2 + $0x8c] sm:$0xf]
  %v1134 = vld [vmem:[%s2 + $0x90] sm:$0xff]
  %v1135 = vld [vmem:[%s2 + $0x98] sm:$0xf]
  %v1136 = vld [vmem:[%s2 + $0x9c] sm:$0xff]
  %v1137 = vld [vmem:[%s2 + $0xa4] sm:$0xf]
  %v1138 = vld [vmem:[%s2 + $0xa8] sm:$0xff]
  %v1139 = vld [vmem:[%s2 + $0xb0] sm:$0xf]
  %v1140 = vld [vmem:[%s2 + $0xb4] sm:$0xff]
  %v1141 = vld [vmem:[%s2 + $0xbc] sm:$0xf]
  %v1144 = vunpack.c.l.b16 %v1098
  %v1145 = vunpack.c.l.b16 %v1099
  %v1146 = vpack.c.b16 %v1145, %v1144
  %v1180 = vunpack.c.l.b16 %v1110
  %v1181 = vunpack.c.h.b16 %v1110
  %v1182 = vunpack.c.l.b16 %v1111
  %v1183 = vunpack.c.l.b16 %v1112
  %v1184 = vunpack.c.h.b16 %v1112
  %v1185 = vunpack.c.l.b16 %v1113
  %v1186 = vunpack.c.l.b16 %v1114
  %v1187 = vunpack.c.h.b16 %v1114
  %v1188 = vunpack.c.l.b16 %v1115
  %v1189 = vunpack.c.l.b16 %v1116
  %v1190 = vunpack.c.h.b16 %v1116
  %v1191 = vunpack.c.l.b16 %v1117
  %v1192 = vunpack.c.l.b16 %v1118
  %v1193 = vunpack.c.h.b16 %v1118
  %v1194 = vunpack.c.l.b16 %v1119
  %v1195 = vunpack.c.l.b16 %v1120
  %v1196 = vunpack.c.h.b16 %v1120
  %v1197 = vunpack.c.l.b16 %v1121
  %v1198 = vunpack.c.l.b16 %v1122
  %v1199 = vunpack.c.h.b16 %v1122
  %v1200 = vunpack.c.l.b16 %v1123
  %v1201 = vunpack.c.l.b16 %v1124
  %v1202 = vunpack.c.h.b16 %v1124
  %v1203 = vunpack.c.l.b16 %v1125
  %v1204 = vunpack.c.l.b16 %v1126
  %v1205 = vunpack.c.h.b16 %v1126
  %v1206 = vunpack.c.l.b16 %v1127
  %v1207 = vunpack.c.l.b16 %v1128
  %v1208 = vunpack.c.h.b16 %v1128
  %v1209 = vunpack.c.l.b16 %v1129
  %v1210 = vunpack.c.l.b16 %v1130
  %v1211 = vunpack.c.h.b16 %v1130
  %v1212 = vunpack.c.l.b16 %v1131
  %v1213 = vunpack.c.l.b16 %v1132
  %v1214 = vunpack.c.h.b16 %v1132
  %v1215 = vunpack.c.l.b16 %v1133
  %v1216 = vunpack.c.l.b16 %v1134
  %v1217 = vunpack.c.h.b16 %v1134
  %v1218 = vunpack.c.l.b16 %v1135
  %v1219 = vunpack.c.l.b16 %v1136
  %v1220 = vunpack.c.h.b16 %v1136
  %v1221 = vunpack.c.l.b16 %v1137
  %v1222 = vunpack.c.l.b16 %v1138
  %v1223 = vunpack.c.h.b16 %v1138
  %v1224 = vunpack.c.l.b16 %v1139
  %v1225 = vunpack.c.l.b16 %v1140
  %v1226 = vunpack.c.h.b16 %v1140
  %v1227 = vunpack.c.l.b16 %v1141
  %v1228 = vpack.c.b16 %v1183, %v1180
  %v1229 = vpack.c.b16 %v1184, %v1181
  %v1230 = vpack.c.b16 %v1185, %v1182
  %v1231 = vpack.c.b16 %v1189, %v1186
  %v1232 = vpack.c.b16 %v1190, %v1187
  %v1233 = vpack.c.b16 %v1191, %v1188
  %v1234 = vpack.c.b16 %v1195, %v1192
  %v1235 = vpack.c.b16 %v1196, %v1193
  %v1236 = vpack.c.b16 %v1197, %v1194
  %v1237 = vpack.c.b16 %v1201, %v1198
  %v1238 = vpack.c.b16 %v1202, %v1199
  %v1239 = vpack.c.b16 %v1203, %v1200
  %v1240 = vpack.c.b16 %v1207, %v1204
  %v1241 = vpack.c.b16 %v1208, %v1205
  %v1242 = vpack.c.b16 %v1209, %v1206
  %v1243 = vpack.c.b16 %v1213, %v1210
  %v1244 = vpack.c.b16 %v1214, %v1211
  %v1245 = vpack.c.b16 %v1215, %v1212
  %v1246 = vpack.c.b16 %v1219, %v1216
  %v1247 = vpack.c.b16 %v1220, %v1217
  %v1248 = vpack.c.b16 %v1221, %v1218
  %v1249 = vpack.c.b16 %v1225, %v1222
  %v1250 = vpack.c.b16 %v1226, %v1223
  %v1251 = vpack.c.b16 %v1227, %v1224
  %1276 = vmatpush.bf16.msra.mxu0 %v1249
  %1277 = vmatpush.bf16.msra.mxu0 %v1246
  %1278 = vmatpush.bf16.msra.mxu0 %v1243
  %1279 = vmatpush.bf16.msra.mxu0 %v1240
  %1280 = vmatpush.bf16.msra.mxu0 %v1237
  %1281 = vmatpush.bf16.msra.mxu0 %v1234
  %1282 = vmatpush.bf16.msra.mxu0 %v1231
  %1283 = vmatpush.bf16.msra.mxu0 %v1228
  %1284 = vmatmul.bf16.gmra.mxu0 %v1146
  %v1285 = vpop.f32.mrf.mxu0
  %v1286 = vadd.f32 0.0, %v1285
  %v1287 = vpop.f32.mrf.mxu0
  %v1288 = vadd.f32 0.0, %v1287
  %1289 = vdwg.mxu0
  %1290 = vmatpush.bf16.msra.mxu0 %v1250
  %1291 = vmatpush.bf16.msra.mxu0 %v1247
  %1292 = vmatpush.bf16.msra.mxu0 %v1244
  %1293 = vmatpush.bf16.msra.mxu0 %v1241
  %1294 = vmatpush.bf16.msra.mxu0 %v1238
  %1295 = vmatpush.bf16.msra.mxu0 %v1235
  %1296 = vmatpush.bf16.msra.mxu0 %v1232
  %1297 = vmatpush.bf16.msra.mxu0 %v1229
  %1298 = vmatmul.bf16.gmra.mxu0 %v1146
  %v1299 = vpop.f32.mrf.mxu0
  %v1300 = vadd.f32 0.0, %v1299
  %v1301 = vpop.f32.mrf.mxu0
  %v1302 = vadd.f32 0.0, %v1301
  %1303 = vdwg.mxu0
  %1304 = vmatpush.bf16.msra.mxu0 %v1251
  %1305 = vmatpush.bf16.msra.mxu0 %v1248
  %1306 = vmatpush.bf16.msra.mxu0 %v1245
  %1307 = vmatpush.bf16.msra.mxu0 %v1242
  %1308 = vmatpush.bf16.msra.mxu0 %v1239
  %1309 = vmatpush.bf16.msra.mxu0 %v1236
  %1310 = vmatpush.bf16.msra.mxu0 %v1233
  %1311 = vmatpush.bf16.msra.mxu0 %v1230
  %1312 = vmatmul.bf16.gmra.mxu0 %v1146
  %v1313 = vpop.f32.mrf.mxu0
  %v1314 = vadd.f32 0.0, %v1313
  %v1315 = vpop.f32.mrf.mxu0
  %v1316 = vadd.f32 0.0, %v1315
  %1317 = vdwg.mxu0
  %v1318 = vadd.f32 %v1104, %v1286
  %v1319 = vadd.f32 %v1107, %v1288
  %v1320 = vxor.u32 %v1318, 2147483648
  %v1321 = vxor.u32 %v1319, 2147483648
  %v1322 = vmul.f32 %v1320, 1.442695
  %v1323 = vpow.pop %v1322
  %v1324 = vmul.f32 %v1321, 1.442695
  %v1325 = vpow.pop %v1324
  %v1326 = vadd.f32 %v1323, 1.0
  %v1327 = vadd.f32 %v1325, 1.0
  %v1328 = vrcp.pop %v1326
  %v1329 = vmul.f32 %v1326, %v1328
  %v1330 = vsub.f32 1.0, %v1329
  %v1331 = vmul.f32 %v1328, %v1330
  %v1332 = vadd.f32 %v1328, %v1331
  %vm1333 = vweird.f32 %v1326
  %vm1334 = vweird.f32 %v1328
  %vm1335 = vmor %vm1333, %vm1334
  %v1336 = vsel %vm1335, %v1328, %v1332
  %v1337 = vand.u32 2147483647, %v1326
  %vm1338 = vcmp.eq.f32.partialorder %v1337, 8.507059e+37
  %v1339 = vand.u32 %v1326, 2147483648
  %v1340 = vor.u32 1.1754944e-38, %v1339
  %v1341 = vsel %vm1338, %v1340, %v1336
  %v1342 = vmul.f32 1.0, %v1341
  %v1343 = vrcp.pop %v1327
  %v1344 = vmul.f32 %v1327, %v1343
  %v1345 = vsub.f32 1.0, %v1344
  %v1346 = vmul.f32 %v1343, %v1345
  %v1347 = vadd.f32 %v1343, %v1346
  %vm1348 = vweird.f32 %v1327
  %vm1349 = vweird.f32 %v1343
  %vm1350 = vmor %vm1348, %vm1349
  %v1351 = vsel %vm1350, %v1343, %v1347
  %v1352 = vand.u32 2147483647, %v1327
  %vm1353 = vcmp.eq.f32.partialorder %v1352, 8.507059e+37
  %v1354 = vand.u32 %v1327, 2147483648
  %v1355 = vor.u32 1.1754944e-38, %v1354
  %v1356 = vsel %vm1353, %v1355, %v1351
  %v1357 = vmul.f32 1.0, %v1356
  %v1358 = vadd.f32 %v1105, %v1300
  %v1359 = vadd.f32 %v1108, %v1302
  %v1360 = vxor.u32 %v1358, 2147483648
  %v1361 = vxor.u32 %v1359, 2147483648
  %v1362 = vmul.f32 %v1360, 1.442695
  %v1363 = vpow.pop %v1362
  %v1364 = vmul.f32 %v1361, 1.442695
  %v1365 = vpow.pop %v1364
  %v1366 = vadd.f32 %v1363, 1.0
  %v1367 = vadd.f32 %v1365, 1.0
  %v1368 = vrcp.pop %v1366
  %v1369 = vmul.f32 %v1366, %v1368
  %v1370 = vsub.f32 1.0, %v1369
  %v1371 = vmul.f32 %v1368, %v1370
  %v1372 = vadd.f32 %v1368, %v1371
  %vm1373 = vweird.f32 %v1366
  %vm1374 = vweird.f32 %v1368
  %vm1375 = vmor %vm1373, %vm1374
  %v1376 = vsel %vm1375, %v1368, %v1372
  %v1377 = vand.u32 2147483647, %v1366
  %vm1378 = vcmp.eq.f32.partialorder %v1377, 8.507059e+37
  %v1379 = vand.u32 %v1366, 2147483648
  %v1380 = vor.u32 1.1754944e-38, %v1379
  %v1381 = vsel %vm1378, %v1380, %v1376
  %v1382 = vmul.f32 1.0, %v1381
  %v1383 = vrcp.pop %v1367
  %v1384 = vmul.f32 %v1367, %v1383
  %v1385 = vsub.f32 1.0, %v1384
  %v1386 = vmul.f32 %v1383, %v1385
  %v1387 = vadd.f32 %v1383, %v1386
  %vm1388 = vweird.f32 %v1367
  %vm1389 = vweird.f32 %v1383
  %vm1390 = vmor %vm1388, %vm1389
  %v1391 = vsel %vm1390, %v1383, %v1387
  %v1392 = vand.u32 2147483647, %v1367
  %vm1393 = vcmp.eq.f32.partialorder %v1392, 8.507059e+37
  %v1394 = vand.u32 %v1367, 2147483648
  %v1395 = vor.u32 1.1754944e-38, %v1394
  %v1396 = vsel %vm1393, %v1395, %v1391
  %v1397 = vmul.f32 1.0, %v1396
  %v1398 = vadd.f32 %v1314, %v474
  %v1399 = vadd.f32 %v1316, %v474
  %v1400 = vmul.f32 %v1342, %v1398
  %v1401 = vmul.f32 %v1357, %v1399
  %v1402 = vadd.f32 %v1106, %v1400
  %v1403 = vadd.f32 %v1109, %v1401
  %v1404 = vtanh.pop %v1402
  %v1405 = vtanh.pop %v1403
  %v1406 = vsub.f32 1.0, %v1382
  %v1407 = vsub.f32 1.0, %v1397
  %v1408 = vmul.f32 %v1406, %v1404
  %v1409 = vmul.f32 %v1407, %v1405
  %v1410 = vmul.f32 %v1382, %v1096
  %v1411 = vmul.f32 %v1397, %v1097
  %v1412 = vadd.f32 %v1408, %v1410
  %v1413 = vadd.f32 %v1409, %v1411
  %v1414 = vpack.c.bf16 %v1412, %v1412
  %v1415 = vpack.c.bf16 %v1413, %v1413
  %s1416 = scalar_lea.vmem %s10, 16
  %1417 = vst [vmem:[%s1416] sm:$0xf] %v1414
  %1418 = vst [vmem:[%s1416 + $0x4] sm:$0xf] %v1415
  %s1419 = scalar_lea.vmem [#allocation3], 144
  %v1420 = vld [vmem:[%s1419] sm:$0xff]
  %v1421 = vld [vmem:[%s1419 + $0x8] sm:$0xff]
  %v1422 = vld [vmem:[%s1419 + $0x10] sm:$0xff]
  %v1423 = vld [vmem:[%s1419 + $0x18] sm:$0xff]
  %v1424 = vld [vmem:[%s1419 + $0x20] sm:$0xff]
  %v1425 = vld [vmem:[%s1419 + $0x28] sm:$0xff]
  %v1426 = vld [vmem:[%s2] sm:$0xff]
  %v1427 = vld [vmem:[%s2 + $0x8] sm:$0xf]
  %v1428 = vld [vmem:[%s2 + $0xc] sm:$0xff]
  %v1429 = vld [vmem:[%s2 + $0x14] sm:$0xf]
  %v1430 = vld [vmem:[%s2 + $0x18] sm:$0xff]
  %v1431 = vld [vmem:[%s2 + $0x20] sm:$0xf]
  %v1432 = vld [vmem:[%s2 + $0x24] sm:$0xff]
  %v1433 = vld [vmem:[%s2 + $0x2c] sm:$0xf]
  %v1434 = vld [vmem:[%s2 + $0x30] sm:$0xff]
  %v1435 = vld [vmem:[%s2 + $0x38] sm:$0xf]
  %v1436 = vld [vmem:[%s2 + $0x3c] sm:$0xff]
  %v1437 = vld [vmem:[%s2 + $0x44] sm:$0xf]
  %v1438 = vld [vmem:[%s2 + $0x48] sm:$0xff]
  %v1439 = vld [vmem:[%s2 + $0x50] sm:$0xf]
  %v1440 = vld [vmem:[%s2 + $0x54] sm:$0xff]
  %v1441 = vld [vmem:[%s2 + $0x5c] sm:$0xf]
  %v1442 = vld [vmem:[%s2 + $0x60] sm:$0xff]
  %v1443 = vld [vmem:[%s2 + $0x68] sm:$0xf]
  %v1444 = vld [vmem:[%s2 + $0x6c] sm:$0xff]
  %v1445 = vld [vmem:[%s2 + $0x74] sm:$0xf]
  %v1446 = vld [vmem:[%s2 + $0x78] sm:$0xff]
  %v1447 = vld [vmem:[%s2 + $0x80] sm:$0xf]
  %v1448 = vld [vmem:[%s2 + $0x84] sm:$0xff]
  %v1449 = vld [vmem:[%s2 + $0x8c] sm:$0xf]
  %v1450 = vld [vmem:[%s2 + $0x90] sm:$0xff]
  %v1451 = vld [vmem:[%s2 + $0x98] sm:$0xf]
  %v1452 = vld [vmem:[%s2 + $0x9c] sm:$0xff]
  %v1453 = vld [vmem:[%s2 + $0xa4] sm:$0xf]
  %v1454 = vld [vmem:[%s2 + $0xa8] sm:$0xff]
  %v1455 = vld [vmem:[%s2 + $0xb0] sm:$0xf]
  %v1456 = vld [vmem:[%s2 + $0xb4] sm:$0xff]
  %v1457 = vld [vmem:[%s2 + $0xbc] sm:$0xf]
  %v1460 = vunpack.c.l.b16 %v1414
  %v1461 = vunpack.c.l.b16 %v1415
  %v1462 = vpack.c.b16 %v1461, %v1460
  %v1496 = vunpack.c.l.b16 %v1426
  %v1497 = vunpack.c.h.b16 %v1426
  %v1498 = vunpack.c.l.b16 %v1427
  %v1499 = vunpack.c.l.b16 %v1428
  %v1500 = vunpack.c.h.b16 %v1428
  %v1501 = vunpack.c.l.b16 %v1429
  %v1502 = vunpack.c.l.b16 %v1430
  %v1503 = vunpack.c.h.b16 %v1430
  %v1504 = vunpack.c.l.b16 %v1431
  %v1505 = vunpack.c.l.b16 %v1432
  %v1506 = vunpack.c.h.b16 %v1432
  %v1507 = vunpack.c.l.b16 %v1433
  %v1508 = vunpack.c.l.b16 %v1434
  %v1509 = vunpack.c.h.b16 %v1434
  %v1510 = vunpack.c.l.b16 %v1435
  %v1511 = vunpack.c.l.b16 %v1436
  %v1512 = vunpack.c.h.b16 %v1436
  %v1513 = vunpack.c.l.b16 %v1437
  %v1514 = vunpack.c.l.b16 %v1438
  %v1515 = vunpack.c.h.b16 %v1438
  %v1516 = vunpack.c.l.b16 %v1439
  %v1517 = vunpack.c.l.b16 %v1440
  %v1518 = vunpack.c.h.b16 %v1440
  %v1519 = vunpack.c.l.b16 %v1441
  %v1520 = vunpack.c.l.b16 %v1442
  %v1521 = vunpack.c.h.b16 %v1442
  %v1522 = vunpack.c.l.b16 %v1443
  %v1523 = vunpack.c.l.b16 %v1444
  %v1524 = vunpack.c.h.b16 %v1444
  %v1525 = vunpack.c.l.b16 %v1445
  %v1526 = vunpack.c.l.b16 %v1446
  %v1527 = vunpack.c.h.b16 %v1446
  %v1528 = vunpack.c.l.b16 %v1447
  %v1529 = vunpack.c.l.b16 %v1448
  %v1530 = vunpack.c.h.b16 %v1448
  %v1531 = vunpack.c.l.b16 %v1449
  %v1532 = vunpack.c.l.b16 %v1450
  %v1533 = vunpack.c.h.b16 %v1450
  %v1534 = vunpack.c.l.b16 %v1451
  %v1535 = vunpack.c.l.b16 %v1452
  %v1536 = vunpack.c.h.b16 %v1452
  %v1537 = vunpack.c.l.b16 %v1453
  %v1538 = vunpack.c.l.b16 %v1454
  %v1539 = vunpack.c.h.b16 %v1454
  %v1540 = vunpack.c.l.b16 %v1455
  %v1541 = vunpack.c.l.b16 %v1456
  %v1542 = vunpack.c.h.b16 %v1456
  %v1543 = vunpack.c.l.b16 %v1457
  %v1544 = vpack.c.b16 %v1499, %v1496
  %v1545 = vpack.c.b16 %v1500, %v1497
  %v1546 = vpack.c.b16 %v1501, %v1498
  %v1547 = vpack.c.b16 %v1505, %v1502
  %v1548 = vpack.c.b16 %v1506, %v1503
  %v1549 = vpack.c.b16 %v1507, %v1504
  %v1550 = vpack.c.b16 %v1511, %v1508
  %v1551 = vpack.c.b16 %v1512, %v1509
  %v1552 = vpack.c.b16 %v1513, %v1510
  %v1553 = vpack.c.b16 %v1517, %v1514
  %v1554 = vpack.c.b16 %v1518, %v1515
  %v1555 = vpack.c.b16 %v1519, %v1516
  %v1556 = vpack.c.b16 %v1523, %v1520
  %v1557 = vpack.c.b16 %v1524, %v1521
  %v1558 = vpack.c.b16 %v1525, %v1522
  %v1559 = vpack.c.b16 %v1529, %v1526
  %v1560 = vpack.c.b16 %v1530, %v1527
  %v1561 = vpack.c.b16 %v1531, %v1528
  %v1562 = vpack.c.b16 %v1535, %v1532
  %v1563 = vpack.c.b16 %v1536, %v1533
  %v1564 = vpack.c.b16 %v1537, %v1534
  %v1565 = vpack.c.b16 %v1541, %v1538
  %v1566 = vpack.c.b16 %v1542, %v1539
  %v1567 = vpack.c.b16 %v1543, %v1540
  %1592 = vmatpush.bf16.msra.mxu0 %v1565
  %1593 = vmatpush.bf16.msra.mxu0 %v1562
  %1594 = vmatpush.bf16.msra.mxu0 %v1559
  %1595 = vmatpush.bf16.msra.mxu0 %v1556
  %1596 = vmatpush.bf16.msra.mxu0 %v1553
  %1597 = vmatpush.bf16.msra.mxu0 %v1550
  %1598 = vmatpush.bf16.msra.mxu0 %v1547
  %1599 = vmatpush.bf16.msra.mxu0 %v1544
  %1600 = vmatmul.bf16.gmra.mxu0 %v1462
  %v1601 = vpop.f32.mrf.mxu0
  %v1602 = vadd.f32 0.0, %v1601
  %v1603 = vpop.f32.mrf.mxu0
  %v1604 = vadd.f32 0.0, %v1603
  %1605 = vdwg.mxu0
  %1606 = vmatpush.bf16.msra.mxu0 %v1566
  %1607 = vmatpush.bf16.msra.mxu0 %v1563
  %1608 = vmatpush.bf16.msra.mxu0 %v1560
  %1609 = vmatpush.bf16.msra.mxu0 %v1557
  %1610 = vmatpush.bf16.msra.mxu0 %v1554
  %1611 = vmatpush.bf16.msra.mxu0 %v1551
  %1612 = vmatpush.bf16.msra.mxu0 %v1548
  %1613 = vmatpush.bf16.msra.mxu0 %v1545
  %1614 = vmatmul.bf16.gmra.mxu0 %v1462
  %v1615 = vpop.f32.mrf.mxu0
  %v1616 = vadd.f32 0.0, %v1615
  %v1617 = vpop.f32.mrf.mxu0
  %v1618 = vadd.f32 0.0, %v1617
  %1619 = vdwg.mxu0
  %1620 = vmatpush.bf16.msra.mxu0 %v1567
  %1621 = vmatpush.bf16.msra.mxu0 %v1564
  %1622 = vmatpush.bf16.msra.mxu0 %v1561
  %1623 = vmatpush.bf16.msra.mxu0 %v1558
  %1624 = vmatpush.bf16.msra.mxu0 %v1555
  %1625 = vmatpush.bf16.msra.mxu0 %v1552
  %1626 = vmatpush.bf16.msra.mxu0 %v1549
  %1627 = vmatpush.bf16.msra.mxu0 %v1546
  %1628 = vmatmul.bf16.gmra.mxu0 %v1462
  %v1629 = vpop.f32.mrf.mxu0
  %v1630 = vadd.f32 0.0, %v1629
  %v1631 = vpop.f32.mrf.mxu0
  %v1632 = vadd.f32 0.0, %v1631
  %1633 = vdwg.mxu0
  %v1634 = vadd.f32 %v1420, %v1602
  %v1635 = vadd.f32 %v1423, %v1604
  %v1636 = vxor.u32 %v1634, 2147483648
  %v1637 = vxor.u32 %v1635, 2147483648
  %v1638 = vmul.f32 %v1636, 1.442695
  %v1639 = vpow.pop %v1638
  %v1640 = vmul.f32 %v1637, 1.442695
  %v1641 = vpow.pop %v1640
  %v1642 = vadd.f32 %v1639, 1.0
  %v1643 = vadd.f32 %v1641, 1.0
  %v1644 = vrcp.pop %v1642
  %v1645 = vmul.f32 %v1642, %v1644
  %v1646 = vsub.f32 1.0, %v1645
  %v1647 = vmul.f32 %v1644, %v1646
  %v1648 = vadd.f32 %v1644, %v1647
  %vm1649 = vweird.f32 %v1642
  %vm1650 = vweird.f32 %v1644
  %vm1651 = vmor %vm1649, %vm1650
  %v1652 = vsel %vm1651, %v1644, %v1648
  %v1653 = vand.u32 2147483647, %v1642
  %vm1654 = vcmp.eq.f32.partialorder %v1653, 8.507059e+37
  %v1655 = vand.u32 %v1642, 2147483648
  %v1656 = vor.u32 1.1754944e-38, %v1655
  %v1657 = vsel %vm1654, %v1656, %v1652
  %v1658 = vmul.f32 1.0, %v1657
  %v1659 = vrcp.pop %v1643
  %v1660 = vmul.f32 %v1643, %v1659
  %v1661 = vsub.f32 1.0, %v1660
  %v1662 = vmul.f32 %v1659, %v1661
  %v1663 = vadd.f32 %v1659, %v1662
  %vm1664 = vweird.f32 %v1643
  %vm1665 = vweird.f32 %v1659
  %vm1666 = vmor %vm1664, %vm1665
  %v1667 = vsel %vm1666, %v1659, %v1663
  %v1668 = vand.u32 2147483647, %v1643
  %vm1669 = vcmp.eq.f32.partialorder %v1668, 8.507059e+37
  %v1670 = vand.u32 %v1643, 2147483648
  %v1671 = vor.u32 1.1754944e-38, %v1670
  %v1672 = vsel %vm1669, %v1671, %v1667
  %v1673 = vmul.f32 1.0, %v1672
  %v1674 = vadd.f32 %v1421, %v1616
  %v1675 = vadd.f32 %v1424, %v1618
  %v1676 = vxor.u32 %v1674, 2147483648
  %v1677 = vxor.u32 %v1675, 2147483648
  %v1678 = vmul.f32 %v1676, 1.442695
  %v1679 = vpow.pop %v1678
  %v1680 = vmul.f32 %v1677, 1.442695
  %v1681 = vpow.pop %v1680
  %v1682 = vadd.f32 %v1679, 1.0
  %v1683 = vadd.f32 %v1681, 1.0
  %v1684 = vrcp.pop %v1682
  %v1685 = vmul.f32 %v1682, %v1684
  %v1686 = vsub.f32 1.0, %v1685
  %v1687 = vmul.f32 %v1684, %v1686
  %v1688 = vadd.f32 %v1684, %v1687
  %vm1689 = vweird.f32 %v1682
  %vm1690 = vweird.f32 %v1684
  %vm1691 = vmor %vm1689, %vm1690
  %v1692 = vsel %vm1691, %v1684, %v1688
  %v1693 = vand.u32 2147483647, %v1682
  %vm1694 = vcmp.eq.f32.partialorder %v1693, 8.507059e+37
  %v1695 = vand.u32 %v1682, 2147483648
  %v1696 = vor.u32 1.1754944e-38, %v1695
  %v1697 = vsel %vm1694, %v1696, %v1692
  %v1698 = vmul.f32 1.0, %v1697
  %v1699 = vrcp.pop %v1683
  %v1700 = vmul.f32 %v1683, %v1699
  %v1701 = vsub.f32 1.0, %v1700
  %v1702 = vmul.f32 %v1699, %v1701
  %v1703 = vadd.f32 %v1699, %v1702
  %vm1704 = vweird.f32 %v1683
  %vm1705 = vweird.f32 %v1699
  %vm1706 = vmor %vm1704, %vm1705
  %v1707 = vsel %vm1706, %v1699, %v1703
  %v1708 = vand.u32 2147483647, %v1683
  %vm1709 = vcmp.eq.f32.partialorder %v1708, 8.507059e+37
  %v1710 = vand.u32 %v1683, 2147483648
  %v1711 = vor.u32 1.1754944e-38, %v1710
  %v1712 = vsel %vm1709, %v1711, %v1707
  %v1713 = vmul.f32 1.0, %v1712
  %v1714 = vadd.f32 %v1630, %v474
  %v1715 = vadd.f32 %v1632, %v474
  %v1716 = vmul.f32 %v1658, %v1714
  %v1717 = vmul.f32 %v1673, %v1715
  %v1718 = vadd.f32 %v1422, %v1716
  %v1719 = vadd.f32 %v1425, %v1717
  %v1720 = vtanh.pop %v1718
  %v1721 = vtanh.pop %v1719
  %v1722 = vsub.f32 1.0, %v1698
  %v1723 = vsub.f32 1.0, %v1713
  %v1724 = vmul.f32 %v1722, %v1720
  %v1725 = vmul.f32 %v1723, %v1721
  %v1726 = vmul.f32 %v1698, %v1412
  %v1727 = vmul.f32 %v1713, %v1413
  %v1728 = vadd.f32 %v1724, %v1726
  %v1729 = vadd.f32 %v1725, %v1727
  %v1730 = vpack.c.bf16 %v1728, %v1728
  %v1731 = vpack.c.bf16 %v1729, %v1729
  %s1732 = scalar_lea.vmem %s10, 24
  %1733 = vst [vmem:[%s1732] sm:$0xf] %v1730
  %1734 = vst [vmem:[%s1732 + $0x4] sm:$0xf] %v1731
  %s1735 = scalar_lea.vmem [#allocation3], 192
  %v1736 = vld [vmem:[%s1735] sm:$0xff]
  %v1737 = vld [vmem:[%s1735 + $0x8] sm:$0xff]
  %v1738 = vld [vmem:[%s1735 + $0x10] sm:$0xff]
  %v1739 = vld [vmem:[%s1735 + $0x18] sm:$0xff]
  %v1740 = vld [vmem:[%s1735 + $0x20] sm:$0xff]
  %v1741 = vld [vmem:[%s1735 + $0x28] sm:$0xff]
  %v1742 = vld [vmem:[%s2] sm:$0xff]
  %v1743 = vld [vmem:[%s2 + $0x8] sm:$0xf]
  %v1744 = vld [vmem:[%s2 + $0xc] sm:$0xff]
  %v1745 = vld [vmem:[%s2 + $0x14] sm:$0xf]
  %v1746 = vld [vmem:[%s2 + $0x18] sm:$0xff]
  %v1747 = vld [vmem:[%s2 + $0x20] sm:$0xf]
  %v1748 = vld [vmem:[%s2 + $0x24] sm:$0xff]
  %v1749 = vld [vmem:[%s2 + $0x2c] sm:$0xf]
  %v1750 = vld [vmem:[%s2 + $0x30] sm:$0xff]
  %v1751 = vld [vmem:[%s2 + $0x38] sm:$0xf]
  %v1752 = vld [vmem:[%s2 + $0x3c] sm:$0xff]
  %v1753 = vld [vmem:[%s2 + $0x44] sm:$0xf]
  %v1754 = vld [vmem:[%s2 + $0x48] sm:$0xff]
  %v1755 = vld [vmem:[%s2 + $0x50] sm:$0xf]
  %v1756 = vld [vmem:[%s2 + $0x54] sm:$0xff]
  %v1757 = vld [vmem:[%s2 + $0x5c] sm:$0xf]
  %v1758 = vld [vmem:[%s2 + $0x60] sm:$0xff]
  %v1759 = vld [vmem:[%s2 + $0x68] sm:$0xf]
  %v1760 = vld [vmem:[%s2 + $0x6c] sm:$0xff]
  %v1761 = vld [vmem:[%s2 + $0x74] sm:$0xf]
  %v1762 = vld [vmem:[%s2 + $0x78] sm:$0xff]
  %v1763 = vld [vmem:[%s2 + $0x80] sm:$0xf]
  %v1764 = vld [vmem:[%s2 + $0x84] sm:$0xff]
  %v1765 = vld [vmem:[%s2 + $0x8c] sm:$0xf]
  %v1766 = vld [vmem:[%s2 + $0x90] sm:$0xff]
  %v1767 = vld [vmem:[%s2 + $0x98] sm:$0xf]
  %v1768 = vld [vmem:[%s2 + $0x9c] sm:$0xff]
  %v1769 = vld [vmem:[%s2 + $0xa4] sm:$0xf]
  %v1770 = vld [vmem:[%s2 + $0xa8] sm:$0xff]
  %v1771 = vld [vmem:[%s2 + $0xb0] sm:$0xf]
  %v1772 = vld [vmem:[%s2 + $0xb4] sm:$0xff]
  %v1773 = vld [vmem:[%s2 + $0xbc] sm:$0xf]
  %v1776 = vunpack.c.l.b16 %v1730
  %v1777 = vunpack.c.l.b16 %v1731
  %v1778 = vpack.c.b16 %v1777, %v1776
  %v1812 = vunpack.c.l.b16 %v1742
  %v1813 = vunpack.c.h.b16 %v1742
  %v1814 = vunpack.c.l.b16 %v1743
  %v1815 = vunpack.c.l.b16 %v1744
  %v1816 = vunpack.c.h.b16 %v1744
  %v1817 = vunpack.c.l.b16 %v1745
  %v1818 = vunpack.c.l.b16 %v1746
  %v1819 = vunpack.c.h.b16 %v1746
  %v1820 = vunpack.c.l.b16 %v1747
  %v1821 = vunpack.c.l.b16 %v1748
  %v1822 = vunpack.c.h.b16 %v1748
  %v1823 = vunpack.c.l.b16 %v1749
  %v1824 = vunpack.c.l.b16 %v1750
  %v1825 = vunpack.c.h.b16 %v1750
  %v1826 = vunpack.c.l.b16 %v1751
  %v1827 = vunpack.c.l.b16 %v1752
  %v1828 = vunpack.c.h.b16 %v1752
  %v1829 = vunpack.c.l.b16 %v1753
  %v1830 = vunpack.c.l.b16 %v1754
  %v1831 = vunpack.c.h.b16 %v1754
  %v1832 = vunpack.c.l.b16 %v1755
  %v1833 = vunpack.c.l.b16 %v1756
  %v1834 = vunpack.c.h.b16 %v1756
  %v1835 = vunpack.c.l.b16 %v1757
  %v1836 = vunpack.c.l.b16 %v1758
  %v1837 = vunpack.c.h.b16 %v1758
  %v1838 = vunpack.c.l.b16 %v1759
  %v1839 = vunpack.c.l.b16 %v1760
  %v1840 = vunpack.c.h.b16 %v1760
  %v1841 = vunpack.c.l.b16 %v1761
  %v1842 = vunpack.c.l.b16 %v1762
  %v1843 = vunpack.c.h.b16 %v1762
  %v1844 = vunpack.c.l.b16 %v1763
  %v1845 = vunpack.c.l.b16 %v1764
  %v1846 = vunpack.c.h.b16 %v1764
  %v1847 = vunpack.c.l.b16 %v1765
  %v1848 = vunpack.c.l.b16 %v1766
  %v1849 = vunpack.c.h.b16 %v1766
  %v1850 = vunpack.c.l.b16 %v1767
  %v1851 = vunpack.c.l.b16 %v1768
  %v1852 = vunpack.c.h.b16 %v1768
  %v1853 = vunpack.c.l.b16 %v1769
  %v1854 = vunpack.c.l.b16 %v1770
  %v1855 = vunpack.c.h.b16 %v1770
  %v1856 = vunpack.c.l.b16 %v1771
  %v1857 = vunpack.c.l.b16 %v1772
  %v1858 = vunpack.c.h.b16 %v1772
  %v1859 = vunpack.c.l.b16 %v1773
  %v1860 = vpack.c.b16 %v1815, %v1812
  %v1861 = vpack.c.b16 %v1816, %v1813
  %v1862 = vpack.c.b16 %v1817, %v1814
  %v1863 = vpack.c.b16 %v1821, %v1818
  %v1864 = vpack.c.b16 %v1822, %v1819
  %v1865 = vpack.c.b16 %v1823, %v1820
  %v1866 = vpack.c.b16 %v1827, %v1824
  %v1867 = vpack.c.b16 %v1828, %v1825
  %v1868 = vpack.c.b16 %v1829, %v1826
  %v1869 = vpack.c.b16 %v1833, %v1830
  %v1870 = vpack.c.b16 %v1834, %v1831
  %v1871 = vpack.c.b16 %v1835, %v1832
  %v1872 = vpack.c.b16 %v1839, %v1836
  %v1873 = vpack.c.b16 %v1840, %v1837
  %v1874 = vpack.c.b16 %v1841, %v1838
  %v1875 = vpack.c.b16 %v1845, %v1842
  %v1876 = vpack.c.b16 %v1846, %v1843
  %v1877 = vpack.c.b16 %v1847, %v1844
  %v1878 = vpack.c.b16 %v1851, %v1848
  %v1879 = vpack.c.b16 %v1852, %v1849
  %v1880 = vpack.c.b16 %v1853, %v1850
  %v1881 = vpack.c.b16 %v1857, %v1854
  %v1882 = vpack.c.b16 %v1858, %v1855
  %v1883 = vpack.c.b16 %v1859, %v1856
  %1908 = vmatpush.bf16.msra.mxu0 %v1881
  %1909 = vmatpush.bf16.msra.mxu0 %v1878
  %1910 = vmatpush.bf16.msra.mxu0 %v1875
  %1911 = vmatpush.bf16.msra.mxu0 %v1872
  %1912 = vmatpush.bf16.msra.mxu0 %v1869
  %1913 = vmatpush.bf16.msra.mxu0 %v1866
  %1914 = vmatpush.bf16.msra.mxu0 %v1863
  %1915 = vmatpush.bf16.msra.mxu0 %v1860
  %1916 = vmatmul.bf16.gmra.mxu0 %v1778
  %v1917 = vpop.f32.mrf.mxu0
  %v1918 = vadd.f32 0.0, %v1917
  %v1919 = vpop.f32.mrf.mxu0
  %v1920 = vadd.f32 0.0, %v1919
  %1921 = vdwg.mxu0
  %1922 = vmatpush.bf16.msra.mxu0 %v1882
  %1923 = vmatpush.bf16.msra.mxu0 %v1879
  %1924 = vmatpush.bf16.msra.mxu0 %v1876
  %1925 = vmatpush.bf16.msra.mxu0 %v1873
  %1926 = vmatpush.bf16.msra.mxu0 %v1870
  %1927 = vmatpush.bf16.msra.mxu0 %v1867
  %1928 = vmatpush.bf16.msra.mxu0 %v1864
  %1929 = vmatpush.bf16.msra.mxu0 %v1861
  %1930 = vmatmul.bf16.gmra.mxu0 %v1778
  %v1931 = vpop.f32.mrf.mxu0
  %v1932 = vadd.f32 0.0, %v1931
  %v1933 = vpop.f32.mrf.mxu0
  %v1934 = vadd.f32 0.0, %v1933
  %1935 = vdwg.mxu0
  %1936 = vmatpush.bf16.msra.mxu0 %v1883
  %1937 = vmatpush.bf16.msra.mxu0 %v1880
  %1938 = vmatpush.bf16.msra.mxu0 %v1877
  %1939 = vmatpush.bf16.msra.mxu0 %v1874
  %1940 = vmatpush.bf16.msra.mxu0 %v1871
  %1941 = vmatpush.bf16.msra.mxu0 %v1868
  %1942 = vmatpush.bf16.msra.mxu0 %v1865
  %1943 = vmatpush.bf16.msra.mxu0 %v1862
  %1944 = vmatmul.bf16.gmra.mxu0 %v1778
  %v1945 = vpop.f32.mrf.mxu0
  %v1946 = vadd.f32 0.0, %v1945
  %v1947 = vpop.f32.mrf.mxu0
  %v1948 = vadd.f32 0.0, %v1947
  %1949 = vdwg.mxu0
  %v1950 = vadd.f32 %v1736, %v1918
  %v1951 = vadd.f32 %v1739, %v1920
  %v1952 = vxor.u32 %v1950, 2147483648
  %v1953 = vxor.u32 %v1951, 2147483648
  %v1954 = vmul.f32 %v1952, 1.442695
  %v1955 = vpow.pop %v1954
  %v1956 = vmul.f32 %v1953, 1.442695
  %v1957 = vpow.pop %v1956
  %v1958 = vadd.f32 %v1955, 1.0
  %v1959 = vadd.f32 %v1957, 1.0
  %v1960 = vrcp.pop %v1958
  %v1961 = vmul.f32 %v1958, %v1960
  %v1962 = vsub.f32 1.0, %v1961
  %v1963 = vmul.f32 %v1960, %v1962
  %v1964 = vadd.f32 %v1960, %v1963
  %vm1965 = vweird.f32 %v1958
  %vm1966 = vweird.f32 %v1960
  %vm1967 = vmor %vm1965, %vm1966
  %v1968 = vsel %vm1967, %v1960, %v1964
  %v1969 = vand.u32 2147483647, %v1958
  %vm1970 = vcmp.eq.f32.partialorder %v1969, 8.507059e+37
  %v1971 = vand.u32 %v1958, 2147483648
  %v1972 = vor.u32 1.1754944e-38, %v1971
  %v1973 = vsel %vm1970, %v1972, %v1968
  %v1974 = vmul.f32 1.0, %v1973
  %v1975 = vrcp.pop %v1959
  %v1976 = vmul.f32 %v1959, %v1975
  %v1977 = vsub.f32 1.0, %v1976
  %v1978 = vmul.f32 %v1975, %v1977
  %v1979 = vadd.f32 %v1975, %v1978
  %vm1980 = vweird.f32 %v1959
  %vm1981 = vweird.f32 %v1975
  %vm1982 = vmor %vm1980, %vm1981
  %v1983 = vsel %vm1982, %v1975, %v1979
  %v1984 = vand.u32 2147483647, %v1959
  %vm1985 = vcmp.eq.f32.partialorder %v1984, 8.507059e+37
  %v1986 = vand.u32 %v1959, 2147483648
  %v1987 = vor.u32 1.1754944e-38, %v1986
  %v1988 = vsel %vm1985, %v1987, %v1983
  %v1989 = vmul.f32 1.0, %v1988
  %v1990 = vadd.f32 %v1737, %v1932
  %v1991 = vadd.f32 %v1740, %v1934
  %v1992 = vxor.u32 %v1990, 2147483648
  %v1993 = vxor.u32 %v1991, 2147483648
  %v1994 = vmul.f32 %v1992, 1.442695
  %v1995 = vpow.pop %v1994
  %v1996 = vmul.f32 %v1993, 1.442695
  %v1997 = vpow.pop %v1996
  %v1998 = vadd.f32 %v1995, 1.0
  %v1999 = vadd.f32 %v1997, 1.0
  %v2000 = vrcp.pop %v1998
  %v2001 = vmul.f32 %v1998, %v2000
  %v2002 = vsub.f32 1.0, %v2001
  %v2003 = vmul.f32 %v2000, %v2002
  %v2004 = vadd.f32 %v2000, %v2003
  %vm2005 = vweird.f32 %v1998
  %vm2006 = vweird.f32 %v2000
  %vm2007 = vmor %vm2005, %vm2006
  %v2008 = vsel %vm2007, %v2000, %v2004
  %v2009 = vand.u32 2147483647, %v1998
  %vm2010 = vcmp.eq.f32.partialorder %v2009, 8.507059e+37
  %v2011 = vand.u32 %v1998, 2147483648
  %v2012 = vor.u32 1.1754944e-38, %v2011
  %v2013 = vsel %vm2010, %v2012, %v2008
  %v2014 = vmul.f32 1.0, %v2013
  %v2015 = vrcp.pop %v1999
  %v2016 = vmul.f32 %v1999, %v2015
  %v2017 = vsub.f32 1.0, %v2016
  %v2018 = vmul.f32 %v2015, %v2017
  %v2019 = vadd.f32 %v2015, %v2018
  %vm2020 = vweird.f32 %v1999
  %vm2021 = vweird.f32 %v2015
  %vm2022 = vmor %vm2020, %vm2021
  %v2023 = vsel %vm2022, %v2015, %v2019
  %v2024 = vand.u32 2147483647, %v1999
  %vm2025 = vcmp.eq.f32.partialorder %v2024, 8.507059e+37
  %v2026 = vand.u32 %v1999, 2147483648
  %v2027 = vor.u32 1.1754944e-38, %v2026
  %v2028 = vsel %vm2025, %v2027, %v2023
  %v2029 = vmul.f32 1.0, %v2028
  %v2030 = vadd.f32 %v1946, %v474
  %v2031 = vadd.f32 %v1948, %v474
  %v2032 = vmul.f32 %v1974, %v2030
  %v2033 = vmul.f32 %v1989, %v2031
  %v2034 = vadd.f32 %v1738, %v2032
  %v2035 = vadd.f32 %v1741, %v2033
  %v2036 = vtanh.pop %v2034
  %v2037 = vtanh.pop %v2035
  %v2038 = vsub.f32 1.0, %v2014
  %v2039 = vsub.f32 1.0, %v2029
  %v2040 = vmul.f32 %v2038, %v2036
  %v2041 = vmul.f32 %v2039, %v2037
  %v2042 = vmul.f32 %v2014, %v1728
  %v2043 = vmul.f32 %v2029, %v1729
  %v2044 = vadd.f32 %v2040, %v2042
  %v2045 = vadd.f32 %v2041, %v2043
  %v2046 = vpack.c.bf16 %v2044, %v2044
  %v2047 = vpack.c.bf16 %v2045, %v2045
  %s2048 = scalar_lea.vmem %s10, 32
  %2049 = vst [vmem:[%s2048] sm:$0xf] %v2046
  %2050 = vst [vmem:[%s2048 + $0x4] sm:$0xf] %v2047
  %s2051 = scalar_lea.vmem [#allocation3], 240
  %v2052 = vld [vmem:[%s2051] sm:$0xff]
  %v2053 = vld [vmem:[%s2051 + $0x8] sm:$0xff]
  %v2054 = vld [vmem:[%s2051 + $0x10] sm:$0xff]
  %v2055 = vld [vmem:[%s2051 + $0x18] sm:$0xff]
  %v2056 = vld [vmem:[%s2051 + $0x20] sm:$0xff]
  %v2057 = vld [vmem:[%s2051 + $0x28] sm:$0xff]
  %v2058 = vld [vmem:[%s2] sm:$0xff]
  %v2059 = vld [vmem:[%s2 + $0x8] sm:$0xf]
  %v2060 = vld [vmem:[%s2 + $0xc] sm:$0xff]
  %v2061 = vld [vmem:[%s2 + $0x14] sm:$0xf]
  %v2062 = vld [vmem:[%s2 + $0x18] sm:$0xff]
  %v2063 = vld [vmem:[%s2 + $0x20] sm:$0xf]
  %v2064 = vld [vmem:[%s2 + $0x24] sm:$0xff]
  %v2065 = vld [vmem:[%s2 + $0x2c] sm:$0xf]
  %v2066 = vld [vmem:[%s2 + $0x30] sm:$0xff]
  %v2067 = vld [vmem:[%s2 + $0x38] sm:$0xf]
  %v2068 = vld [vmem:[%s2 + $0x3c] sm:$0xff]
  %v2069 = vld [vmem:[%s2 + $0x44] sm:$0xf]
  %v2070 = vld [vmem:[%s2 + $0x48] sm:$0xff]
  %v2071 = vld [vmem:[%s2 + $0x50] sm:$0xf]
  %v2072 = vld [vmem:[%s2 + $0x54] sm:$0xff]
  %v2073 = vld [vmem:[%s2 + $0x5c] sm:$0xf]
  %v2074 = vld [vmem:[%s2 + $0x60] sm:$0xff]
  %v2075 = vld [vmem:[%s2 + $0x68] sm:$0xf]
  %v2076 = vld [vmem:[%s2 + $0x6c] sm:$0xff]
  %v2077 = vld [vmem:[%s2 + $0x74] sm:$0xf]
  %v2078 = vld [vmem:[%s2 + $0x78] sm:$0xff]
  %v2079 = vld [vmem:[%s2 + $0x80] sm:$0xf]
  %v2080 = vld [vmem:[%s2 + $0x84] sm:$0xff]
  %v2081 = vld [vmem:[%s2 + $0x8c] sm:$0xf]
  %v2082 = vld [vmem:[%s2 + $0x90] sm:$0xff]
  %v2083 = vld [vmem:[%s2 + $0x98] sm:$0xf]
  %v2084 = vld [vmem:[%s2 + $0x9c] sm:$0xff]
  %v2085 = vld [vmem:[%s2 + $0xa4] sm:$0xf]
  %v2086 = vld [vmem:[%s2 + $0xa8] sm:$0xff]
  %v2087 = vld [vmem:[%s2 + $0xb0] sm:$0xf]
  %v2088 = vld [vmem:[%s2 + $0xb4] sm:$0xff]
  %v2089 = vld [vmem:[%s2 + $0xbc] sm:$0xf]
  %v2092 = vunpack.c.l.b16 %v2046
  %v2093 = vunpack.c.l.b16 %v2047
  %v2094 = vpack.c.b16 %v2093, %v2092
  %v2128 = vunpack.c.l.b16 %v2058
  %v2129 = vunpack.c.h.b16 %v2058
  %v2130 = vunpack.c.l.b16 %v2059
  %v2131 = vunpack.c.l.b16 %v2060
  %v2132 = vunpack.c.h.b16 %v2060
  %v2133 = vunpack.c.l.b16 %v2061
  %v2134 = vunpack.c.l.b16 %v2062
  %v2135 = vunpack.c.h.b16 %v2062
  %v2136 = vunpack.c.l.b16 %v2063
  %v2137 = vunpack.c.l.b16 %v2064
  %v2138 = vunpack.c.h.b16 %v2064
  %v2139 = vunpack.c.l.b16 %v2065
  %v2140 = vunpack.c.l.b16 %v2066
  %v2141 = vunpack.c.h.b16 %v2066
  %v2142 = vunpack.c.l.b16 %v2067
  %v2143 = vunpack.c.l.b16 %v2068
  %v2144 = vunpack.c.h.b16 %v2068
  %v2145 = vunpack.c.l.b16 %v2069
  %v2146 = vunpack.c.l.b16 %v2070
  %v2147 = vunpack.c.h.b16 %v2070
  %v2148 = vunpack.c.l.b16 %v2071
  %v2149 = vunpack.c.l.b16 %v2072
  %v2150 = vunpack.c.h.b16 %v2072
  %v2151 = vunpack.c.l.b16 %v2073
  %v2152 = vunpack.c.l.b16 %v2074
  %v2153 = vunpack.c.h.b16 %v2074
  %v2154 = vunpack.c.l.b16 %v2075
  %v2155 = vunpack.c.l.b16 %v2076
  %v2156 = vunpack.c.h.b16 %v2076
  %v2157 = vunpack.c.l.b16 %v2077
  %v2158 = vunpack.c.l.b16 %v2078
  %v2159 = vunpack.c.h.b16 %v2078
  %v2160 = vunpack.c.l.b16 %v2079
  %v2161 = vunpack.c.l.b16 %v2080
  %v2162 = vunpack.c.h.b16 %v2080
  %v2163 = vunpack.c.l.b16 %v2081
  %v2164 = vunpack.c.l.b16 %v2082
  %v2165 = vunpack.c.h.b16 %v2082
  %v2166 = vunpack.c.l.b16 %v2083
  %v2167 = vunpack.c.l.b16 %v2084
  %v2168 = vunpack.c.h.b16 %v2084
  %v2169 = vunpack.c.l.b16 %v2085
  %v2170 = vunpack.c.l.b16 %v2086
  %v2171 = vunpack.c.h.b16 %v2086
  %v2172 = vunpack.c.l.b16 %v2087
  %v2173 = vunpack.c.l.b16 %v2088
  %v2174 = vunpack.c.h.b16 %v2088
  %v2175 = vunpack.c.l.b16 %v2089
  %v2176 = vpack.c.b16 %v2131, %v2128
  %v2177 = vpack.c.b16 %v2132, %v2129
  %v2178 = vpack.c.b16 %v2133, %v2130
  %v2179 = vpack.c.b16 %v2137, %v2134
  %v2180 = vpack.c.b16 %v2138, %v2135
  %v2181 = vpack.c.b16 %v2139, %v2136
  %v2182 = vpack.c.b16 %v2143, %v2140
  %v2183 = vpack.c.b16 %v2144, %v2141
  %v2184 = vpack.c.b16 %v2145, %v2142
  %v2185 = vpack.c.b16 %v2149, %v2146
  %v2186 = vpack.c.b16 %v2150, %v2147
  %v2187 = vpack.c.b16 %v2151, %v2148
  %v2188 = vpack.c.b16 %v2155, %v2152
  %v2189 = vpack.c.b16 %v2156, %v2153
  %v2190 = vpack.c.b16 %v2157, %v2154
  %v2191 = vpack.c.b16 %v2161, %v2158
  %v2192 = vpack.c.b16 %v2162, %v2159
  %v2193 = vpack.c.b16 %v2163, %v2160
  %v2194 = vpack.c.b16 %v2167, %v2164
  %v2195 = vpack.c.b16 %v2168, %v2165
  %v2196 = vpack.c.b16 %v2169, %v2166
  %v2197 = vpack.c.b16 %v2173, %v2170
  %v2198 = vpack.c.b16 %v2174, %v2171
  %v2199 = vpack.c.b16 %v2175, %v2172
  %2224 = vmatpush.bf16.msra.mxu0 %v2197
  %2225 = vmatpush.bf16.msra.mxu0 %v2194
  %2226 = vmatpush.bf16.msra.mxu0 %v2191
  %2227 = vmatpush.bf16.msra.mxu0 %v2188
  %2228 = vmatpush.bf16.msra.mxu0 %v2185
  %2229 = vmatpush.bf16.msra.mxu0 %v2182
  %2230 = vmatpush.bf16.msra.mxu0 %v2179
  %2231 = vmatpush.bf16.msra.mxu0 %v2176
  %2232 = vmatmul.bf16.gmra.mxu0 %v2094
  %v2233 = vpop.f32.mrf.mxu0
  %v2234 = vadd.f32 0.0, %v2233
  %v2235 = vpop.f32.mrf.mxu0
  %v2236 = vadd.f32 0.0, %v2235
  %2237 = vdwg.mxu0
  %2238 = vmatpush.bf16.msra.mxu0 %v2198
  %2239 = vmatpush.bf16.msra.mxu0 %v2195
  %2240 = vmatpush.bf16.msra.mxu0 %v2192
  %2241 = vmatpush.bf16.msra.mxu0 %v2189
  %2242 = vmatpush.bf16.msra.mxu0 %v2186
  %2243 = vmatpush.bf16.msra.mxu0 %v2183
  %2244 = vmatpush.bf16.msra.mxu0 %v2180
  %2245 = vmatpush.bf16.msra.mxu0 %v2177
  %2246 = vmatmul.bf16.gmra.mxu0 %v2094
  %v2247 = vpop.f32.mrf.mxu0
  %v2248 = vadd.f32 0.0, %v2247
  %v2249 = vpop.f32.mrf.mxu0
  %v2250 = vadd.f32 0.0, %v2249
  %2251 = vdwg.mxu0
  %2252 = vmatpush.bf16.msra.mxu0 %v2199
  %2253 = vmatpush.bf16.msra.mxu0 %v2196
  %2254 = vmatpush.bf16.msra.mxu0 %v2193
  %2255 = vmatpush.bf16.msra.mxu0 %v2190
  %2256 = vmatpush.bf16.msra.mxu0 %v2187
  %2257 = vmatpush.bf16.msra.mxu0 %v2184
  %2258 = vmatpush.bf16.msra.mxu0 %v2181
  %2259 = vmatpush.bf16.msra.mxu0 %v2178
  %2260 = vmatmul.bf16.gmra.mxu0 %v2094
  %v2261 = vpop.f32.mrf.mxu0
  %v2262 = vadd.f32 0.0, %v2261
  %v2263 = vpop.f32.mrf.mxu0
  %v2264 = vadd.f32 0.0, %v2263
  %2265 = vdwg.mxu0
  %v2266 = vadd.f32 %v2052, %v2234
  %v2267 = vadd.f32 %v2055, %v2236
  %v2268 = vxor.u32 %v2266, 2147483648
  %v2269 = vxor.u32 %v2267, 2147483648
  %v2270 = vmul.f32 %v2268, 1.442695
  %v2271 = vpow.pop %v2270
  %v2272 = vmul.f32 %v2269, 1.442695
  %v2273 = vpow.pop %v2272
  %v2274 = vadd.f32 %v2271, 1.0
  %v2275 = vadd.f32 %v2273, 1.0
  %v2276 = vrcp.pop %v2274
  %v2277 = vmul.f32 %v2274, %v2276
  %v2278 = vsub.f32 1.0, %v2277
  %v2279 = vmul.f32 %v2276, %v2278
  %v2280 = vadd.f32 %v2276, %v2279
  %vm2281 = vweird.f32 %v2274
  %vm2282 = vweird.f32 %v2276
  %vm2283 = vmor %vm2281, %vm2282
  %v2284 = vsel %vm2283, %v2276, %v2280
  %v2285 = vand.u32 2147483647, %v2274
  %vm2286 = vcmp.eq.f32.partialorder %v2285, 8.507059e+37
  %v2287 = vand.u32 %v2274, 2147483648
  %v2288 = vor.u32 1.1754944e-38, %v2287
  %v2289 = vsel %vm2286, %v2288, %v2284
  %v2290 = vmul.f32 1.0, %v2289
  %v2291 = vrcp.pop %v2275
  %v2292 = vmul.f32 %v2275, %v2291
  %v2293 = vsub.f32 1.0, %v2292
  %v2294 = vmul.f32 %v2291, %v2293
  %v2295 = vadd.f32 %v2291, %v2294
  %vm2296 = vweird.f32 %v2275
  %vm2297 = vweird.f32 %v2291
  %vm2298 = vmor %vm2296, %vm2297
  %v2299 = vsel %vm2298, %v2291, %v2295
  %v2300 = vand.u32 2147483647, %v2275
  %vm2301 = vcmp.eq.f32.partialorder %v2300, 8.507059e+37
  %v2302 = vand.u32 %v2275, 2147483648
  %v2303 = vor.u32 1.1754944e-38, %v2302
  %v2304 = vsel %vm2301, %v2303, %v2299
  %v2305 = vmul.f32 1.0, %v2304
  %v2306 = vadd.f32 %v2053, %v2248
  %v2307 = vadd.f32 %v2056, %v2250
  %v2308 = vxor.u32 %v2306, 2147483648
  %v2309 = vxor.u32 %v2307, 2147483648
  %v2310 = vmul.f32 %v2308, 1.442695
  %v2311 = vpow.pop %v2310
  %v2312 = vmul.f32 %v2309, 1.442695
  %v2313 = vpow.pop %v2312
  %v2314 = vadd.f32 %v2311, 1.0
  %v2315 = vadd.f32 %v2313, 1.0
  %v2316 = vrcp.pop %v2314
  %v2317 = vmul.f32 %v2314, %v2316
  %v2318 = vsub.f32 1.0, %v2317
  %v2319 = vmul.f32 %v2316, %v2318
  %v2320 = vadd.f32 %v2316, %v2319
  %vm2321 = vweird.f32 %v2314
  %vm2322 = vweird.f32 %v2316
  %vm2323 = vmor %vm2321, %vm2322
  %v2324 = vsel %vm2323, %v2316, %v2320
  %v2325 = vand.u32 2147483647, %v2314
  %vm2326 = vcmp.eq.f32.partialorder %v2325, 8.507059e+37
  %v2327 = vand.u32 %v2314, 2147483648
  %v2328 = vor.u32 1.1754944e-38, %v2327
  %v2329 = vsel %vm2326, %v2328, %v2324
  %v2330 = vmul.f32 1.0, %v2329
  %v2331 = vrcp.pop %v2315
  %v2332 = vmul.f32 %v2315, %v2331
  %v2333 = vsub.f32 1.0, %v2332
  %v2334 = vmul.f32 %v2331, %v2333
  %v2335 = vadd.f32 %v2331, %v2334
  %vm2336 = vweird.f32 %v2315
  %vm2337 = vweird.f32 %v2331
  %vm2338 = vmor %vm2336, %vm2337
  %v2339 = vsel %vm2338, %v2331, %v2335
  %v2340 = vand.u32 2147483647, %v2315
  %vm2341 = vcmp.eq.f32.partialorder %v2340, 8.507059e+37
  %v2342 = vand.u32 %v2315, 2147483648
  %v2343 = vor.u32 1.1754944e-38, %v2342
  %v2344 = vsel %vm2341, %v2343, %v2339
  %v2345 = vmul.f32 1.0, %v2344
  %v2346 = vadd.f32 %v2262, %v474
  %v2347 = vadd.f32 %v2264, %v474
  %v2348 = vmul.f32 %v2290, %v2346
  %v2349 = vmul.f32 %v2305, %v2347
  %v2350 = vadd.f32 %v2054, %v2348
  %v2351 = vadd.f32 %v2057, %v2349
  %v2352 = vtanh.pop %v2350
  %v2353 = vtanh.pop %v2351
  %v2354 = vsub.f32 1.0, %v2330
  %v2355 = vsub.f32 1.0, %v2345
  %v2356 = vmul.f32 %v2354, %v2352
  %v2357 = vmul.f32 %v2355, %v2353
  %v2358 = vmul.f32 %v2330, %v2044
  %v2359 = vmul.f32 %v2345, %v2045
  %v2360 = vadd.f32 %v2356, %v2358
  %v2361 = vadd.f32 %v2357, %v2359
  %v2362 = vpack.c.bf16 %v2360, %v2360
  %v2363 = vpack.c.bf16 %v2361, %v2361
  %s2364 = scalar_lea.vmem %s10, 40
  %2365 = vst [vmem:[%s2364] sm:$0xf] %v2362
  %2366 = vst [vmem:[%s2364 + $0x4] sm:$0xf] %v2363
  %s2367 = scalar_lea.vmem [#allocation3], 288
  %v2368 = vld [vmem:[%s2367] sm:$0xff]
  %v2369 = vld [vmem:[%s2367 + $0x8] sm:$0xff]
  %v2370 = vld [vmem:[%s2367 + $0x10] sm:$0xff]
  %v2371 = vld [vmem:[%s2367 + $0x18] sm:$0xff]
  %v2372 = vld [vmem:[%s2367 + $0x20] sm:$0xff]
  %v2373 = vld [vmem:[%s2367 + $0x28] sm:$0xff]
  %v2374 = vld [vmem:[%s2] sm:$0xff]
  %v2375 = vld [vmem:[%s2 + $0x8] sm:$0xf]
  %v2376 = vld [vmem:[%s2 + $0xc] sm:$0xff]
  %v2377 = vld [vmem:[%s2 + $0x14] sm:$0xf]
  %v2378 = vld [vmem:[%s2 + $0x18] sm:$0xff]
  %v2379 = vld [vmem:[%s2 + $0x20] sm:$0xf]
  %v2380 = vld [vmem:[%s2 + $0x24] sm:$0xff]
  %v2381 = vld [vmem:[%s2 + $0x2c] sm:$0xf]
  %v2382 = vld [vmem:[%s2 + $0x30] sm:$0xff]
  %v2383 = vld [vmem:[%s2 + $0x38] sm:$0xf]
  %v2384 = vld [vmem:[%s2 + $0x3c] sm:$0xff]
  %v2385 = vld [vmem:[%s2 + $0x44] sm:$0xf]
  %v2386 = vld [vmem:[%s2 + $0x48] sm:$0xff]
  %v2387 = vld [vmem:[%s2 + $0x50] sm:$0xf]
  %v2388 = vld [vmem:[%s2 + $0x54] sm:$0xff]
  %v2389 = vld [vmem:[%s2 + $0x5c] sm:$0xf]
  %v2390 = vld [vmem:[%s2 + $0x60] sm:$0xff]
  %v2391 = vld [vmem:[%s2 + $0x68] sm:$0xf]
  %v2392 = vld [vmem:[%s2 + $0x6c] sm:$0xff]
  %v2393 = vld [vmem:[%s2 + $0x74] sm:$0xf]
  %v2394 = vld [vmem:[%s2 + $0x78] sm:$0xff]
  %v2395 = vld [vmem:[%s2 + $0x80] sm:$0xf]
  %v2396 = vld [vmem:[%s2 + $0x84] sm:$0xff]
  %v2397 = vld [vmem:[%s2 + $0x8c] sm:$0xf]
  %v2398 = vld [vmem:[%s2 + $0x90] sm:$0xff]
  %v2399 = vld [vmem:[%s2 + $0x98] sm:$0xf]
  %v2400 = vld [vmem:[%s2 + $0x9c] sm:$0xff]
  %v2401 = vld [vmem:[%s2 + $0xa4] sm:$0xf]
  %v2402 = vld [vmem:[%s2 + $0xa8] sm:$0xff]
  %v2403 = vld [vmem:[%s2 + $0xb0] sm:$0xf]
  %v2404 = vld [vmem:[%s2 + $0xb4] sm:$0xff]
  %v2405 = vld [vmem:[%s2 + $0xbc] sm:$0xf]
  %v2408 = vunpack.c.l.b16 %v2362
  %v2409 = vunpack.c.l.b16 %v2363
  %v2410 = vpack.c.b16 %v2409, %v2408
  %v2444 = vunpack.c.l.b16 %v2374
  %v2445 = vunpack.c.h.b16 %v2374
  %v2446 = vunpack.c.l.b16 %v2375
  %v2447 = vunpack.c.l.b16 %v2376
  %v2448 = vunpack.c.h.b16 %v2376
  %v2449 = vunpack.c.l.b16 %v2377
  %v2450 = vunpack.c.l.b16 %v2378
  %v2451 = vunpack.c.h.b16 %v2378
  %v2452 = vunpack.c.l.b16 %v2379
  %v2453 = vunpack.c.l.b16 %v2380
  %v2454 = vunpack.c.h.b16 %v2380
  %v2455 = vunpack.c.l.b16 %v2381
  %v2456 = vunpack.c.l.b16 %v2382
  %v2457 = vunpack.c.h.b16 %v2382
  %v2458 = vunpack.c.l.b16 %v2383
  %v2459 = vunpack.c.l.b16 %v2384
  %v2460 = vunpack.c.h.b16 %v2384
  %v2461 = vunpack.c.l.b16 %v2385
  %v2462 = vunpack.c.l.b16 %v2386
  %v2463 = vunpack.c.h.b16 %v2386
  %v2464 = vunpack.c.l.b16 %v2387
  %v2465 = vunpack.c.l.b16 %v2388
  %v2466 = vunpack.c.h.b16 %v2388
  %v2467 = vunpack.c.l.b16 %v2389
  %v2468 = vunpack.c.l.b16 %v2390
  %v2469 = vunpack.c.h.b16 %v2390
  %v2470 = vunpack.c.l.b16 %v2391
  %v2471 = vunpack.c.l.b16 %v2392
  %v2472 = vunpack.c.h.b16 %v2392
  %v2473 = vunpack.c.l.b16 %v2393
  %v2474 = vunpack.c.l.b16 %v2394
  %v2475 = vunpack.c.h.b16 %v2394
  %v2476 = vunpack.c.l.b16 %v2395
  %v2477 = vunpack.c.l.b16 %v2396
  %v2478 = vunpack.c.h.b16 %v2396
  %v2479 = vunpack.c.l.b16 %v2397
  %v2480 = vunpack.c.l.b16 %v2398
  %v2481 = vunpack.c.h.b16 %v2398
  %v2482 = vunpack.c.l.b16 %v2399
  %v2483 = vunpack.c.l.b16 %v2400
  %v2484 = vunpack.c.h.b16 %v2400
  %v2485 = vunpack.c.l.b16 %v2401
  %v2486 = vunpack.c.l.b16 %v2402
  %v2487 = vunpack.c.h.b16 %v2402
  %v2488 = vunpack.c.l.b16 %v2403
  %v2489 = vunpack.c.l.b16 %v2404
  %v2490 = vunpack.c.h.b16 %v2404
  %v2491 = vunpack.c.l.b16 %v2405
  %v2492 = vpack.c.b16 %v2447, %v2444
  %v2493 = vpack.c.b16 %v2448, %v2445
  %v2494 = vpack.c.b16 %v2449, %v2446
  %v2495 = vpack.c.b16 %v2453, %v2450
  %v2496 = vpack.c.b16 %v2454, %v2451
  %v2497 = vpack.c.b16 %v2455, %v2452
  %v2498 = vpack.c.b16 %v2459, %v2456
  %v2499 = vpack.c.b16 %v2460, %v2457
  %v2500 = vpack.c.b16 %v2461, %v2458
  %v2501 = vpack.c.b16 %v2465, %v2462
  %v2502 = vpack.c.b16 %v2466, %v2463
  %v2503 = vpack.c.b16 %v2467, %v2464
  %v2504 = vpack.c.b16 %v2471, %v2468
  %v2505 = vpack.c.b16 %v2472, %v2469
  %v2506 = vpack.c.b16 %v2473, %v2470
  %v2507 = vpack.c.b16 %v2477, %v2474
  %v2508 = vpack.c.b16 %v2478, %v2475
  %v2509 = vpack.c.b16 %v2479, %v2476
  %v2510 = vpack.c.b16 %v2483, %v2480
  %v2511 = vpack.c.b16 %v2484, %v2481
  %v2512 = vpack.c.b16 %v2485, %v2482
  %v2513 = vpack.c.b16 %v2489, %v2486
  %v2514 = vpack.c.b16 %v2490, %v2487
  %v2515 = vpack.c.b16 %v2491, %v2488
  %2540 = vmatpush.bf16.msra.mxu0 %v2513
  %2541 = vmatpush.bf16.msra.mxu0 %v2510
  %2542 = vmatpush.bf16.msra.mxu0 %v2507
  %2543 = vmatpush.bf16.msra.mxu0 %v2504
  %2544 = vmatpush.bf16.msra.mxu0 %v2501
  %2545 = vmatpush.bf16.msra.mxu0 %v2498
  %2546 = vmatpush.bf16.msra.mxu0 %v2495
  %2547 = vmatpush.bf16.msra.mxu0 %v2492
  %2548 = vmatmul.bf16.gmra.mxu0 %v2410
  %v2549 = vpop.f32.mrf.mxu0
  %v2550 = vadd.f32 0.0, %v2549
  %v2551 = vpop.f32.mrf.mxu0
  %v2552 = vadd.f32 0.0, %v2551
  %2553 = vdwg.mxu0
  %2554 = vmatpush.bf16.msra.mxu0 %v2514
  %2555 = vmatpush.bf16.msra.mxu0 %v2511
  %2556 = vmatpush.bf16.msra.mxu0 %v2508
  %2557 = vmatpush.bf16.msra.mxu0 %v2505
  %2558 = vmatpush.bf16.msra.mxu0 %v2502
  %2559 = vmatpush.bf16.msra.mxu0 %v2499
  %2560 = vmatpush.bf16.msra.mxu0 %v2496
  %2561 = vmatpush.bf16.msra.mxu0 %v2493
  %2562 = vmatmul.bf16.gmra.mxu0 %v2410
  %v2563 = vpop.f32.mrf.mxu0
  %v2564 = vadd.f32 0.0, %v2563
  %v2565 = vpop.f32.mrf.mxu0
  %v2566 = vadd.f32 0.0, %v2565
  %2567 = vdwg.mxu0
  %2568 = vmatpush.bf16.msra.mxu0 %v2515
  %2569 = vmatpush.bf16.msra.mxu0 %v2512
  %2570 = vmatpush.bf16.msra.mxu0 %v2509
  %2571 = vmatpush.bf16.msra.mxu0 %v2506
  %2572 = vmatpush.bf16.msra.mxu0 %v2503
  %2573 = vmatpush.bf16.msra.mxu0 %v2500
  %2574 = vmatpush.bf16.msra.mxu0 %v2497
  %2575 = vmatpush.bf16.msra.mxu0 %v2494
  %2576 = vmatmul.bf16.gmra.mxu0 %v2410
  %v2577 = vpop.f32.mrf.mxu0
  %v2578 = vadd.f32 0.0, %v2577
  %v2579 = vpop.f32.mrf.mxu0
  %v2580 = vadd.f32 0.0, %v2579
  %2581 = vdwg.mxu0
  %v2582 = vadd.f32 %v2368, %v2550
  %v2583 = vadd.f32 %v2371, %v2552
  %v2584 = vxor.u32 %v2582, 2147483648
  %v2585 = vxor.u32 %v2583, 2147483648
  %v2586 = vmul.f32 %v2584, 1.442695
  %v2587 = vpow.pop %v2586
  %v2588 = vmul.f32 %v2585, 1.442695
  %v2589 = vpow.pop %v2588
  %v2590 = vadd.f32 %v2587, 1.0
  %v2591 = vadd.f32 %v2589, 1.0
  %v2592 = vrcp.pop %v2590
  %v2593 = vmul.f32 %v2590, %v2592
  %v2594 = vsub.f32 1.0, %v2593
  %v2595 = vmul.f32 %v2592, %v2594
  %v2596 = vadd.f32 %v2592, %v2595
  %vm2597 = vweird.f32 %v2590
  %vm2598 = vweird.f32 %v2592
  %vm2599 = vmor %vm2597, %vm2598
  %v2600 = vsel %vm2599, %v2592, %v2596
  %v2601 = vand.u32 2147483647, %v2590
  %vm2602 = vcmp.eq.f32.partialorder %v2601, 8.507059e+37
  %v2603 = vand.u32 %v2590, 2147483648
  %v2604 = vor.u32 1.1754944e-38, %v2603
  %v2605 = vsel %vm2602, %v2604, %v2600
  %v2606 = vmul.f32 1.0, %v2605
  %v2607 = vrcp.pop %v2591
  %v2608 = vmul.f32 %v2591, %v2607
  %v2609 = vsub.f32 1.0, %v2608
  %v2610 = vmul.f32 %v2607, %v2609
  %v2611 = vadd.f32 %v2607, %v2610
  %vm2612 = vweird.f32 %v2591
  %vm2613 = vweird.f32 %v2607
  %vm2614 = vmor %vm2612, %vm2613
  %v2615 = vsel %vm2614, %v2607, %v2611
  %v2616 = vand.u32 2147483647, %v2591
  %vm2617 = vcmp.eq.f32.partialorder %v2616, 8.507059e+37
  %v2618 = vand.u32 %v2591, 2147483648
  %v2619 = vor.u32 1.1754944e-38, %v2618
  %v2620 = vsel %vm2617, %v2619, %v2615
  %v2621 = vmul.f32 1.0, %v2620
  %v2622 = vadd.f32 %v2369, %v2564
  %v2623 = vadd.f32 %v2372, %v2566
  %v2624 = vxor.u32 %v2622, 2147483648
  %v2625 = vxor.u32 %v2623, 2147483648
  %v2626 = vmul.f32 %v2624, 1.442695
  %v2627 = vpow.pop %v2626
  %v2628 = vmul.f32 %v2625, 1.442695
  %v2629 = vpow.pop %v2628
  %v2630 = vadd.f32 %v2627, 1.0
  %v2631 = vadd.f32 %v2629, 1.0
  %v2632 = vrcp.pop %v2630
  %v2633 = vmul.f32 %v2630, %v2632
  %v2634 = vsub.f32 1.0, %v2633
  %v2635 = vmul.f32 %v2632, %v2634
  %v2636 = vadd.f32 %v2632, %v2635
  %vm2637 = vweird.f32 %v2630
  %vm2638 = vweird.f32 %v2632
  %vm2639 = vmor %vm2637, %vm2638
  %v2640 = vsel %vm2639, %v2632, %v2636
  %v2641 = vand.u32 2147483647, %v2630
  %vm2642 = vcmp.eq.f32.partialorder %v2641, 8.507059e+37
  %v2643 = vand.u32 %v2630, 2147483648
  %v2644 = vor.u32 1.1754944e-38, %v2643
  %v2645 = vsel %vm2642, %v2644, %v2640
  %v2646 = vmul.f32 1.0, %v2645
  %v2647 = vrcp.pop %v2631
  %v2648 = vmul.f32 %v2631, %v2647
  %v2649 = vsub.f32 1.0, %v2648
  %v2650 = vmul.f32 %v2647, %v2649
  %v2651 = vadd.f32 %v2647, %v2650
  %vm2652 = vweird.f32 %v2631
  %vm2653 = vweird.f32 %v2647
  %vm2654 = vmor %vm2652, %vm2653
  %v2655 = vsel %vm2654, %v2647, %v2651
  %v2656 = vand.u32 2147483647, %v2631
  %vm2657 = vcmp.eq.f32.partialorder %v2656, 8.507059e+37
  %v2658 = vand.u32 %v2631, 2147483648
  %v2659 = vor.u32 1.1754944e-38, %v2658
  %v2660 = vsel %vm2657, %v2659, %v2655
  %v2661 = vmul.f32 1.0, %v2660
  %v2662 = vadd.f32 %v2578, %v474
  %v2663 = vadd.f32 %v2580, %v474
  %v2664 = vmul.f32 %v2606, %v2662
  %v2665 = vmul.f32 %v2621, %v2663
  %v2666 = vadd.f32 %v2370, %v2664
  %v2667 = vadd.f32 %v2373, %v2665
  %v2668 = vtanh.pop %v2666
  %v2669 = vtanh.pop %v2667
  %v2670 = vsub.f32 1.0, %v2646
  %v2671 = vsub.f32 1.0, %v2661
  %v2672 = vmul.f32 %v2670, %v2668
  %v2673 = vmul.f32 %v2671, %v2669
  %v2674 = vmul.f32 %v2646, %v2360
  %v2675 = vmul.f32 %v2661, %v2361
  %v2676 = vadd.f32 %v2672, %v2674
  %v2677 = vadd.f32 %v2673, %v2675
  %v2678 = vpack.c.bf16 %v2676, %v2676
  %v2679 = vpack.c.bf16 %v2677, %v2677
  %s2680 = scalar_lea.vmem %s10, 48
  %2681 = vst [vmem:[%s2680] sm:$0xf] %v2678
  %2682 = vst [vmem:[%s2680 + $0x4] sm:$0xf] %v2679
  %s2683 = scalar_lea.vmem [#allocation3], 336
  %v2684 = vld [vmem:[%s2683] sm:$0xff]
  %v2685 = vld [vmem:[%s2683 + $0x8] sm:$0xff]
  %v2686 = vld [vmem:[%s2683 + $0x10] sm:$0xff]
  %v2687 = vld [vmem:[%s2683 + $0x18] sm:$0xff]
  %v2688 = vld [vmem:[%s2683 + $0x20] sm:$0xff]
  %v2689 = vld [vmem:[%s2683 + $0x28] sm:$0xff]
  %v2690 = vld [vmem:[%s2] sm:$0xff]
  %v2691 = vld [vmem:[%s2 + $0x8] sm:$0xf]
  %v2692 = vld [vmem:[%s2 + $0xc] sm:$0xff]
  %v2693 = vld [vmem:[%s2 + $0x14] sm:$0xf]
  %v2694 = vld [vmem:[%s2 + $0x18] sm:$0xff]
  %v2695 = vld [vmem:[%s2 + $0x20] sm:$0xf]
  %v2696 = vld [vmem:[%s2 + $0x24] sm:$0xff]
  %v2697 = vld [vmem:[%s2 + $0x2c] sm:$0xf]
  %v2698 = vld [vmem:[%s2 + $0x30] sm:$0xff]
  %v2699 = vld [vmem:[%s2 + $0x38] sm:$0xf]
  %v2700 = vld [vmem:[%s2 + $0x3c] sm:$0xff]
  %v2701 = vld [vmem:[%s2 + $0x44] sm:$0xf]
  %v2702 = vld [vmem:[%s2 + $0x48] sm:$0xff]
  %v2703 = vld [vmem:[%s2 + $0x50] sm:$0xf]
  %v2704 = vld [vmem:[%s2 + $0x54] sm:$0xff]
  %v2705 = vld [vmem:[%s2 + $0x5c] sm:$0xf]
  %v2706 = vld [vmem:[%s2 + $0x60] sm:$0xff]
  %v2707 = vld [vmem:[%s2 + $0x68] sm:$0xf]
  %v2708 = vld [vmem:[%s2 + $0x6c] sm:$0xff]
  %v2709 = vld [vmem:[%s2 + $0x74] sm:$0xf]
  %v2710 = vld [vmem:[%s2 + $0x78] sm:$0xff]
  %v2711 = vld [vmem:[%s2 + $0x80] sm:$0xf]
  %v2712 = vld [vmem:[%s2 + $0x84] sm:$0xff]
  %v2713 = vld [vmem:[%s2 + $0x8c] sm:$0xf]
  %v2714 = vld [vmem:[%s2 + $0x90] sm:$0xff]
  %v2715 = vld [vmem:[%s2 + $0x98] sm:$0xf]
  %v2716 = vld [vmem:[%s2 + $0x9c] sm:$0xff]
  %v2717 = vld [vmem:[%s2 + $0xa4] sm:$0xf]
  %v2718 = vld [vmem:[%s2 + $0xa8] sm:$0xff]
  %v2719 = vld [vmem:[%s2 + $0xb0] sm:$0xf]
  %v2720 = vld [vmem:[%s2 + $0xb4] sm:$0xff]
  %v2721 = vld [vmem:[%s2 + $0xbc] sm:$0xf]
  %v2724 = vunpack.c.l.b16 %v2678
  %v2725 = vunpack.c.l.b16 %v2679
  %v2726 = vpack.c.b16 %v2725, %v2724
  %v2760 = vunpack.c.l.b16 %v2690
  %v2761 = vunpack.c.h.b16 %v2690
  %v2762 = vunpack.c.l.b16 %v2691
  %v2763 = vunpack.c.l.b16 %v2692
  %v2764 = vunpack.c.h.b16 %v2692
  %v2765 = vunpack.c.l.b16 %v2693
  %v2766 = vunpack.c.l.b16 %v2694
  %v2767 = vunpack.c.h.b16 %v2694
  %v2768 = vunpack.c.l.b16 %v2695
  %v2769 = vunpack.c.l.b16 %v2696
  %v2770 = vunpack.c.h.b16 %v2696
  %v2771 = vunpack.c.l.b16 %v2697
  %v2772 = vunpack.c.l.b16 %v2698
  %v2773 = vunpack.c.h.b16 %v2698
  %v2774 = vunpack.c.l.b16 %v2699
  %v2775 = vunpack.c.l.b16 %v2700
  %v2776 = vunpack.c.h.b16 %v2700
  %v2777 = vunpack.c.l.b16 %v2701
  %v2778 = vunpack.c.l.b16 %v2702
  %v2779 = vunpack.c.h.b16 %v2702
  %v2780 = vunpack.c.l.b16 %v2703
  %v2781 = vunpack.c.l.b16 %v2704
  %v2782 = vunpack.c.h.b16 %v2704
  %v2783 = vunpack.c.l.b16 %v2705
  %v2784 = vunpack.c.l.b16 %v2706
  %v2785 = vunpack.c.h.b16 %v2706
  %v2786 = vunpack.c.l.b16 %v2707
  %v2787 = vunpack.c.l.b16 %v2708
  %v2788 = vunpack.c.h.b16 %v2708
  %v2789 = vunpack.c.l.b16 %v2709
  %v2790 = vunpack.c.l.b16 %v2710
  %v2791 = vunpack.c.h.b16 %v2710
  %v2792 = vunpack.c.l.b16 %v2711
  %v2793 = vunpack.c.l.b16 %v2712
  %v2794 = vunpack.c.h.b16 %v2712
  %v2795 = vunpack.c.l.b16 %v2713
  %v2796 = vunpack.c.l.b16 %v2714
  %v2797 = vunpack.c.h.b16 %v2714
  %v2798 = vunpack.c.l.b16 %v2715
  %v2799 = vunpack.c.l.b16 %v2716
  %v2800 = vunpack.c.h.b16 %v2716
  %v2801 = vunpack.c.l.b16 %v2717
  %v2802 = vunpack.c.l.b16 %v2718
  %v2803 = vunpack.c.h.b16 %v2718
  %v2804 = vunpack.c.l.b16 %v2719
  %v2805 = vunpack.c.l.b16 %v2720
  %v2806 = vunpack.c.h.b16 %v2720
  %v2807 = vunpack.c.l.b16 %v2721
  %v2808 = vpack.c.b16 %v2763, %v2760
  %v2809 = vpack.c.b16 %v2764, %v2761
  %v2810 = vpack.c.b16 %v2765, %v2762
  %v2811 = vpack.c.b16 %v2769, %v2766
  %v2812 = vpack.c.b16 %v2770, %v2767
  %v2813 = vpack.c.b16 %v2771, %v2768
  %v2814 = vpack.c.b16 %v2775, %v2772
  %v2815 = vpack.c.b16 %v2776, %v2773
  %v2816 = vpack.c.b16 %v2777, %v2774
  %v2817 = vpack.c.b16 %v2781, %v2778
  %v2818 = vpack.c.b16 %v2782, %v2779
  %v2819 = vpack.c.b16 %v2783, %v2780
  %v2820 = vpack.c.b16 %v2787, %v2784
  %v2821 = vpack.c.b16 %v2788, %v2785
  %v2822 = vpack.c.b16 %v2789, %v2786
  %v2823 = vpack.c.b16 %v2793, %v2790
  %v2824 = vpack.c.b16 %v2794, %v2791
  %v2825 = vpack.c.b16 %v2795, %v2792
  %v2826 = vpack.c.b16 %v2799, %v2796
  %v2827 = vpack.c.b16 %v2800, %v2797
  %v2828 = vpack.c.b16 %v2801, %v2798
  %v2829 = vpack.c.b16 %v2805, %v2802
  %v2830 = vpack.c.b16 %v2806, %v2803
  %v2831 = vpack.c.b16 %v2807, %v2804
  %2856 = vmatpush.bf16.msra.mxu0 %v2829
  %2857 = vmatpush.bf16.msra.mxu0 %v2826
  %2858 = vmatpush.bf16.msra.mxu0 %v2823
  %2859 = vmatpush.bf16.msra.mxu0 %v2820
  %2860 = vmatpush.bf16.msra.mxu0 %v2817
  %2861 = vmatpush.bf16.msra.mxu0 %v2814
  %2862 = vmatpush.bf16.msra.mxu0 %v2811
  %2863 = vmatpush.bf16.msra.mxu0 %v2808
  %2864 = vmatmul.bf16.gmra.mxu0 %v2726
  %v2865 = vpop.f32.mrf.mxu0
  %v2866 = vadd.f32 0.0, %v2865
  %v2867 = vpop.f32.mrf.mxu0
  %v2868 = vadd.f32 0.0, %v2867
  %2869 = vdwg.mxu0
  %2870 = vmatpush.bf16.msra.mxu0 %v2830
  %2871 = vmatpush.bf16.msra.mxu0 %v2827
  %2872 = vmatpush.bf16.msra.mxu0 %v2824
  %2873 = vmatpush.bf16.msra.mxu0 %v2821
  %2874 = vmatpush.bf16.msra.mxu0 %v2818
  %2875 = vmatpush.bf16.msra.mxu0 %v2815
  %2876 = vmatpush.bf16.msra.mxu0 %v2812
  %2877 = vmatpush.bf16.msra.mxu0 %v2809
  %2878 = vmatmul.bf16.gmra.mxu0 %v2726
  %v2879 = vpop.f32.mrf.mxu0
  %v2880 = vadd.f32 0.0, %v2879
  %v2881 = vpop.f32.mrf.mxu0
  %v2882 = vadd.f32 0.0, %v2881
  %2883 = vdwg.mxu0
  %2884 = vmatpush.bf16.msra.mxu0 %v2831
  %2885 = vmatpush.bf16.msra.mxu0 %v2828
  %2886 = vmatpush.bf16.msra.mxu0 %v2825
  %2887 = vmatpush.bf16.msra.mxu0 %v2822
  %2888 = vmatpush.bf16.msra.mxu0 %v2819
  %2889 = vmatpush.bf16.msra.mxu0 %v2816
  %2890 = vmatpush.bf16.msra.mxu0 %v2813
  %2891 = vmatpush.bf16.msra.mxu0 %v2810
  %2892 = vmatmul.bf16.gmra.mxu0 %v2726
  %v2893 = vpop.f32.mrf.mxu0
  %v2894 = vadd.f32 0.0, %v2893
  %v2895 = vpop.f32.mrf.mxu0
  %v2896 = vadd.f32 0.0, %v2895
  %2897 = vdwg.mxu0
  %v2898 = vadd.f32 %v2684, %v2866
  %v2899 = vadd.f32 %v2687, %v2868
  %v2900 = vxor.u32 %v2898, 2147483648
  %v2901 = vxor.u32 %v2899, 2147483648
  %v2902 = vmul.f32 %v2900, 1.442695
  %v2903 = vpow.pop %v2902
  %v2904 = vmul.f32 %v2901, 1.442695
  %v2905 = vpow.pop %v2904
  %v2906 = vadd.f32 %v2903, 1.0
  %v2907 = vadd.f32 %v2905, 1.0
  %v2908 = vrcp.pop %v2906
  %v2909 = vmul.f32 %v2906, %v2908
  %v2910 = vsub.f32 1.0, %v2909
  %v2911 = vmul.f32 %v2908, %v2910
  %v2912 = vadd.f32 %v2908, %v2911
  %vm2913 = vweird.f32 %v2906
  %vm2914 = vweird.f32 %v2908
  %vm2915 = vmor %vm2913, %vm2914
  %v2916 = vsel %vm2915, %v2908, %v2912
  %v2917 = vand.u32 2147483647, %v2906
  %vm2918 = vcmp.eq.f32.partialorder %v2917, 8.507059e+37
  %v2919 = vand.u32 %v2906, 2147483648
  %v2920 = vor.u32 1.1754944e-38, %v2919
  %v2921 = vsel %vm2918, %v2920, %v2916
  %v2922 = vmul.f32 1.0, %v2921
  %v2923 = vrcp.pop %v2907
  %v2924 = vmul.f32 %v2907, %v2923
  %v2925 = vsub.f32 1.0, %v2924
  %v2926 = vmul.f32 %v2923, %v2925
  %v2927 = vadd.f32 %v2923, %v2926
  %vm2928 = vweird.f32 %v2907
  %vm2929 = vweird.f32 %v2923
  %vm2930 = vmor %vm2928, %vm2929
  %v2931 = vsel %vm2930, %v2923, %v2927
  %v2932 = vand.u32 2147483647, %v2907
  %vm2933 = vcmp.eq.f32.partialorder %v2932, 8.507059e+37
  %v2934 = vand.u32 %v2907, 2147483648
  %v2935 = vor.u32 1.1754944e-38, %v2934
  %v2936 = vsel %vm2933, %v2935, %v2931
  %v2937 = vmul.f32 1.0, %v2936
  %v2938 = vadd.f32 %v2685, %v2880
  %v2939 = vadd.f32 %v2688, %v2882
  %v2940 = vxor.u32 %v2938, 2147483648
  %v2941 = vxor.u32 %v2939, 2147483648
  %v2942 = vmul.f32 %v2940, 1.442695
  %v2943 = vpow.pop %v2942
  %v2944 = vmul.f32 %v2941, 1.442695
  %v2945 = vpow.pop %v2944
  %v2946 = vadd.f32 %v2943, 1.0
  %v2947 = vadd.f32 %v2945, 1.0
  %v2948 = vrcp.pop %v2946
  %v2949 = vmul.f32 %v2946, %v2948
  %v2950 = vsub.f32 1.0, %v2949
  %v2951 = vmul.f32 %v2948, %v2950
  %v2952 = vadd.f32 %v2948, %v2951
  %vm2953 = vweird.f32 %v2946
  %vm2954 = vweird.f32 %v2948
  %vm2955 = vmor %vm2953, %vm2954
  %v2956 = vsel %vm2955, %v2948, %v2952
  %v2957 = vand.u32 2147483647, %v2946
  %vm2958 = vcmp.eq.f32.partialorder %v2957, 8.507059e+37
  %v2959 = vand.u32 %v2946, 2147483648
  %v2960 = vor.u32 1.1754944e-38, %v2959
  %v2961 = vsel %vm2958, %v2960, %v2956
  %v2962 = vmul.f32 1.0, %v2961
  %v2963 = vrcp.pop %v2947
  %v2964 = vmul.f32 %v2947, %v2963
  %v2965 = vsub.f32 1.0, %v2964
  %v2966 = vmul.f32 %v2963, %v2965
  %v2967 = vadd.f32 %v2963, %v2966
  %vm2968 = vweird.f32 %v2947
  %vm2969 = vweird.f32 %v2963
  %vm2970 = vmor %vm2968, %vm2969
  %v2971 = vsel %vm2970, %v2963, %v2967
  %v2972 = vand.u32 2147483647, %v2947
  %vm2973 = vcmp.eq.f32.partialorder %v2972, 8.507059e+37
  %v2974 = vand.u32 %v2947, 2147483648
  %v2975 = vor.u32 1.1754944e-38, %v2974
  %v2976 = vsel %vm2973, %v2975, %v2971
  %v2977 = vmul.f32 1.0, %v2976
  %v2978 = vadd.f32 %v2894, %v474
  %v2979 = vadd.f32 %v2896, %v474
  %v2980 = vmul.f32 %v2922, %v2978
  %v2981 = vmul.f32 %v2937, %v2979
  %v2982 = vadd.f32 %v2686, %v2980
  %v2983 = vadd.f32 %v2689, %v2981
  %v2984 = vtanh.pop %v2982
  %v2985 = vtanh.pop %v2983
  %v2986 = vsub.f32 1.0, %v2962
  %v2987 = vsub.f32 1.0, %v2977
  %v2988 = vmul.f32 %v2986, %v2984
  %v2989 = vmul.f32 %v2987, %v2985
  %v2990 = vmul.f32 %v2962, %v2676
  %v2991 = vmul.f32 %v2977, %v2677
  %v2992 = vadd.f32 %v2988, %v2990
  %v2993 = vadd.f32 %v2989, %v2991
  %v2994 = vpack.c.bf16 %v2992, %v2992
  %v2995 = vpack.c.bf16 %v2993, %v2993
  %s2996 = scalar_lea.vmem %s10, 56
  %2997 = vst [vmem:[%s2996] sm:$0xf] %v2994
  %2998 = vst [vmem:[%s2996 + $0x4] sm:$0xf] %v2995
  %2999 = vst [vmem:[#allocation2] sm:$0xff] %v2992
  %3000 = vst [vmem:[#allocation2 + $0x8] sm:$0xff] %v2993
  // Predicated region
  $region46: #{variational_encoder_forward.1} parent=0 // pred_check
    %p3001 = pneg %p39
  $region47: #{variational_encoder_forward.1} parent=0 // pred_check_branch
    %3003 = sbr.rel (%p3001) target = $region49
  $region48: #{variational_encoder_forward.1} parent=0 // pred_region
    %v3004 = vld [vmem:[%s5] sm:$0xf]
    %v3005 = vld [vmem:[%s5 + $0x4] sm:$0xf]
    %v3006 = vld [vmem:[%s5 + $0x8] sm:$0xf]
    %v3007 = vld [vmem:[%s5 + $0xc] sm:$0xf]
    %v3008 = vld [vmem:[%s5 + $0x10] sm:$0xf]
    %v3009 = vld [vmem:[%s5 + $0x14] sm:$0xf]
    %v3010 = vld [vmem:[%s5 + $0x18] sm:$0xf]
    %v3011 = vld [vmem:[%s5 + $0x1c] sm:$0xf]
    %v3012 = vld [vmem:[%s5 + $0x20] sm:$0xf]
    %v3013 = vld [vmem:[%s5 + $0x24] sm:$0xf]
    %v3014 = vld [vmem:[%s5 + $0x28] sm:$0xf]
    %v3015 = vld [vmem:[%s5 + $0x2c] sm:$0xf]
    %v3016 = vld [vmem:[%s5 + $0x30] sm:$0xf]
    %v3017 = vld [vmem:[%s5 + $0x34] sm:$0xf]
    %v3018 = vld [vmem:[%s5 + $0x38] sm:$0xf]
    %v3019 = vld [vmem:[%s5 + $0x3c] sm:$0xf]
    %v3020 = vld [vmem:[%s6] sm:$0x1]
    %v3022 = vperm.slane %v3020, 0
    %v3026 = vunpack.c.l.b16 %v2994
    %v3027 = vunpack.c.l.b16 %v2995
    %v3028 = vpack.c.b16 %v3027, %v3026
    %v3046 = vunpack.c.l.b16 %v3004
    %v3047 = vunpack.c.l.b16 %v3005
    %v3048 = vunpack.c.l.b16 %v3006
    %v3049 = vunpack.c.l.b16 %v3007
    %v3050 = vunpack.c.l.b16 %v3008
    %v3051 = vunpack.c.l.b16 %v3009
    %v3052 = vunpack.c.l.b16 %v3010
    %v3053 = vunpack.c.l.b16 %v3011
    %v3054 = vunpack.c.l.b16 %v3012
    %v3055 = vunpack.c.l.b16 %v3013
    %v3056 = vunpack.c.l.b16 %v3014
    %v3057 = vunpack.c.l.b16 %v3015
    %v3058 = vunpack.c.l.b16 %v3016
    %v3059 = vunpack.c.l.b16 %v3017
    %v3060 = vunpack.c.l.b16 %v3018
    %v3061 = vunpack.c.l.b16 %v3019
    %v3062 = vpack.c.b16 %v3047, %v3046
    %v3063 = vpack.c.b16 %v3049, %v3048
    %v3064 = vpack.c.b16 %v3051, %v3050
    %v3065 = vpack.c.b16 %v3053, %v3052
    %v3066 = vpack.c.b16 %v3055, %v3054
    %v3067 = vpack.c.b16 %v3057, %v3056
    %v3068 = vpack.c.b16 %v3059, %v3058
    %v3069 = vpack.c.b16 %v3061, %v3060
    %3078 = vmatpush.bf16.msra.mxu0 %v3069
    %3079 = vmatpush.bf16.msra.mxu0 %v3068
    %3080 = vmatpush.bf16.msra.mxu0 %v3067
    %3081 = vmatpush.bf16.msra.mxu0 %v3066
    %3082 = vmatpush.bf16.msra.mxu0 %v3065
    %3083 = vmatpush.bf16.msra.mxu0 %v3064
    %3084 = vmatpush.bf16.msra.mxu0 %v3063
    %3085 = vmatpush.bf16.msra.mxu0 %v3062
    %3086 = vmatmul.bf16.gmra.mxu0 %v3028
    %v3087 = vpop.f32.mrf.mxu0
    %v3088 = vadd.f32 %v3022, %v3087
    %v3089 = vpop.f32.mrf.mxu0
    %v3090 = vadd.f32 %v3022, %v3089
    %3091 = vdwg.mxu0
    %v3092 = vld [vmem:[%s7] sm:$0xf]
    %v3093 = vld [vmem:[%s7 + $0x4] sm:$0xf]
    %v3094 = vld [vmem:[%s7 + $0x8] sm:$0xf]
    %v3095 = vld [vmem:[%s7 + $0xc] sm:$0xf]
    %v3096 = vld [vmem:[%s7 + $0x10] sm:$0xf]
    %v3097 = vld [vmem:[%s7 + $0x14] sm:$0xf]
    %v3098 = vld [vmem:[%s7 + $0x18] sm:$0xf]
    %v3099 = vld [vmem:[%s7 + $0x1c] sm:$0xf]
    %v3100 = vld [vmem:[%s7 + $0x20] sm:$0xf]
    %v3101 = vld [vmem:[%s7 + $0x24] sm:$0xf]
    %v3102 = vld [vmem:[%s7 + $0x28] sm:$0xf]
    %v3103 = vld [vmem:[%s7 + $0x2c] sm:$0xf]
    %v3104 = vld [vmem:[%s7 + $0x30] sm:$0xf]
    %v3105 = vld [vmem:[%s7 + $0x34] sm:$0xf]
    %v3106 = vld [vmem:[%s7 + $0x38] sm:$0xf]
    %v3107 = vld [vmem:[%s7 + $0x3c] sm:$0xf]
    %v3108 = vld [vmem:[%s8] sm:$0x1]
    %v3110 = vperm.slane %v3108, 0
    %v3128 = vunpack.c.l.b16 %v3092
    %v3129 = vunpack.c.l.b16 %v3093
    %v3130 = vunpack.c.l.b16 %v3094
    %v3131 = vunpack.c.l.b16 %v3095
    %v3132 = vunpack.c.l.b16 %v3096
    %v3133 = vunpack.c.l.b16 %v3097
    %v3134 = vunpack.c.l.b16 %v3098
    %v3135 = vunpack.c.l.b16 %v3099
    %v3136 = vunpack.c.l.b16 %v3100
    %v3137 = vunpack.c.l.b16 %v3101
    %v3138 = vunpack.c.l.b16 %v3102
    %v3139 = vunpack.c.l.b16 %v3103
    %v3140 = vunpack.c.l.b16 %v3104
    %v3141 = vunpack.c.l.b16 %v3105
    %v3142 = vunpack.c.l.b16 %v3106
    %v3143 = vunpack.c.l.b16 %v3107
    %v3144 = vpack.c.b16 %v3129, %v3128
    %v3145 = vpack.c.b16 %v3131, %v3130
    %v3146 = vpack.c.b16 %v3133, %v3132
    %v3147 = vpack.c.b16 %v3135, %v3134
    %v3148 = vpack.c.b16 %v3137, %v3136
    %v3149 = vpack.c.b16 %v3139, %v3138
    %v3150 = vpack.c.b16 %v3141, %v3140
    %v3151 = vpack.c.b16 %v3143, %v3142
    %3160 = vmatpush.bf16.msra.mxu0 %v3151
    %3161 = vmatpush.bf16.msra.mxu0 %v3150
    %3162 = vmatpush.bf16.msra.mxu0 %v3149
    %3163 = vmatpush.bf16.msra.mxu0 %v3148
    %3164 = vmatpush.bf16.msra.mxu0 %v3147
    %3165 = vmatpush.bf16.msra.mxu0 %v3146
    %3166 = vmatpush.bf16.msra.mxu0 %v3145
    %3167 = vmatpush.bf16.msra.mxu0 %v3144
    %3168 = vmatmul.bf16.gmra.mxu0 %v3028
    %v3169 = vpop.f32.mrf.mxu0
    %v3170 = vadd.f32 %v3110, %v3169
    %v3171 = vpop.f32.mrf.mxu0
    %v3172 = vadd.f32 %v3110, %v3171
    %3173 = vdwg.mxu0
    %3174 = vst [vmem:[%s12] sm:$0xff] %v3088
    %3175 = vst [vmem:[%s12 + $0x8] sm:$0xff] %v3090
    %3176 = vst [vmem:[%s13] sm:$0xff] %v3170
    %3177 = vst [vmem:[%s13 + $0x8] sm:$0xff] %v3172
    %v3178 = vld [vmem:[%s9] sm:$0xff]
    %v3179 = vld [vmem:[%s9 + $0x8] sm:$0xff]
    %v3180 = vmul.f32 %v3178, %v3170
    %v3181 = vmul.f32 %v3179, %v3172
    %v3182 = vadd.f32 %v3180, %v3088
    %v3183 = vadd.f32 %v3181, %v3090
    %3184 = vst [vmem:[%s11] sm:$0xff] %v3182
    %3185 = vst [vmem:[%s11 + $0x8] sm:$0xff] %v3183
  $region49: #{variational_encoder_forward.1} parent=0 // pred_fallthru
    _
  // Predicated region
  $region50: #{variational_encoder_forward.1} parent=0 // pred_check
    _
  $region51: #{variational_encoder_forward.1} parent=0 // pred_check_branch
    %3187 = sbr.rel (0) target = $region53
  $region52: #{variational_encoder_forward.1} parent=0 // pred_region
    _
  $region53: #{variational_encoder_forward.1} parent=0 // pred_fallthru
    _
  // Predicated region
  $region54: #{variational_encoder_forward.1} parent=0 // pred_check
    _
  $region55: #{variational_encoder_forward.1} parent=0 // pred_check_branch
    %3189 = sbr.rel (0) target = $region57
  $region56: #{variational_encoder_forward.1} parent=0 // pred_region
    _
  $region57: #{variational_encoder_forward.1} parent=0 // pred_fallthru
    _
  // Predicated region
  $region58: #{variational_encoder_forward.1} parent=0 // pred_check
    _
  $region59: #{variational_encoder_forward.1} parent=0 // pred_check_branch
    %3191 = sbr.rel (0) target = $region61
  $region60: #{variational_encoder_forward.1} parent=0 // pred_region
    _
  $region61: #{variational_encoder_forward.1} parent=0 // pred_fallthru
    _
  // Predicated region
  $region62: #{variational_encoder_forward.1} parent=0 // pred_check
    _
  $region63: #{variational_encoder_forward.1} parent=0 // pred_check_branch
    %3193 = sbr.rel (0) target = $region65
  $region64: #{variational_encoder_forward.1} parent=0 // pred_region
    _
  $region65: #{variational_encoder_forward.1} parent=0 // pred_fallthru
    _
  // Predicated region
  $region66: #{variational_encoder_forward.1} parent=0 // pred_check
    _
  $region67: #{variational_encoder_forward.1} parent=0 // pred_check_branch
    %3195 = sbr.rel (0) target = $region69
  $region68: #{variational_encoder_forward.1} parent=0 // pred_region
    _
  $region69: #{variational_encoder_forward.1} parent=0 // pred_fallthru
    _
  // Predicated region
  $region70: #{variational_encoder_forward.1} parent=0 // pred_check
    _
  $region71: #{variational_encoder_forward.1} parent=0 // pred_check_branch
    %3197 = sbr.rel (0) target = $region73
  $region72: #{variational_encoder_forward.1} parent=0 // pred_region
    _
  $region73: #{variational_encoder_forward.1} parent=0 // pred_fallthru
    _
  // Predicated region
  $region74: #{variational_encoder_forward.1} parent=0 // pred_check
    _
  $region75: #{variational_encoder_forward.1} parent=0 // pred_check_branch
    %3199 = sbr.rel (0) target = $region77
  $region76: #{variational_encoder_forward.1} parent=0 // pred_region
    _
  $region77: #{variational_encoder_forward.1} parent=0 // pred_fallthru
    _
  // Predicated region
  $region78: #{variational_encoder_forward.1} parent=0 // pred_check
    _
  $region79: #{variational_encoder_forward.1} parent=0 // pred_check_branch
    %3201 = sbr.rel (0) target = $region81
  $region80: #{variational_encoder_forward.1} parent=0 // pred_region
    _
  $region81: #{variational_encoder_forward.1} parent=0 // pred_fallthru
    _

</llo_original>
